<compile_context>
chip_gen: v7x
topology: tpu7x:2x2x1
jax: 0.10.0
libtpu: 0.0.40
codegen_flags: <defaults>
</compile_context>

<pallas_src>
import functools

import numpy as np
import jax
import jax.numpy as jnp
from jax.experimental import pallas as pl
from jax.experimental.pallas import tpu as pltpu


def _round_up(x, m):
    return (x + m - 1) // m * m


# --------------------------------------------------------------------------- Pallas kernels
def _apply_act(y, act):
    if act == "relu":
        return jnp.maximum(y, 0.0)
    if act == "sigmoid2":
        # 2 * sigmoid(y), numerically stable (never exponentiates a positive number).
        z = jnp.exp(-jnp.abs(y))
        num = jnp.where(y >= 0, jnp.ones_like(z), z)
        return 2.0 * num / (1.0 + z)
    return y


def _mm_bias_act_kernel(x_ref, w_ref, b_ref, o_ref, *, act):
    """One fused layer: o = act(x @ w + b); weights/bias VMEM-resident across the grid."""
    y = jnp.dot(x_ref[...], w_ref[...], preferred_element_type=jnp.float32)
    y = y + b_ref[...]
    o_ref[...] = _apply_act(y, act).astype(o_ref.dtype)


def _middle_kernel(x_ref, w3_ref, b3_ref, wm_ref, bm_ref, wt2_ref, bt2_ref, o_ref):
    """Fused bottleneck: conv3(+ReLU) -> [conv4 -> Linear -> Linear -> convt1] (pre-composed
    affine) -> ReLU -> convt2 -> ReLU, as dense matmuls on flat (h,w,c) vectors."""
    h = jnp.dot(x_ref[...], w3_ref[...], preferred_element_type=jnp.float32) + b3_ref[...]
    h = jnp.maximum(h, 0.0)                                     # ReLU after conv3
    h = jnp.dot(h, wm_ref[...], preferred_element_type=jnp.float32) + bm_ref[...]
    h = jnp.maximum(h, 0.0)                                     # ReLU after convt1
    y = jnp.dot(h, wt2_ref[...], preferred_element_type=jnp.float32) + bt2_ref[...]
    y = jnp.maximum(y, 0.0)                                     # ReLU after convt2
    o_ref[...] = y.astype(o_ref.dtype)


# --------------------------------------------------------------------------- kernel wrappers
_MAX_TILE_BYTES = 8 * 1024 * 1024  # double-buffered in+out row-tile budget (safe on v5e/v7x)


def _pick_row_tile(M, bytes_per_row, row_tile):
    tb = min(row_tile, _round_up(M, 8))
    while tb > 8 and 2 * tb * bytes_per_row > _MAX_TILE_BYTES:
        tb = max(8, _round_up(tb // 2, 8))
    return tb


def fused_linear(x, w, b, act="none", row_tile=512):
    """act(x @ w + b). Row-tiled 'parallel' grid; output columns padded to a multiple of 128
    lanes (lane-dense stores), weights/bias stay VMEM-resident across the grid."""
    M, K = x.shape
    N = w.shape[1]
    Np = _round_up(N, 128)
    if Np != N:
        w = jnp.pad(w, ((0, 0), (0, Np - N)))
        b = jnp.pad(b, (0, Np - N))
    b2d = b.reshape(1, Np)
    tb = _pick_row_tile(M, 4 * (K + Np), row_tile)
    m_pad = _round_up(M, tb)
    xp = jnp.pad(x, ((0, m_pad - M), (0, 0))) if m_pad != M else x
    grid = (m_pad // tb,)
    flops = 2 * m_pad * K * Np + m_pad * Np
    trans = m_pad * Np if act == "sigmoid2" else 0
    bytes_accessed = 4 * (m_pad * K + K * Np + Np + m_pad * Np)
    out = pl.pallas_call(
        functools.partial(_mm_bias_act_kernel, act=act),
        out_shape=jax.ShapeDtypeStruct((m_pad, Np), jnp.float32),
        grid=grid,
        in_specs=[
            pl.BlockSpec((tb, K), lambda i: (i, 0)),    # activations: tiled on rows
            pl.BlockSpec((K, Np), lambda i: (0, 0)),    # weights: resident across the grid
            pl.BlockSpec((1, Np), lambda i: (0, 0)),    # bias: resident across the grid
        ],
        out_specs=pl.BlockSpec((tb, Np), lambda i: (i, 0)),
        compiler_params=pltpu.CompilerParams(dimension_semantics=("parallel",)),
        cost_estimate=pl.CostEstimate(flops=flops, transcendentals=trans,
                                      bytes_accessed=bytes_accessed),
    )(xp, w, b2d)
    return out[:M, :N]


def fused_middle(x, w3, b3, wm, bm, wt2, bt2, row_tile=256):
    """One kernel for the whole bottleneck: (B, 2048) -> (B, 2048) via three matmuls."""
    M, K = x.shape
    H = w3.shape[1]
    N = wt2.shape[1]
    tb = _pick_row_tile(M, 4 * (K + N), row_tile)
    m_pad = _round_up(M, tb)
    xp = jnp.pad(x, ((0, m_pad - M), (0, 0))) if m_pad != M else x
    grid = (m_pad // tb,)
    flops = 2 * m_pad * (K * H + H * H + H * N) + 3 * m_pad * max(H, N)
    bytes_accessed = 4 * (m_pad * (K + N) + K * H + H * H + H * N + 2 * H + N)
    out = pl.pallas_call(
        _middle_kernel,
        out_shape=jax.ShapeDtypeStruct((m_pad, N), jnp.float32),
        grid=grid,
        in_specs=[
            pl.BlockSpec((tb, K), lambda i: (i, 0)),
            pl.BlockSpec((K, H), lambda i: (0, 0)),
            pl.BlockSpec((1, H), lambda i: (0, 0)),
            pl.BlockSpec((H, H), lambda i: (0, 0)),
            pl.BlockSpec((1, H), lambda i: (0, 0)),
            pl.BlockSpec((H, N), lambda i: (0, 0)),
            pl.BlockSpec((1, N), lambda i: (0, 0)),
        ],
        out_specs=pl.BlockSpec((tb, N), lambda i: (i, 0)),
        compiler_params=pltpu.CompilerParams(dimension_semantics=("parallel",)),
        cost_estimate=pl.CostEstimate(flops=flops, transcendentals=0,
                                      bytes_accessed=bytes_accessed),
    )(xp, w3, b3.reshape(1, H), wm, bm.reshape(1, H), wt2, bt2.reshape(1, N))
    return out[:M]


# --------------------------------------------------------------------------- patch plumbing
def _im2col_nhwc(x, k, s, pad):
    """NHWC im2col; column order (kh, kw, c). Returns ((B*Ho*Wo, k*k*C), Ho, Wo)."""
    B, H, W, C = x.shape
    if pad:
        x = jnp.pad(x, ((0, 0), (pad, pad), (pad, pad), (0, 0)))
    Hp, Wp = H + 2 * pad, W + 2 * pad
    Ho = (Hp - k) // s + 1
    Wo = (Wp - k) // s + 1
    cols = []
    for kh in range(k):
        for kw in range(k):
            cols.append(jax.lax.slice(
                x, (0, kh, kw, 0),
                (B, kh + (Ho - 1) * s + 1, kw + (Wo - 1) * s + 1, C),
                (1, s, s, 1)))
    pat = jnp.concatenate(cols, axis=-1)            # (B, Ho, Wo, k*k*C), no transpose needed
    return pat.reshape(B * Ho * Wo, k * k * C), Ho, Wo


def _subpix_patches(x):
    """2x2 stride-1 windows of x padded bottom/right by 1; column order (dh, dw, c).
    These patches feed all four output phases of a k3/s2/p1/op1 ConvTranspose."""
    B, H, W, C = x.shape
    xp = jnp.pad(x, ((0, 0), (0, 1), (0, 1), (0, 0)))
    cols = [xp[:, dh:dh + H, dw:dw + W, :] for dh in (0, 1) for dw in (0, 1)]
    return jnp.concatenate(cols, axis=-1).reshape(B * H * W, 4 * C)


def _pixel_shuffle2(y, B, H, W, Cout):
    """(B*H*W, 4*Cout) phase-major GEMM output -> (B, 2H, 2W, Cout)."""
    y = y.reshape(B, H, W, 2, 2, Cout).transpose(0, 1, 3, 2, 4, 5)
    return y.reshape(B, 2 * H, 2 * W, Cout)


# --------------------------------------------------------------------------- weight prep (numpy)
def _conv_weight_matrix(w):
    # (Cout, Cin, k, k) -> (k*k*Cin, Cout); row order (kh, kw, cin) to match _im2col_nhwc.
    Cout, Cin, k, _ = w.shape
    return np.transpose(w, (2, 3, 1, 0)).reshape(k * k * Cin, Cout)


def _conv2d_dense(w, b, Hin, Win, stride, padding):
    """Unroll a tiny Conv2d into a dense (Hin*Win*Cin, Ho*Wo*Cout) matrix (hwc order)."""
    Cout, Cin, k, _ = w.shape
    Ho = (Hin + 2 * padding - k) // stride + 1
    Wo = (Win + 2 * padding - k) // stride + 1
    W = np.zeros((Hin, Win, Cin, Ho, Wo, Cout), np.float32)
    for oh in range(Ho):
        for ow in range(Wo):
            for kh in range(k):
                for kw in range(k):
                    ih = oh * stride - padding + kh
                    iw = ow * stride - padding + kw
                    if 0 <= ih < Hin and 0 <= iw < Win:
                        W[ih, iw, :, oh, ow, :] += w[:, :, kh, kw].T
    return W.reshape(Hin * Win * Cin, Ho * Wo * Cout), np.tile(b, Ho * Wo)


def _convt2d_dense(w, b, Hin, Win, stride, padding, output_padding):
    """Unroll a tiny ConvTranspose2d into a dense matrix (hwc order)."""
    Cin, Cout, k, _ = w.shape
    assert padding <= k - 1, "ConvTranspose padding must be <= k-1"
    Ho = (Hin - 1) * stride - 2 * padding + k + output_padding
    Wo = (Win - 1) * stride - 2 * padding + k + output_padding
    W = np.zeros((Hin, Win, Cin, Ho, Wo, Cout), np.float32)
    for ih in range(Hin):
        for iw in range(Win):
            for kh in range(k):
                for kw in range(k):
                    oh = ih * stride - padding + kh
                    ow = iw * stride - padding + kw
                    if 0 <= oh < Ho and 0 <= ow < Wo:
                        W[ih, iw, :, oh, ow, :] += w[:, :, kh, kw]
    return W.reshape(Hin * Win * Cin, Ho * Wo * Cout), np.tile(b, Ho * Wo)


def _convt_k3s2_phase(w, b, stride, padding, output_padding):
    """Subpixel decomposition of ConvTranspose2d(k=3, s=2, p=1, op=1): a (4*Cin, 4*Cout)
    weight matrix applied to shared 2x2-window patches; output columns ordered (r, c, co)."""
    Cin, Cout, k, _ = w.shape
    assert (k, stride, padding, output_padding) == (3, 2, 1, 1)
    W = np.zeros((2, 2, Cin, 2, 2, Cout), np.float32)  # (dh, dw, ci, r, c, co)
    taps = {0: [(0, 1)], 1: [(0, 2), (1, 0)]}          # phase -> [(window delta, kernel tap)]
    for r, rtaps in taps.items():
        for c, ctaps in taps.items():
            for dh, kh in rtaps:
                for dw, kw in ctaps:
                    W[dh, dw, :, r, c, :] += w[:, :, kh, kw]
    return W.reshape(4 * Cin, 4 * Cout), np.tile(b, 4)


def prepare_pallas_params(params, no_channels):
    """One-time numpy weight preprocessing for the Pallas forward path."""
    f = lambda a: np.asarray(a, dtype=np.float32)
    (w1, b1, _, _), (w2, b2, _, _), (w3, b3, s3, p3), (w4, b4, s4, p4) = params["enc_conv"]
    w_el, b_el = params["enc_lin"]
    w_dl, b_dl = params["dec_lin"]
    (wt1, bt1, st1, pt1, ot1), (wt2, bt2, st2, pt2, ot2), \
        (wt3, bt3, st3, pt3, ot3), (wt4, bt4, st4, pt4, ot4) = params["dec_convt"]

    # encoder conv1/conv2: plain im2col GEMM weights
    W1, B1 = _conv_weight_matrix(f(w1)), f(b1)
    W2, B2 = _conv_weight_matrix(f(w2)), f(b2)

    # bottleneck: dense-unrolled conv3 (2048->64); conv4 -> Linear -> Linear -> convt1 has no
    # nonlinearity between them, so it is pre-composed into a single 64x64 affine map.
    W3d, B3d = _conv2d_dense(f(w3), f(b3), 8, 8, s3, p3)              # (2048, 64)
    W4d, B4d = _conv2d_dense(f(w4), f(b4), 2, 2, s4, p4)              # (64, 32)
    C, H, W = 8, 2, 2                                                 # bottleneck (c, h, w)
    perm = np.zeros(C * H * W, np.int64)                              # hwc index -> chw index
    for h in range(H):
        for w_ in range(W):
            for c in range(C):
                perm[h * W * C + w_ * C + c] = c * H * W + h * W + w_
    We, Be = f(w_el)[perm, :], f(b_el)                                # Linear on hwc-ordered input
    Wd, Bd = f(w_dl)[:, perm], f(b_dl)[perm]                          # Linear to hwc-ordered output
    Wt1d, Bt1d = _convt2d_dense(f(wt1), f(bt1), 2, 2, st1, pt1, ot1)  # (32, 64)
    Wm = W4d @ We @ Wd @ Wt1d                                         # composed 64x64 affine
    Bm = ((B4d @ We + Be) @ Wd + Bd) @ Wt1d + Bt1d
    Wt2d, Bt2d = _convt2d_dense(f(wt2), f(bt2), 2, 2, st2, pt2, ot2)  # (64, 2048)

    # decoder convt3/convt4: subpixel (phase) weights
    Wp3, Bp3 = _convt_k3s2_phase(f(wt3), f(bt3), st3, pt3, ot3)
    Wp4, Bp4 = _convt_k3s2_phase(f(wt4), f(bt4), st4, pt4, ot4)

    j = lambda a: jnp.asarray(a, dtype=jnp.float32)
    return {"w1": j(W1), "b1": j(B1), "w2": j(W2), "b2": j(B2),
            "w3d": j(W3d), "b3d": j(B3d), "wm": j(Wm), "bm": j(Bm),
            "wt2d": j(Wt2d), "bt2d": j(Bt2d),
            "wp3": j(Wp3), "bp3": j(Bp3), "wp4": j(Wp4), "bp4": j(Bp4),
            "nc": int(no_channels)}


# --------------------------------------------------------------------------- full model
def model_forward(x_nchw, pp):
    """Pallas forward: 2 * decoder(encoder(x)). Activations stay NHWC between layers."""
    assert x_nchw.shape[2] == 32 and x_nchw.shape[3] == 32, "architecture requires 32x32 input"
    B = x_nchw.shape[0]
    nc = pp["nc"]
    c1 = pp["w1"].shape[1]
    c2 = pp["w2"].shape[1]
    x = jnp.transpose(x_nchw, (0, 2, 3, 1))                     # NCHW -> NHWC (boundary only)

    # conv1 + ReLU : 32x32xnc -> 16x16x16
    pat, Ho, Wo = _im2col_nhwc(x, 3, 2, 1)
    h = fused_linear(pat, pp["w1"], pp["b1"], act="relu").reshape(B, Ho, Wo, c1)

    # conv2 + ReLU : 16x16x16 -> 8x8x32
    pat, Ho, Wo = _im2col_nhwc(h, 3, 2, 1)
    h = fused_linear(pat, pp["w2"], pp["b2"], act="relu").reshape(B, Ho, Wo, c2)

    # conv3+ReLU, conv4, Flatten, Linear, Linear, Unflatten, convt1, ReLU, convt2, ReLU
    # -> one fused Pallas kernel on flat (h, w, c) vectors: (B, 2048) -> (B, 2048)
    h = fused_middle(h.reshape(B, -1), pp["w3d"], pp["b3d"], pp["wm"], pp["bm"],
                     pp["wt2d"], pp["bt2d"]).reshape(B, 8, 8, c2)

    # convt3 + ReLU (subpixel decomposition): 8x8x32 -> 16x16x16
    Bh, Hh, Wh, _ = h.shape
    cout3 = pp["wp3"].shape[1] // 4
    y = fused_linear(_subpix_patches(h), pp["wp3"], pp["bp3"], act="relu")
    h = _pixel_shuffle2(y, Bh, Hh, Wh, cout3)

    # convt4 + 2*sigmoid (subpixel decomposition; output scaling fused in-kernel)
    Bh, Hh, Wh, _ = h.shape
    y = fused_linear(_subpix_patches(h), pp["wp4"], pp["bp4"], act="sigmoid2")
    h = _pixel_shuffle2(y, Bh, Hh, Wh, nc)

    return jnp.transpose(h, (0, 3, 1, 2))                       # NHWC -> NCHW


def reference_forward(x, params):
    """Pure-JAX/XLA reference mirroring the PyTorch module exactly."""
    relu = lambda t: jnp.maximum(t, 0.0)
    h = x
    for i, (w, b, s, p) in enumerate(params["enc_conv"]):
        h = jax.lax.conv_general_dilated(
            h, w, (s, s), [(p, p), (p, p)],
            dimension_numbers=("NCHW", "OIHW", "NCHW"))
        h = h + b.reshape(1, -1, 1, 1)
        if i < 3:
            h = relu(h)
    h = h.reshape(h.shape[0], -1)
    we, be = params["enc_lin"]
    h = h @ we + be
    wd, bd = params["dec_lin"]
    h = h @ wd + bd
    h = h.reshape(h.shape[0], 8, 2, 2)
    n_t = len(params["dec_convt"])
    for i, (w, b, s, p, op) in enumerate(params["dec_convt"]):
        k = w.shape[2]
        wc = jnp.flip(w, axis=(2, 3)).transpose(1, 0, 2, 3)
        h = jax.lax.conv_general_dilated(
            h, wc, (1, 1), [(k - 1 - p, k - 1 - p + op)] * 2,
            lhs_dilation=(s, s),
            dimension_numbers=("NCHW", "OIHW", "NCHW"))
        h = h + b.reshape(1, -1, 1, 1)
        if i < n_t - 1:
            h = relu(h)
    return 2.0 * jax.nn.sigmoid(h)


def init_params(key, latent_dim, no_channels):
    """Deterministic small random params with PyTorch-consistent shapes.
    Linear weights are stored pre-transposed as (in, out)."""
    def nrm(k, shape, fan_in):
        return jax.random.normal(k, shape, dtype=jnp.float32) * (1.0 / np.sqrt(fan_in))

    keys = jax.random.split(key, 20)
    ki = 0
    enc_cfg = [(no_channels, 16, 3, 2, 1), (16, 32, 3, 2, 1),
               (32, 16, 8, 2, 1), (16, 8, 2, 2, 1)]
    enc_conv = []
    for cin, cout, k, s, p in enc_cfg:
        w = nrm(keys[ki], (cout, cin, k, k), cin * k * k); ki += 1
        b = nrm(keys[ki], (cout,), cin * k * k); ki += 1
        enc_conv.append((w, b, s, p))
    w_el = nrm(keys[ki], (8 * 2 * 2, latent_dim), 8 * 2 * 2); ki += 1
    b_el = nrm(keys[ki], (latent_dim,), 8 * 2 * 2); ki += 1
    w_dl = nrm(keys[ki], (latent_dim, 8 * 2 * 2), latent_dim); ki += 1
    b_dl = nrm(keys[ki], (8 * 2 * 2,), latent_dim); ki += 1
    dec_cfg = [(8, 16, 2, 2, 1, 0), (16, 32, 8, 2, 1, 0),
               (32, 16, 3, 2, 1, 1), (16, no_channels, 3, 2, 1, 1)]
    dec_convt = []
    for cin, cout, k, s, p, op in dec_cfg:
        w = nrm(keys[ki], (cin, cout, k, k), cin * k * k); ki += 1
        b = nrm(keys[ki], (cout,), cin * k * k); ki += 1
        dec_convt.append((w, b, s, p, op))
    return {"enc_conv": enc_conv, "enc_lin": (w_el, b_el),
            "dec_lin": (w_dl, b_dl), "dec_convt": dec_convt}


if __name__ == "__main__":
    # FMNIST-style 1x32x32 (the 8*2*2 bottleneck requires 32x32 input), batch=2, latent=8.
    batch, no_channels, hw = 2, 1, 32
    latent_dim = 8

    key = jax.random.PRNGKey(0)
    key, xkey = jax.random.split(key)
    x = jax.random.uniform(xkey, (batch, no_channels, hw, hw), dtype=jnp.float32)
    params = init_params(key, latent_dim, no_channels)
    pp = prepare_pallas_params(params, no_channels)     # one-time weight preprocessing

    fwd = jax.jit(lambda inp: model_forward(inp, pp))
    out = jax.block_until_ready(fwd(x))
    ref = jax.block_until_ready(reference_forward(x, params))

    assert out.shape == (batch, no_channels, hw, hw), out.shape
    np.testing.assert_allclose(np.asarray(out), np.asarray(ref), rtol=1e-3, atol=1e-3)
    assert np.all(np.asarray(out) >= 0.0) and np.all(np.asarray(out) <= 2.0)

    print("KERNEL_OK")
</pallas_src>

<mosaic_0001>
module attributes {stable_mosaic.version = 11 : i64} {
  func.func @_mm_bias_act_kernel(%arg0: i32, %arg1: memref<512x9xf32, #tpu.memory_space<vmem>>, %arg2: memref<9x128xf32, #tpu.memory_space<vmem>>, %arg3: memref<1x128xf32, #tpu.memory_space<vmem>>, %arg4: memref<512x128xf32, #tpu.memory_space<vmem>>) attributes {dimension_semantics = [#tpu.dimension_semantics<parallel>], iteration_bounds = array<i64: 1>, scalar_prefetch = 0 : i64, scratch_operands = 0 : i64, tpu.core_type = #tpu.core_type<tc>, window_params = [{transform_indices = @transform_0, window_bounds = array<i64: 512, 9>}, {pipeline_mode = #tpu.pipeline_mode<synchronous>, transform_indices = @transform_1, window_bounds = array<i64: 9, 128>}, {pipeline_mode = #tpu.pipeline_mode<synchronous>, transform_indices = @transform_2, window_bounds = array<i64: 1, 128>}, {transform_indices = @transform_3, window_bounds = array<i64: 512, 128>}]} {
    %c0 = arith.constant 0 : index
    %c0_0 = arith.constant 0 : index
    %0 = vector.load %arg1[%c0, %c0_0] : memref<512x9xf32, #tpu.memory_space<vmem>>, vector<512x9xf32>
    %c0_1 = arith.constant 0 : index
    %c0_2 = arith.constant 0 : index
    %1 = vector.load %arg2[%c0_1, %c0_2] : memref<9x128xf32, #tpu.memory_space<vmem>>, vector<9x128xf32>
    %cst = arith.constant dense<0.000000e+00> : vector<512x128xf32>
    %2 = tpu.matmul %0, %1, %cst {dimension_numbers = #tpu.dot_dimension_numbers<[1], [0], [0], [1], [0, 0, 1, 1], [], []>} : vector<512x9xf32>, vector<9x128xf32>, vector<512x128xf32> -> vector<512x128xf32>
    %c0_3 = arith.constant 0 : index
    %c0_4 = arith.constant 0 : index
    %3 = vector.load %arg3[%c0_3, %c0_4] : memref<1x128xf32, #tpu.memory_space<vmem>>, vector<1x128xf32>
    %4 = vector.broadcast %3 : vector<1x128xf32> to vector<512x128xf32>
    %5 = arith.addf %2, %4 : vector<512x128xf32>
    %cst_5 = arith.constant 0.000000e+00 : f32
    %6 = vector.broadcast %cst_5 : f32 to vector<512x128xf32>
    %7 = arith.maximumf %5, %6 : vector<512x128xf32>
    %c0_6 = arith.constant 0 : index
    %c0_7 = arith.constant 0 : index
    %8 = vector.load %arg4[%c0_6, %c0_7] : memref<512x128xf32, #tpu.memory_space<vmem>>, vector<512x128xf32>
    tpu.vector_store %arg4[%c0_6, %c0_7], %7 {strides = array<i32>} : memref<512x128xf32, #tpu.memory_space<vmem>>, vector<512x128xf32>,
    return
  }
  func.func @transform_0(%arg0: i32) -> (i32, i32) {
    %c0_i32 = arith.constant 0 : i32
    %c0_i32_0 = arith.constant 0 : i32
    return %arg0, %c0_i32 : i32, i32
  }
  func.func @transform_1(%arg0: i32) -> (i32, i32) {
    %c0_i32 = arith.constant 0 : i32
    %c0_i32_0 = arith.constant 0 : i32
    %c0_i32_1 = arith.constant 0 : i32
    return %c0_i32, %c0_i32_0 : i32, i32
  }
  func.func @transform_2(%arg0: i32) -> (i32, i32) {
    %c0_i32 = arith.constant 0 : i32
    %c0_i32_0 = arith.constant 0 : i32
    %c0_i32_1 = arith.constant 0 : i32
    return %c0_i32, %c0_i32_0 : i32, i32
  }
  func.func @transform_3(%arg0: i32) -> (i32, i32) {
    %c0_i32 = arith.constant 0 : i32
    %c0_i32_0 = arith.constant 0 : i32
    return %arg0, %c0_i32 : i32, i32
  }
}

module attributes {stable_mosaic.version = 11 : i64} {
  func.func @_mm_bias_act_kernel(%arg0: i32, %arg1: memref<128x144xf32, #tpu.memory_space<vmem>>, %arg2: memref<144x128xf32, #tpu.memory_space<vmem>>, %arg3: memref<1x128xf32, #tpu.memory_space<vmem>>, %arg4: memref<128x128xf32, #tpu.memory_space<vmem>>) attributes {dimension_semantics = [#tpu.dimension_semantics<parallel>], iteration_bounds = array<i64: 1>, scalar_prefetch = 0 : i64, scratch_operands = 0 : i64, tpu.core_type = #tpu.core_type<tc>, window_params = [{transform_indices = @transform_0, window_bounds = array<i64: 128, 144>}, {pipeline_mode = #tpu.pipeline_mode<synchronous>, transform_indices = @transform_1, window_bounds = array<i64: 144, 128>}, {pipeline_mode = #tpu.pipeline_mode<synchronous>, transform_indices = @transform_2, window_bounds = array<i64: 1, 128>}, {transform_indices = @transform_3, window_bounds = array<i64: 128, 128>}]} {
    %c0 = arith.constant 0 : index
    %c0_0 = arith.constant 0 : index
    %0 = vector.load %arg1[%c0, %c0_0] : memref<128x144xf32, #tpu.memory_space<vmem>>, vector<128x144xf32>
    %c0_1 = arith.constant 0 : index
    %c0_2 = arith.constant 0 : index
    %1 = vector.load %arg2[%c0_1, %c0_2] : memref<144x128xf32, #tpu.memory_space<vmem>>, vector<144x128xf32>
    %cst = arith.constant dense<0.000000e+00> : vector<128x128xf32>
    %2 = tpu.matmul %0, %1, %cst {dimension_numbers = #tpu.dot_dimension_numbers<[1], [0], [0], [1], [0, 0, 1, 1], [], []>} : vector<128x144xf32>, vector<144x128xf32>, vector<128x128xf32> -> vector<128x128xf32>
    %c0_3 = arith.constant 0 : index
    %c0_4 = arith.constant 0 : index
    %3 = vector.load %arg3[%c0_3, %c0_4] : memref<1x128xf32, #tpu.memory_space<vmem>>, vector<1x128xf32>
    %4 = vector.broadcast %3 : vector<1x128xf32> to vector<128x128xf32>
    %5 = arith.addf %2, %4 : vector<128x128xf32>
    %cst_5 = arith.constant 0.000000e+00 : f32
    %6 = vector.broadcast %cst_5 : f32 to vector<128x128xf32>
    %7 = arith.maximumf %5, %6 : vector<128x128xf32>
    %c0_6 = arith.constant 0 : index
    %c0_7 = arith.constant 0 : index
    %8 = vector.load %arg4[%c0_6, %c0_7] : memref<128x128xf32, #tpu.memory_space<vmem>>, vector<128x128xf32>
    tpu.vector_store %arg4[%c0_6, %c0_7], %7 {strides = array<i32>} : memref<128x128xf32, #tpu.memory_space<vmem>>, vector<128x128xf32>,
    return
  }
  func.func @transform_0(%arg0: i32) -> (i32, i32) {
    %c0_i32 = arith.constant 0 : i32
    %c0_i32_0 = arith.constant 0 : i32
    return %arg0, %c0_i32 : i32, i32
  }
  func.func @transform_1(%arg0: i32) -> (i32, i32) {
    %c0_i32 = arith.constant 0 : i32
    %c0_i32_0 = arith.constant 0 : i32
    %c0_i32_1 = arith.constant 0 : i32
    return %c0_i32, %c0_i32_0 : i32, i32
  }
  func.func @transform_2(%arg0: i32) -> (i32, i32) {
    %c0_i32 = arith.constant 0 : i32
    %c0_i32_0 = arith.constant 0 : i32
    %c0_i32_1 = arith.constant 0 : i32
    return %c0_i32, %c0_i32_0 : i32, i32
  }
  func.func @transform_3(%arg0: i32) -> (i32, i32) {
    %c0_i32 = arith.constant 0 : i32
    %c0_i32_0 = arith.constant 0 : i32
    return %arg0, %c0_i32 : i32, i32
  }
}

module attributes {stable_mosaic.version = 11 : i64} {
  func.func @_middle_kernel(%arg0: i32, %arg1: memref<8x2048xf32, #tpu.memory_space<vmem>>, %arg2: memref<2048x64xf32, #tpu.memory_space<vmem>>, %arg3: memref<1x64xf32, #tpu.memory_space<vmem>>, %arg4: memref<64x64xf32, #tpu.memory_space<vmem>>, %arg5: memref<1x64xf32, #tpu.memory_space<vmem>>, %arg6: memref<64x2048xf32, #tpu.memory_space<vmem>>, %arg7: memref<1x2048xf32, #tpu.memory_space<vmem>>, %arg8: memref<8x2048xf32, #tpu.memory_space<vmem>>) attributes {dimension_semantics = [#tpu.dimension_semantics<parallel>], iteration_bounds = array<i64: 1>, scalar_prefetch = 0 : i64, scratch_operands = 0 : i64, tpu.core_type = #tpu.core_type<tc>, window_params = [{transform_indices = @transform_0, window_bounds = array<i64: 8, 2048>}, {pipeline_mode = #tpu.pipeline_mode<synchronous>, transform_indices = @transform_1, window_bounds = array<i64: 2048, 64>}, {pipeline_mode = #tpu.pipeline_mode<synchronous>, transform_indices = @transform_2, window_bounds = array<i64: 1, 64>}, {pipeline_mode = #tpu.pipeline_mode<synchronous>, transform_indices = @transform_3, window_bounds = array<i64: 64, 64>}, {pipeline_mode = #tpu.pipeline_mode<synchronous>, transform_indices = @transform_4, window_bounds = array<i64: 1, 64>}, {pipeline_mode = #tpu.pipeline_mode<synchronous>, transform_indices = @transform_5, window_bounds = array<i64: 64, 2048>}, {pipeline_mode = #tpu.pipeline_mode<synchronous>, transform_indices = @transform_6, window_bounds = array<i64: 1, 2048>}, {transform_indices = @transform_7, window_bounds = array<i64: 8, 2048>}]} {
    %c0 = arith.constant 0 : index
    %c0_0 = arith.constant 0 : index
    %0 = vector.load %arg1[%c0, %c0_0] : memref<8x2048xf32, #tpu.memory_space<vmem>>, vector<8x2048xf32>
    %c0_1 = arith.constant 0 : index
    %c0_2 = arith.constant 0 : index
    %1 = vector.load %arg2[%c0_1, %c0_2] : memref<2048x64xf32, #tpu.memory_space<vmem>>, vector<2048x64xf32>
    %cst = arith.constant dense<0.000000e+00> : vector<8x64xf32>
    %2 = tpu.matmul %0, %1, %cst {dimension_numbers = #tpu.dot_dimension_numbers<[1], [0], [0], [1], [0, 0, 1, 1], [], []>} : vector<8x2048xf32>, vector<2048x64xf32>, vector<8x64xf32> -> vector<8x64xf32>
    %c0_3 = arith.constant 0 : index
    %c0_4 = arith.constant 0 : index
    %3 = vector.load %arg3[%c0_3, %c0_4] : memref<1x64xf32, #tpu.memory_space<vmem>>, vector<1x64xf32>
    %4 = vector.broadcast %3 : vector<1x64xf32> to vector<8x64xf32>
    %5 = arith.addf %2, %4 : vector<8x64xf32>
    %cst_5 = arith.constant 0.000000e+00 : f32
    %6 = vector.broadcast %cst_5 : f32 to vector<8x64xf32>
    %7 = arith.maximumf %5, %6 : vector<8x64xf32>
    %c0_6 = arith.constant 0 : index
    %c0_7 = arith.constant 0 : index
    %8 = vector.load %arg4[%c0_6, %c0_7] : memref<64x64xf32, #tpu.memory_space<vmem>>, vector<64x64xf32>
    %cst_8 = arith.constant dense<0.000000e+00> : vector<8x64xf32>
    %9 = tpu.matmul %7, %8, %cst_8 {dimension_numbers = #tpu.dot_dimension_numbers<[1], [0], [0], [1], [0, 0, 1, 1], [], []>} : vector<8x64xf32>, vector<64x64xf32>, vector<8x64xf32> -> vector<8x64xf32>
    %c0_9 = arith.constant 0 : index
    %c0_10 = arith.constant 0 : index
    %10 = vector.load %arg5[%c0_9, %c0_10] : memref<1x64xf32, #tpu.memory_space<vmem>>, vector<1x64xf32>
    %11 = vector.broadcast %10 : vector<1x64xf32> to vector<8x64xf32>
    %12 = arith.addf %9, %11 : vector<8x64xf32>
    %cst_11 = arith.constant 0.000000e+00 : f32
    %13 = vector.broadcast %cst_11 : f32 to vector<8x64xf32>
    %14 = arith.maximumf %12, %13 : vector<8x64xf32>
    %c0_12 = arith.constant 0 : index
    %c0_13 = arith.constant 0 : index
    %15 = vector.load %arg6[%c0_12, %c0_13] : memref<64x2048xf32, #tpu.memory_space<vmem>>, vector<64x2048xf32>
    %cst_14 = arith.constant dense<0.000000e+00> : vector<8x2048xf32>
    %16 = tpu.matmul %14, %15, %cst_14 {dimension_numbers = #tpu.dot_dimension_numbers<[1], [0], [0], [1], [0, 0, 1, 1], [], []>} : vector<8x64xf32>, vector<64x2048xf32>, vector<8x2048xf32> -> vector<8x2048xf32>
    %c0_15 = arith.constant 0 : index
    %c0_16 = arith.constant 0 : index
    %17 = vector.load %arg7[%c0_15, %c0_16] : memref<1x2048xf32, #tpu.memory_space<vmem>>, vector<1x2048xf32>
    %18 = vector.broadcast %17 : vector<1x2048xf32> to vector<8x2048xf32>
    %19 = arith.addf %16, %18 : vector<8x2048xf32>
    %cst_17 = arith.constant 0.000000e+00 : f32
    %20 = vector.broadcast %cst_17 : f32 to vector<8x2048xf32>
    %21 = arith.maximumf %19, %20 : vector<8x2048xf32>
    %c0_18 = arith.constant 0 : index
    %c0_19 = arith.constant 0 : index
    %22 = vector.load %arg8[%c0_18, %c0_19] : memref<8x2048xf32, #tpu.memory_space<vmem>>, vector<8x2048xf32>
    tpu.vector_store %arg8[%c0_18, %c0_19], %21 {strides = array<i32>} : memref<8x2048xf32, #tpu.memory_space<vmem>>, vector<8x2048xf32>,
    return
  }
  func.func @transform_0(%arg0: i32) -> (i32, i32) {
    %c0_i32 = arith.constant 0 : i32
    %c0_i32_0 = arith.constant 0 : i32
    return %arg0, %c0_i32 : i32, i32
  }
  func.func @transform_1(%arg0: i32) -> (i32, i32) {
    %c0_i32 = arith.constant 0 : i32
    %c0_i32_0 = arith.constant 0 : i32
    %c0_i32_1 = arith.constant 0 : i32
    return %c0_i32, %c0_i32_0 : i32, i32
  }
  func.func @transform_2(%arg0: i32) -> (i32, i32) {
    %c0_i32 = arith.constant 0 : i32
    %c0_i32_0 = arith.constant 0 : i32
    %c0_i32_1 = arith.constant 0 : i32
    return %c0_i32, %c0_i32_0 : i32, i32
  }
  func.func @transform_3(%arg0: i32) -> (i32, i32) {
    %c0_i32 = arith.constant 0 : i32
    %c0_i32_0 = arith.constant 0 : i32
    %c0_i32_1 = arith.constant 0 : i32
    return %c0_i32, %c0_i32_0 : i32, i32
  }
  func.func @transform_4(%arg0: i32) -> (i32, i32) {
    %c0_i32 = arith.constant 0 : i32
    %c0_i32_0 = arith.constant 0 : i32
    %c0_i32_1 = arith.constant 0 : i32
    return %c0_i32, %c0_i32_0 : i32, i32
  }
  func.func @transform_5(%arg0: i32) -> (i32, i32) {
    %c0_i32 = arith.constant 0 : i32
    %c0_i32_0 = arith.constant 0 : i32
    %c0_i32_1 = arith.constant 0 : i32
    return %c0_i32, %c0_i32_0 : i32, i32
  }
  func.func @transform_6(%arg0: i32) -> (i32, i32) {
    %c0_i32 = arith.constant 0 : i32
    %c0_i32_0 = arith.constant 0 : i32
    %c0_i32_1 = arith.constant 0 : i32
    return %c0_i32, %c0_i32_0 : i32, i32
  }
  func.func @transform_7(%arg0: i32) -> (i32, i32) {
    %c0_i32 = arith.constant 0 : i32
    %c0_i32_0 = arith.constant 0 : i32
    return %arg0, %c0_i32 : i32, i32
  }
}

module attributes {stable_mosaic.version = 11 : i64} {
  func.func @_mm_bias_act_kernel(%arg0: i32, %arg1: memref<128x128xf32, #tpu.memory_space<vmem>>, %arg2: memref<128x128xf32, #tpu.memory_space<vmem>>, %arg3: memref<1x128xf32, #tpu.memory_space<vmem>>, %arg4: memref<128x128xf32, #tpu.memory_space<vmem>>) attributes {dimension_semantics = [#tpu.dimension_semantics<parallel>], iteration_bounds = array<i64: 1>, scalar_prefetch = 0 : i64, scratch_operands = 0 : i64, tpu.core_type = #tpu.core_type<tc>, window_params = [{transform_indices = @transform_0, window_bounds = array<i64: 128, 128>}, {pipeline_mode = #tpu.pipeline_mode<synchronous>, transform_indices = @transform_1, window_bounds = array<i64: 128, 128>}, {pipeline_mode = #tpu.pipeline_mode<synchronous>, transform_indices = @transform_2, window_bounds = array<i64: 1, 128>}, {transform_indices = @transform_3, window_bounds = array<i64: 128, 128>}]} {
    %c0 = arith.constant 0 : index
    %c0_0 = arith.constant 0 : index
    %0 = vector.load %arg1[%c0, %c0_0] : memref<128x128xf32, #tpu.memory_space<vmem>>, vector<128x128xf32>
    %c0_1 = arith.constant 0 : index
    %c0_2 = arith.constant 0 : index
    %1 = vector.load %arg2[%c0_1, %c0_2] : memref<128x128xf32, #tpu.memory_space<vmem>>, vector<128x128xf32>
    %cst = arith.constant dense<0.000000e+00> : vector<128x128xf32>
    %2 = tpu.matmul %0, %1, %cst {dimension_numbers = #tpu.dot_dimension_numbers<[1], [0], [0], [1], [0, 0, 1, 1], [], []>} : vector<128x128xf32>, vector<128x128xf32>, vector<128x128xf32> -> vector<128x128xf32>
    %c0_3 = arith.constant 0 : index
    %c0_4 = arith.constant 0 : index
    %3 = vector.load %arg3[%c0_3, %c0_4] : memref<1x128xf32, #tpu.memory_space<vmem>>, vector<1x128xf32>
    %4 = vector.broadcast %3 : vector<1x128xf32> to vector<128x128xf32>
    %5 = arith.addf %2, %4 : vector<128x128xf32>
    %cst_5 = arith.constant 0.000000e+00 : f32
    %6 = vector.broadcast %cst_5 : f32 to vector<128x128xf32>
    %7 = arith.maximumf %5, %6 : vector<128x128xf32>
    %c0_6 = arith.constant 0 : index
    %c0_7 = arith.constant 0 : index
    %8 = vector.load %arg4[%c0_6, %c0_7] : memref<128x128xf32, #tpu.memory_space<vmem>>, vector<128x128xf32>
    tpu.vector_store %arg4[%c0_6, %c0_7], %7 {strides = array<i32>} : memref<128x128xf32, #tpu.memory_space<vmem>>, vector<128x128xf32>,
    return
  }
  func.func @transform_0(%arg0: i32) -> (i32, i32) {
    %c0_i32 = arith.constant 0 : i32
    %c0_i32_0 = arith.constant 0 : i32
    return %arg0, %c0_i32 : i32, i32
  }
  func.func @transform_1(%arg0: i32) -> (i32, i32) {
    %c0_i32 = arith.constant 0 : i32
    %c0_i32_0 = arith.constant 0 : i32
    %c0_i32_1 = arith.constant 0 : i32
    return %c0_i32, %c0_i32_0 : i32, i32
  }
  func.func @transform_2(%arg0: i32) -> (i32, i32) {
    %c0_i32 = arith.constant 0 : i32
    %c0_i32_0 = arith.constant 0 : i32
    %c0_i32_1 = arith.constant 0 : i32
    return %c0_i32, %c0_i32_0 : i32, i32
  }
  func.func @transform_3(%arg0: i32) -> (i32, i32) {
    %c0_i32 = arith.constant 0 : i32
    %c0_i32_0 = arith.constant 0 : i32
    return %arg0, %c0_i32 : i32, i32
  }
}

module attributes {stable_mosaic.version = 11 : i64} {
  func.func @_mm_bias_act_kernel(%arg0: i32, %arg1: memref<512x64xf32, #tpu.memory_space<vmem>>, %arg2: memref<64x128xf32, #tpu.memory_space<vmem>>, %arg3: memref<1x128xf32, #tpu.memory_space<vmem>>, %arg4: memref<512x128xf32, #tpu.memory_space<vmem>>) attributes {dimension_semantics = [#tpu.dimension_semantics<parallel>], iteration_bounds = array<i64: 1>, scalar_prefetch = 0 : i64, scratch_operands = 0 : i64, tpu.core_type = #tpu.core_type<tc>, window_params = [{transform_indices = @transform_0, window_bounds = array<i64: 512, 64>}, {pipeline_mode = #tpu.pipeline_mode<synchronous>, transform_indices = @transform_1, window_bounds = array<i64: 64, 128>}, {pipeline_mode = #tpu.pipeline_mode<synchronous>, transform_indices = @transform_2, window_bounds = array<i64: 1, 128>}, {transform_indices = @transform_3, window_bounds = array<i64: 512, 128>}]} {
    %c0 = arith.constant 0 : index
    %c0_0 = arith.constant 0 : index
    %0 = vector.load %arg1[%c0, %c0_0] : memref<512x64xf32, #tpu.memory_space<vmem>>, vector<512x64xf32>
    %c0_1 = arith.constant 0 : index
    %c0_2 = arith.constant 0 : index
    %1 = vector.load %arg2[%c0_1, %c0_2] : memref<64x128xf32, #tpu.memory_space<vmem>>, vector<64x128xf32>
    %cst = arith.constant dense<0.000000e+00> : vector<512x128xf32>
    %2 = tpu.matmul %0, %1, %cst {dimension_numbers = #tpu.dot_dimension_numbers<[1], [0], [0], [1], [0, 0, 1, 1], [], []>} : vector<512x64xf32>, vector<64x128xf32>, vector<512x128xf32> -> vector<512x128xf32>
    %c0_3 = arith.constant 0 : index
    %c0_4 = arith.constant 0 : index
    %3 = vector.load %arg3[%c0_3, %c0_4] : memref<1x128xf32, #tpu.memory_space<vmem>>, vector<1x128xf32>
    %4 = vector.broadcast %3 : vector<1x128xf32> to vector<512x128xf32>
    %5 = arith.addf %2, %4 : vector<512x128xf32>
    %6 = math.absf %5 : vector<512x128xf32>
    %cst_5 = arith.constant 0.000000e+00 : f32
    %7 = vector.broadcast %cst_5 : f32 to vector<512x128xf32>
    %8 = arith.subf %7, %6 : vector<512x128xf32>
    %9 = math.exp %8 : vector<512x128xf32>
    %cst_6 = arith.constant 0.000000e+00 : f32
    %10 = vector.broadcast %cst_6 : f32 to vector<512x128xf32>
    %11 = arith.cmpf oge, %5, %10 : vector<512x128xf32>
    %cst_7 = arith.constant 1.000000e+00 : f32
    %12 = vector.broadcast %cst_7 : f32 to vector<512x128xf32>
    %13 = arith.select %11, %12, %9 : vector<512x128xi1>, vector<512x128xf32>
    %cst_8 = arith.constant 2.000000e+00 : f32
    %14 = vector.broadcast %cst_8 : f32 to vector<512x128xf32>
    %15 = arith.mulf %14, %13 : vector<512x128xf32>
    %cst_9 = arith.constant 1.000000e+00 : f32
    %16 = vector.broadcast %cst_9 : f32 to vector<512x128xf32>
    %17 = arith.addf %16, %9 : vector<512x128xf32>
    %18 = arith.divf %15, %17 : vector<512x128xf32>
    %c0_10 = arith.constant 0 : index
    %c0_11 = arith.constant 0 : index
    %19 = vector.load %arg4[%c0_10, %c0_11] : memref<512x128xf32, #tpu.memory_space<vmem>>, vector<512x128xf32>
    tpu.vector_store %arg4[%c0_10, %c0_11], %18 {strides = array<i32>} : memref<512x128xf32, #tpu.memory_space<vmem>>, vector<512x128xf32>,
    return
  }
  func.func @transform_0(%arg0: i32) -> (i32, i32) {
    %c0_i32 = arith.constant 0 : i32
    %c0_i32_0 = arith.constant 0 : i32
    return %arg0, %c0_i32 : i32, i32
  }
  func.func @transform_1(%arg0: i32) -> (i32, i32) {
    %c0_i32 = arith.constant 0 : i32
    %c0_i32_0 = arith.constant 0 : i32
    %c0_i32_1 = arith.constant 0 : i32
    return %c0_i32, %c0_i32_0 : i32, i32
  }
  func.func @transform_2(%arg0: i32) -> (i32, i32) {
    %c0_i32 = arith.constant 0 : i32
    %c0_i32_0 = arith.constant 0 : i32
    %c0_i32_1 = arith.constant 0 : i32
    return %c0_i32, %c0_i32_0 : i32, i32
  }
  func.func @transform_3(%arg0: i32) -> (i32, i32) {
    %c0_i32 = arith.constant 0 : i32
    %c0_i32_0 = arith.constant 0 : i32
    return %arg0, %c0_i32 : i32, i32
  }
}

</mosaic_0001>

<llo_original>
// kernel: _lambda_.5
$region0: #{_lambda_.5}
  #allocation0 [shape = 'u32[]', space=smem, size = 0x4, offset = 0x4, fixed_abs, tag = 'smem constant byte address 0x4 - core index']
  #allocation1 [shape = 'u32[144,128]{1,0:T(1,128)}', space=vmem, size = 0x12000, scoped, tag = 'internal scratch']
  %s0 = inlined_call_operand.vmem [shape: f32[512,9], index: 0, kind: input, shape index: {}]
  %s1 = inlined_call_operand.vmem [shape: f32[9,128], index: 1, kind: input, shape index: {}]
  %s2 = inlined_call_operand.vmem [shape: f32[1,128], index: 2, kind: input, shape index: {}]
  %s3 = inlined_call_operand.vmem [shape: f32[512,128], index: 3, kind: output, shape index: {}]
  %s4 = sld [smem:[#allocation0]]
  $region22: #{_lambda_.5} parent=0
    _
  %s6 = ssub.s32 1, %s4
  %s7 = scalar_select 0, %s6, %s4
  // Predicated region
  $region2: #{_lambda_.5} parent=0 // pred_check
    _
  $region3: #{_lambda_.5} parent=0 // pred_check_branch
    %9 = sbr.rel (0) target = $region5
  $region4: #{_lambda_.5} parent=0 // pred_region
    _
  $region5: #{_lambda_.5} parent=0 // pred_fallthru
    _
  // Predicated region
  $region6: #{_lambda_.5} parent=0 // pred_check
    _
  $region7: #{_lambda_.5} parent=0 // pred_check_branch
    %11 = sbr.rel (0) target = $region9
  $region8: #{_lambda_.5} parent=0 // pred_region
    _
  $region9: #{_lambda_.5} parent=0 // pred_fallthru
    _
  // Predicated region
  $region10: #{_lambda_.5} parent=0 // pred_check
    _
  $region11: #{_lambda_.5} parent=0 // pred_check_branch
    %13 = sbr.rel (0) target = $region13
  $region12: #{_lambda_.5} parent=0 // pred_region
    _
  $region13: #{_lambda_.5} parent=0 // pred_fallthru
    _
  %v14 = vld [vmem:[%s0] sm:$0xff]
  %v15 = vld [vmem:[%s0 + $0x8] sm:$0xff]
  %v16 = vld [vmem:[%s0 + $0x10] sm:$0xff]
  %v17 = vld [vmem:[%s0 + $0x18] sm:$0xff]
  %v18 = vld [vmem:[%s0 + $0x20] sm:$0xff]
  %v19 = vld [vmem:[%s0 + $0x28] sm:$0xff]
  %v20 = vld [vmem:[%s0 + $0x30] sm:$0xff]
  %v21 = vld [vmem:[%s0 + $0x38] sm:$0xff]
  %v22 = vld [vmem:[%s0 + $0x40] sm:$0xff]
  %v23 = vld [vmem:[%s0 + $0x48] sm:$0xff]
  %v24 = vld [vmem:[%s0 + $0x50] sm:$0xff]
  %v25 = vld [vmem:[%s0 + $0x58] sm:$0xff]
  %v26 = vld [vmem:[%s0 + $0x60] sm:$0xff]
  %v27 = vld [vmem:[%s0 + $0x68] sm:$0xff]
  %v28 = vld [vmem:[%s0 + $0x70] sm:$0xff]
  %v29 = vld [vmem:[%s0 + $0x78] sm:$0xff]
  %v30 = vld [vmem:[%s0 + $0x80] sm:$0xff]
  %v31 = vld [vmem:[%s0 + $0x88] sm:$0xff]
  %v32 = vld [vmem:[%s0 + $0x90] sm:$0xff]
  %v33 = vld [vmem:[%s0 + $0x98] sm:$0xff]
  %v34 = vld [vmem:[%s0 + $0xa0] sm:$0xff]
  %v35 = vld [vmem:[%s0 + $0xa8] sm:$0xff]
  %v36 = vld [vmem:[%s0 + $0xb0] sm:$0xff]
  %v37 = vld [vmem:[%s0 + $0xb8] sm:$0xff]
  %v38 = vld [vmem:[%s0 + $0xc0] sm:$0xff]
  %v39 = vld [vmem:[%s0 + $0xc8] sm:$0xff]
  %v40 = vld [vmem:[%s0 + $0xd0] sm:$0xff]
  %v41 = vld [vmem:[%s0 + $0xd8] sm:$0xff]
  %v42 = vld [vmem:[%s0 + $0xe0] sm:$0xff]
  %v43 = vld [vmem:[%s0 + $0xe8] sm:$0xff]
  %v44 = vld [vmem:[%s0 + $0xf0] sm:$0xff]
  %v45 = vld [vmem:[%s0 + $0xf8] sm:$0xff]
  %v46 = vld [vmem:[%s0 + $0x100] sm:$0xff]
  %v47 = vld [vmem:[%s0 + $0x108] sm:$0xff]
  %v48 = vld [vmem:[%s0 + $0x110] sm:$0xff]
  %v49 = vld [vmem:[%s0 + $0x118] sm:$0xff]
  %v50 = vld [vmem:[%s0 + $0x120] sm:$0xff]
  %v51 = vld [vmem:[%s0 + $0x128] sm:$0xff]
  %v52 = vld [vmem:[%s0 + $0x130] sm:$0xff]
  %v53 = vld [vmem:[%s0 + $0x138] sm:$0xff]
  %v54 = vld [vmem:[%s0 + $0x140] sm:$0xff]
  %v55 = vld [vmem:[%s0 + $0x148] sm:$0xff]
  %v56 = vld [vmem:[%s0 + $0x150] sm:$0xff]
  %v57 = vld [vmem:[%s0 + $0x158] sm:$0xff]
  %v58 = vld [vmem:[%s0 + $0x160] sm:$0xff]
  %v59 = vld [vmem:[%s0 + $0x168] sm:$0xff]
  %v60 = vld [vmem:[%s0 + $0x170] sm:$0xff]
  %v61 = vld [vmem:[%s0 + $0x178] sm:$0xff]
  %v62 = vld [vmem:[%s0 + $0x180] sm:$0xff]
  %v63 = vld [vmem:[%s0 + $0x188] sm:$0xff]
  %v64 = vld [vmem:[%s0 + $0x190] sm:$0xff]
  %v65 = vld [vmem:[%s0 + $0x198] sm:$0xff]
  %v66 = vld [vmem:[%s0 + $0x1a0] sm:$0xff]
  %v67 = vld [vmem:[%s0 + $0x1a8] sm:$0xff]
  %v68 = vld [vmem:[%s0 + $0x1b0] sm:$0xff]
  %v69 = vld [vmem:[%s0 + $0x1b8] sm:$0xff]
  %v70 = vld [vmem:[%s0 + $0x1c0] sm:$0xff]
  %v71 = vld [vmem:[%s0 + $0x1c8] sm:$0xff]
  %v72 = vld [vmem:[%s0 + $0x1d0] sm:$0xff]
  %v73 = vld [vmem:[%s0 + $0x1d8] sm:$0xff]
  %v74 = vld [vmem:[%s0 + $0x1e0] sm:$0xff]
  %v75 = vld [vmem:[%s0 + $0x1e8] sm:$0xff]
  %v76 = vld [vmem:[%s0 + $0x1f0] sm:$0xff]
  %v77 = vld [vmem:[%s0 + $0x1f8] sm:$0xff]
  %v78 = vld [vmem:[%s1] sm:$0xff]
  %v79 = vld [vmem:[%s1 + $0x8] sm:$0x1]
  %v80 = vld [vmem:[%s2] sm:$0x1]
  %v82 = vlaneseq
  %v83 = vshrl.u32 %v82, 7
  %v84 = vsub.s32 0, %v83
  %v85 = vrot.slane %v80, %v84
  %vm87 = vcmask 72704
  %v89 = vsel %vm87, %v14, 0
  %v92 = vsel %vm87, %v15, 0
  %v95 = vsel %vm87, %v16, 0
  %v98 = vsel %vm87, %v17, 0
  %v101 = vsel %vm87, %v18, 0
  %v104 = vsel %vm87, %v19, 0
  %v107 = vsel %vm87, %v20, 0
  %v110 = vsel %vm87, %v21, 0
  %v113 = vsel %vm87, %v22, 0
  %v116 = vsel %vm87, %v23, 0
  %v119 = vsel %vm87, %v24, 0
  %v122 = vsel %vm87, %v25, 0
  %v125 = vsel %vm87, %v26, 0
  %v128 = vsel %vm87, %v27, 0
  %v131 = vsel %vm87, %v28, 0
  %v134 = vsel %vm87, %v29, 0
  %v137 = vsel %vm87, %v30, 0
  %v140 = vsel %vm87, %v31, 0
  %v143 = vsel %vm87, %v32, 0
  %v146 = vsel %vm87, %v33, 0
  %v149 = vsel %vm87, %v34, 0
  %v152 = vsel %vm87, %v35, 0
  %v155 = vsel %vm87, %v36, 0
  %v158 = vsel %vm87, %v37, 0
  %v161 = vsel %vm87, %v38, 0
  %v164 = vsel %vm87, %v39, 0
  %v167 = vsel %vm87, %v40, 0
  %v170 = vsel %vm87, %v41, 0
  %v173 = vsel %vm87, %v42, 0
  %v176 = vsel %vm87, %v43, 0
  %v179 = vsel %vm87, %v44, 0
  %v182 = vsel %vm87, %v45, 0
  %v185 = vsel %vm87, %v46, 0
  %v188 = vsel %vm87, %v47, 0
  %v191 = vsel %vm87, %v48, 0
  %v194 = vsel %vm87, %v49, 0
  %v197 = vsel %vm87, %v50, 0
  %v200 = vsel %vm87, %v51, 0
  %v203 = vsel %vm87, %v52, 0
  %v206 = vsel %vm87, %v53, 0
  %v209 = vsel %vm87, %v54, 0
  %v212 = vsel %vm87, %v55, 0
  %v215 = vsel %vm87, %v56, 0
  %v218 = vsel %vm87, %v57, 0
  %v221 = vsel %vm87, %v58, 0
  %v224 = vsel %vm87, %v59, 0
  %v227 = vsel %vm87, %v60, 0
  %v230 = vsel %vm87, %v61, 0
  %v233 = vsel %vm87, %v62, 0
  %v236 = vsel %vm87, %v63, 0
  %v239 = vsel %vm87, %v64, 0
  %v242 = vsel %vm87, %v65, 0
  %v245 = vsel %vm87, %v66, 0
  %v248 = vsel %vm87, %v67, 0
  %v251 = vsel %vm87, %v68, 0
  %v254 = vsel %vm87, %v69, 0
  %v257 = vsel %vm87, %v70, 0
  %v260 = vsel %vm87, %v71, 0
  %v263 = vsel %vm87, %v72, 0
  %v266 = vsel %vm87, %v73, 0
  %v269 = vsel %vm87, %v74, 0
  %v272 = vsel %vm87, %v75, 0
  %v275 = vsel %vm87, %v76, 0
  %v278 = vsel %vm87, %v77, 0
  %vm280 = vcmask 1040384
  %v282 = vsel %vm280, %v79, 0
  %284 = vmatprep.subr.mxu0 0.0
  %285 = vmatpush1.msra.mxu0 %v78
  %286 = vmatprep.subr.mxu0 0.0
  %287 = vmatpush1.msra.mxu0 %v282
  %288 = vmatprep.subr.mxu0 0.0
  %289 = vmatpush1.msra.mxu0 0.0
  %290 = vmatprep.subr.mxu0 0.0
  %291 = vmatpush1.msra.mxu0 0.0
  %292 = vmatprep.subr.mxu0 0.0
  %293 = vmatpush1.msra.mxu0 0.0
  %294 = vmatprep.subr.mxu0 0.0
  %295 = vmatpush1.msra.mxu0 0.0
  %296 = vmatprep.subr.mxu0 0.0
  %297 = vmatpush1.msra.mxu0 0.0
  %298 = vmatprep.subr.mxu0 0.0
  %299 = vmatpush1.msra.mxu0 0.0
  %300 = vmatprep.subr.mxu0 0.0
  %301 = vmatpush1.msra.mxu0 0.0
  %302 = vmatprep.subr.mxu0 0.0
  %303 = vmatpush1.msra.mxu0 0.0
  %304 = vmatprep.subr.mxu0 0.0
  %305 = vmatpush1.msra.mxu0 0.0
  %306 = vmatprep.subr.mxu0 0.0
  %307 = vmatpush1.msra.mxu0 0.0
  %308 = vmatprep.subr.mxu0 0.0
  %309 = vmatpush1.msra.mxu0 0.0
  %310 = vmatprep.subr.mxu0 0.0
  %311 = vmatpush1.msra.mxu0 0.0
  %312 = vmatprep.subr.mxu0 0.0
  %313 = vmatpush1.msra.mxu0 0.0
  %314 = vmatprep.subr.mxu0 0.0
  %315 = vmatpush1.msra.mxu0 0.0
  %316 = vmatprep.subr.mxu0 0.0
  %317 = vmatpush1.msra.mxu0 0.0
  %318 = vmatprep.subr.mxu0 0.0
  %319 = vmatpush1.msra.mxu0 0.0
  %320 = vmatprep.subr.mxu0 0.0
  %321 = vmatpush1.msra.mxu0 0.0
  %322 = vmatprep.subr.mxu0 0.0
  %323 = vmatpush1.msra.mxu0 0.0
  %324 = vmatprep.subr.mxu0 0.0
  %325 = vmatpush1.msra.mxu0 0.0
  %326 = vmatprep.subr.mxu0 0.0
  %327 = vmatpush1.msra.mxu0 0.0
  %328 = vmatprep.subr.mxu0 0.0
  %329 = vmatpush1.msra.mxu0 0.0
  %330 = vmatprep.subr.mxu0 0.0
  %331 = vmatpush1.msra.mxu0 0.0
  %332 = vmatprep.subr.mxu0 0.0
  %333 = vmatpush1.msra.mxu0 0.0
  %334 = vmatprep.subr.mxu0 0.0
  %335 = vmatpush1.msra.mxu0 0.0
  %336 = vmatprep.subr.mxu0 0.0
  %337 = vmatpush1.msra.mxu0 0.0
  %338 = vmatprep.subr.mxu0 0.0
  %339 = vmatpush1.msra.mxu0 0.0
  %340 = vmatprep.subr.mxu0 0.0
  %341 = vmatpush1.msra.mxu0 0.0
  %342 = vmatprep.subr.mxu0 0.0
  %343 = vmatpush1.msra.mxu0 0.0
  %344 = vmatprep.subr.mxu0 0.0
  %345 = vmatpush1.msra.mxu0 0.0
  %346 = vmatprep.subr.mxu0 0.0
  %347 = vmatpush1.msra.mxu0 0.0
  %348 = vmatprep.mubr.f32.mxu0 0.0
  %349 = vmatmul.mubr.f32.gmra.mrb[0].mxu0 %v89
  %v350 = vpop.f32.mrb[0].mxu0
  %v351 = vadd.f32 %v85, %v350
  %v352 = vpop.f32.mrb[0].mxu0
  %353 = vmatprep.mubr.f32.mxu0 0.0
  %354 = vmatmul.mubr.f32.gmra.mrb[0].mxu0 %v92
  %v355 = vpop.f32.mrb[0].mxu0
  %v356 = vadd.f32 %v85, %v355
  %v357 = vpop.f32.mrb[0].mxu0
  %358 = vmatprep.mubr.f32.mxu0 0.0
  %359 = vmatmul.mubr.f32.gmra.mrb[0].mxu0 %v95
  %v360 = vpop.f32.mrb[0].mxu0
  %v361 = vadd.f32 %v85, %v360
  %v362 = vpop.f32.mrb[0].mxu0
  %363 = vmatprep.mubr.f32.mxu0 0.0
  %364 = vmatmul.mubr.f32.gmra.mrb[0].mxu0 %v98
  %v365 = vpop.f32.mrb[0].mxu0
  %v366 = vadd.f32 %v85, %v365
  %v367 = vpop.f32.mrb[0].mxu0
  %368 = vmatprep.mubr.f32.mxu0 0.0
  %369 = vmatmul.mubr.f32.gmra.mrb[0].mxu0 %v101
  %v370 = vpop.f32.mrb[0].mxu0
  %v371 = vadd.f32 %v85, %v370
  %v372 = vpop.f32.mrb[0].mxu0
  %373 = vmatprep.mubr.f32.mxu0 0.0
  %374 = vmatmul.mubr.f32.gmra.mrb[0].mxu0 %v104
  %v375 = vpop.f32.mrb[0].mxu0
  %v376 = vadd.f32 %v85, %v375
  %v377 = vpop.f32.mrb[0].mxu0
  %378 = vmatprep.mubr.f32.mxu0 0.0
  %379 = vmatmul.mubr.f32.gmra.mrb[0].mxu0 %v107
  %v380 = vpop.f32.mrb[0].mxu0
  %v381 = vadd.f32 %v85, %v380
  %v382 = vpop.f32.mrb[0].mxu0
  %383 = vmatprep.mubr.f32.mxu0 0.0
  %384 = vmatmul.mubr.f32.gmra.mrb[0].mxu0 %v110
  %v385 = vpop.f32.mrb[0].mxu0
  %v386 = vadd.f32 %v85, %v385
  %v387 = vpop.f32.mrb[0].mxu0
  %388 = vmatprep.mubr.f32.mxu0 0.0
  %389 = vmatmul.mubr.f32.gmra.mrb[0].mxu0 %v113
  %v390 = vpop.f32.mrb[0].mxu0
  %v391 = vadd.f32 %v85, %v390
  %v392 = vpop.f32.mrb[0].mxu0
  %393 = vmatprep.mubr.f32.mxu0 0.0
  %394 = vmatmul.mubr.f32.gmra.mrb[0].mxu0 %v116
  %v395 = vpop.f32.mrb[0].mxu0
  %v396 = vadd.f32 %v85, %v395
  %v397 = vpop.f32.mrb[0].mxu0
  %398 = vmatprep.mubr.f32.mxu0 0.0
  %399 = vmatmul.mubr.f32.gmra.mrb[0].mxu0 %v119
  %v400 = vpop.f32.mrb[0].mxu0
  %v401 = vadd.f32 %v85, %v400
  %v402 = vpop.f32.mrb[0].mxu0
  %403 = vmatprep.mubr.f32.mxu0 0.0
  %404 = vmatmul.mubr.f32.gmra.mrb[0].mxu0 %v122
  %v405 = vpop.f32.mrb[0].mxu0
  %v406 = vadd.f32 %v85, %v405
  %v407 = vpop.f32.mrb[0].mxu0
  %408 = vmatprep.mubr.f32.mxu0 0.0
  %409 = vmatmul.mubr.f32.gmra.mrb[0].mxu0 %v125
  %v410 = vpop.f32.mrb[0].mxu0
  %v411 = vadd.f32 %v85, %v410
  %v412 = vpop.f32.mrb[0].mxu0
  %413 = vmatprep.mubr.f32.mxu0 0.0
  %414 = vmatmul.mubr.f32.gmra.mrb[0].mxu0 %v128
  %v415 = vpop.f32.mrb[0].mxu0
  %v416 = vadd.f32 %v85, %v415
  %v417 = vpop.f32.mrb[0].mxu0
  %418 = vmatprep.mubr.f32.mxu0 0.0
  %419 = vmatmul.mubr.f32.gmra.mrb[0].mxu0 %v131
  %v420 = vpop.f32.mrb[0].mxu0
  %v421 = vadd.f32 %v85, %v420
  %v422 = vpop.f32.mrb[0].mxu0
  %423 = vmatprep.mubr.f32.mxu0 0.0
  %424 = vmatmul.mubr.f32.gmra.mrb[0].mxu0 %v134
  %v425 = vpop.f32.mrb[0].mxu0
  %v426 = vadd.f32 %v85, %v425
  %v427 = vpop.f32.mrb[0].mxu0
  %428 = vmatprep.mubr.f32.mxu0 0.0
  %429 = vmatmul.mubr.f32.gmra.mrb[0].mxu0 %v137
  %v430 = vpop.f32.mrb[0].mxu0
  %v431 = vadd.f32 %v85, %v430
  %v432 = vpop.f32.mrb[0].mxu0
  %433 = vmatprep.mubr.f32.mxu0 0.0
  %434 = vmatmul.mubr.f32.gmra.mrb[0].mxu0 %v140
  %v435 = vpop.f32.mrb[0].mxu0
  %v436 = vadd.f32 %v85, %v435
  %v437 = vpop.f32.mrb[0].mxu0
  %438 = vmatprep.mubr.f32.mxu0 0.0
  %439 = vmatmul.mubr.f32.gmra.mrb[0].mxu0 %v143
  %v440 = vpop.f32.mrb[0].mxu0
  %v441 = vadd.f32 %v85, %v440
  %v442 = vpop.f32.mrb[0].mxu0
  %443 = vmatprep.mubr.f32.mxu0 0.0
  %444 = vmatmul.mubr.f32.gmra.mrb[0].mxu0 %v146
  %v445 = vpop.f32.mrb[0].mxu0
  %v446 = vadd.f32 %v85, %v445
  %v447 = vpop.f32.mrb[0].mxu0
  %448 = vmatprep.mubr.f32.mxu0 0.0
  %449 = vmatmul.mubr.f32.gmra.mrb[0].mxu0 %v149
  %v450 = vpop.f32.mrb[0].mxu0
  %v451 = vadd.f32 %v85, %v450
  %v452 = vpop.f32.mrb[0].mxu0
  %453 = vmatprep.mubr.f32.mxu0 0.0
  %454 = vmatmul.mubr.f32.gmra.mrb[0].mxu0 %v152
  %v455 = vpop.f32.mrb[0].mxu0
  %v456 = vadd.f32 %v85, %v455
  %v457 = vpop.f32.mrb[0].mxu0
  %458 = vmatprep.mubr.f32.mxu0 0.0
  %459 = vmatmul.mubr.f32.gmra.mrb[0].mxu0 %v155
  %v460 = vpop.f32.mrb[0].mxu0
  %v461 = vadd.f32 %v85, %v460
  %v462 = vpop.f32.mrb[0].mxu0
  %463 = vmatprep.mubr.f32.mxu0 0.0
  %464 = vmatmul.mubr.f32.gmra.mrb[0].mxu0 %v158
  %v465 = vpop.f32.mrb[0].mxu0
  %v466 = vadd.f32 %v85, %v465
  %v467 = vpop.f32.mrb[0].mxu0
  %468 = vmatprep.mubr.f32.mxu0 0.0
  %469 = vmatmul.mubr.f32.gmra.mrb[0].mxu0 %v161
  %v470 = vpop.f32.mrb[0].mxu0
  %v471 = vadd.f32 %v85, %v470
  %v472 = vpop.f32.mrb[0].mxu0
  %473 = vmatprep.mubr.f32.mxu0 0.0
  %474 = vmatmul.mubr.f32.gmra.mrb[0].mxu0 %v164
  %v475 = vpop.f32.mrb[0].mxu0
  %v476 = vadd.f32 %v85, %v475
  %v477 = vpop.f32.mrb[0].mxu0
  %478 = vmatprep.mubr.f32.mxu0 0.0
  %479 = vmatmul.mubr.f32.gmra.mrb[0].mxu0 %v167
  %v480 = vpop.f32.mrb[0].mxu0
  %v481 = vadd.f32 %v85, %v480
  %v482 = vpop.f32.mrb[0].mxu0
  %483 = vmatprep.mubr.f32.mxu0 0.0
  %484 = vmatmul.mubr.f32.gmra.mrb[0].mxu0 %v170
  %v485 = vpop.f32.mrb[0].mxu0
  %v486 = vadd.f32 %v85, %v485
  %v487 = vpop.f32.mrb[0].mxu0
  %488 = vmatprep.mubr.f32.mxu0 0.0
  %489 = vmatmul.mubr.f32.gmra.mrb[0].mxu0 %v173
  %v490 = vpop.f32.mrb[0].mxu0
  %v491 = vadd.f32 %v85, %v490
  %v492 = vpop.f32.mrb[0].mxu0
  %493 = vmatprep.mubr.f32.mxu0 0.0
  %494 = vmatmul.mubr.f32.gmra.mrb[0].mxu0 %v176
  %v495 = vpop.f32.mrb[0].mxu0
  %v496 = vadd.f32 %v85, %v495
  %v497 = vpop.f32.mrb[0].mxu0
  %498 = vmatprep.mubr.f32.mxu0 0.0
  %499 = vmatmul.mubr.f32.gmra.mrb[0].mxu0 %v179
  %v500 = vpop.f32.mrb[0].mxu0
  %v501 = vadd.f32 %v85, %v500
  %v502 = vpop.f32.mrb[0].mxu0
  %503 = vmatprep.mubr.f32.mxu0 0.0
  %504 = vmatmul.mubr.f32.gmra.mrb[0].mxu0 %v182
  %v505 = vpop.f32.mrb[0].mxu0
  %v506 = vadd.f32 %v85, %v505
  %v507 = vpop.f32.mrb[0].mxu0
  %508 = vmatprep.mubr.f32.mxu0 0.0
  %509 = vmatmul.mubr.f32.gmra.mrb[0].mxu0 %v185
  %v510 = vpop.f32.mrb[0].mxu0
  %v511 = vadd.f32 %v85, %v510
  %v512 = vpop.f32.mrb[0].mxu0
  %513 = vmatprep.mubr.f32.mxu0 0.0
  %514 = vmatmul.mubr.f32.gmra.mrb[0].mxu0 %v188
  %v515 = vpop.f32.mrb[0].mxu0
  %v516 = vadd.f32 %v85, %v515
  %v517 = vpop.f32.mrb[0].mxu0
  %518 = vmatprep.mubr.f32.mxu0 0.0
  %519 = vmatmul.mubr.f32.gmra.mrb[0].mxu0 %v191
  %v520 = vpop.f32.mrb[0].mxu0
  %v521 = vadd.f32 %v85, %v520
  %v522 = vpop.f32.mrb[0].mxu0
  %523 = vmatprep.mubr.f32.mxu0 0.0
  %524 = vmatmul.mubr.f32.gmra.mrb[0].mxu0 %v194
  %v525 = vpop.f32.mrb[0].mxu0
  %v526 = vadd.f32 %v85, %v525
  %v527 = vpop.f32.mrb[0].mxu0
  %528 = vmatprep.mubr.f32.mxu0 0.0
  %529 = vmatmul.mubr.f32.gmra.mrb[0].mxu0 %v197
  %v530 = vpop.f32.mrb[0].mxu0
  %v531 = vadd.f32 %v85, %v530
  %v532 = vpop.f32.mrb[0].mxu0
  %533 = vmatprep.mubr.f32.mxu0 0.0
  %534 = vmatmul.mubr.f32.gmra.mrb[0].mxu0 %v200
  %v535 = vpop.f32.mrb[0].mxu0
  %v536 = vadd.f32 %v85, %v535
  %v537 = vpop.f32.mrb[0].mxu0
  %538 = vmatprep.mubr.f32.mxu0 0.0
  %539 = vmatmul.mubr.f32.gmra.mrb[0].mxu0 %v203
  %v540 = vpop.f32.mrb[0].mxu0
  %v541 = vadd.f32 %v85, %v540
  %v542 = vpop.f32.mrb[0].mxu0
  %543 = vmatprep.mubr.f32.mxu0 0.0
  %544 = vmatmul.mubr.f32.gmra.mrb[0].mxu0 %v206
  %v545 = vpop.f32.mrb[0].mxu0
  %v546 = vadd.f32 %v85, %v545
  %v547 = vpop.f32.mrb[0].mxu0
  %548 = vmatprep.mubr.f32.mxu0 0.0
  %549 = vmatmul.mubr.f32.gmra.mrb[0].mxu0 %v209
  %v550 = vpop.f32.mrb[0].mxu0
  %v551 = vadd.f32 %v85, %v550
  %v552 = vpop.f32.mrb[0].mxu0
  %553 = vmatprep.mubr.f32.mxu0 0.0
  %554 = vmatmul.mubr.f32.gmra.mrb[0].mxu0 %v212
  %v555 = vpop.f32.mrb[0].mxu0
  %v556 = vadd.f32 %v85, %v555
  %v557 = vpop.f32.mrb[0].mxu0
  %558 = vmatprep.mubr.f32.mxu0 0.0
  %559 = vmatmul.mubr.f32.gmra.mrb[0].mxu0 %v215
  %v560 = vpop.f32.mrb[0].mxu0
  %v561 = vadd.f32 %v85, %v560
  %v562 = vpop.f32.mrb[0].mxu0
  %563 = vmatprep.mubr.f32.mxu0 0.0
  %564 = vmatmul.mubr.f32.gmra.mrb[0].mxu0 %v218
  %v565 = vpop.f32.mrb[0].mxu0
  %v566 = vadd.f32 %v85, %v565
  %v567 = vpop.f32.mrb[0].mxu0
  %568 = vmatprep.mubr.f32.mxu0 0.0
  %569 = vmatmul.mubr.f32.gmra.mrb[0].mxu0 %v221
  %v570 = vpop.f32.mrb[0].mxu0
  %v571 = vadd.f32 %v85, %v570
  %v572 = vpop.f32.mrb[0].mxu0
  %573 = vmatprep.mubr.f32.mxu0 0.0
  %574 = vmatmul.mubr.f32.gmra.mrb[0].mxu0 %v224
  %v575 = vpop.f32.mrb[0].mxu0
  %v576 = vadd.f32 %v85, %v575
  %v577 = vpop.f32.mrb[0].mxu0
  %578 = vmatprep.mubr.f32.mxu0 0.0
  %579 = vmatmul.mubr.f32.gmra.mrb[0].mxu0 %v227
  %v580 = vpop.f32.mrb[0].mxu0
  %v581 = vadd.f32 %v85, %v580
  %v582 = vpop.f32.mrb[0].mxu0
  %583 = vmatprep.mubr.f32.mxu0 0.0
  %584 = vmatmul.mubr.f32.gmra.mrb[0].mxu0 %v230
  %v585 = vpop.f32.mrb[0].mxu0
  %v586 = vadd.f32 %v85, %v585
  %v587 = vpop.f32.mrb[0].mxu0
  %588 = vmatprep.mubr.f32.mxu0 0.0
  %589 = vmatmul.mubr.f32.gmra.mrb[0].mxu0 %v233
  %v590 = vpop.f32.mrb[0].mxu0
  %v591 = vadd.f32 %v85, %v590
  %v592 = vpop.f32.mrb[0].mxu0
  %593 = vmatprep.mubr.f32.mxu0 0.0
  %594 = vmatmul.mubr.f32.gmra.mrb[0].mxu0 %v236
  %v595 = vpop.f32.mrb[0].mxu0
  %v596 = vadd.f32 %v85, %v595
  %v597 = vpop.f32.mrb[0].mxu0
  %598 = vmatprep.mubr.f32.mxu0 0.0
  %599 = vmatmul.mubr.f32.gmra.mrb[0].mxu0 %v239
  %v600 = vpop.f32.mrb[0].mxu0
  %v601 = vadd.f32 %v85, %v600
  %v602 = vpop.f32.mrb[0].mxu0
  %603 = vmatprep.mubr.f32.mxu0 0.0
  %604 = vmatmul.mubr.f32.gmra.mrb[0].mxu0 %v242
  %v605 = vpop.f32.mrb[0].mxu0
  %v606 = vadd.f32 %v85, %v605
  %v607 = vpop.f32.mrb[0].mxu0
  %608 = vmatprep.mubr.f32.mxu0 0.0
  %609 = vmatmul.mubr.f32.gmra.mrb[0].mxu0 %v245
  %v610 = vpop.f32.mrb[0].mxu0
  %v611 = vadd.f32 %v85, %v610
  %v612 = vpop.f32.mrb[0].mxu0
  %613 = vmatprep.mubr.f32.mxu0 0.0
  %614 = vmatmul.mubr.f32.gmra.mrb[0].mxu0 %v248
  %v615 = vpop.f32.mrb[0].mxu0
  %v616 = vadd.f32 %v85, %v615
  %v617 = vpop.f32.mrb[0].mxu0
  %618 = vmatprep.mubr.f32.mxu0 0.0
  %619 = vmatmul.mubr.f32.gmra.mrb[0].mxu0 %v251
  %v620 = vpop.f32.mrb[0].mxu0
  %v621 = vadd.f32 %v85, %v620
  %v622 = vpop.f32.mrb[0].mxu0
  %623 = vmatprep.mubr.f32.mxu0 0.0
  %624 = vmatmul.mubr.f32.gmra.mrb[0].mxu0 %v254
  %v625 = vpop.f32.mrb[0].mxu0
  %v626 = vadd.f32 %v85, %v625
  %v627 = vpop.f32.mrb[0].mxu0
  %628 = vmatprep.mubr.f32.mxu0 0.0
  %629 = vmatmul.mubr.f32.gmra.mrb[0].mxu0 %v257
  %v630 = vpop.f32.mrb[0].mxu0
  %v631 = vadd.f32 %v85, %v630
  %v632 = vpop.f32.mrb[0].mxu0
  %633 = vmatprep.mubr.f32.mxu0 0.0
  %634 = vmatmul.mubr.f32.gmra.mrb[0].mxu0 %v260
  %v635 = vpop.f32.mrb[0].mxu0
  %v636 = vadd.f32 %v85, %v635
  %v637 = vpop.f32.mrb[0].mxu0
  %638 = vmatprep.mubr.f32.mxu0 0.0
  %639 = vmatmul.mubr.f32.gmra.mrb[0].mxu0 %v263
  %v640 = vpop.f32.mrb[0].mxu0
  %v641 = vadd.f32 %v85, %v640
  %v642 = vpop.f32.mrb[0].mxu0
  %643 = vmatprep.mubr.f32.mxu0 0.0
  %644 = vmatmul.mubr.f32.gmra.mrb[0].mxu0 %v266
  %v645 = vpop.f32.mrb[0].mxu0
  %v646 = vadd.f32 %v85, %v645
  %v647 = vpop.f32.mrb[0].mxu0
  %648 = vmatprep.mubr.f32.mxu0 0.0
  %649 = vmatmul.mubr.f32.gmra.mrb[0].mxu0 %v269
  %v650 = vpop.f32.mrb[0].mxu0
  %v651 = vadd.f32 %v85, %v650
  %v652 = vpop.f32.mrb[0].mxu0
  %653 = vmatprep.mubr.f32.mxu0 0.0
  %654 = vmatmul.mubr.f32.gmra.mrb[0].mxu0 %v272
  %v655 = vpop.f32.mrb[0].mxu0
  %v656 = vadd.f32 %v85, %v655
  %v657 = vpop.f32.mrb[0].mxu0
  %658 = vmatprep.mubr.f32.mxu0 0.0
  %659 = vmatmul.mubr.f32.gmra.mrb[0].mxu0 %v275
  %v660 = vpop.f32.mrb[0].mxu0
  %v661 = vadd.f32 %v85, %v660
  %v662 = vpop.f32.mrb[0].mxu0
  %663 = vmatprep.mubr.f32.mxu0 0.0
  %664 = vmatmul.mubr.f32.gmra.mrb[0].mxu0 %v278
  %v665 = vpop.f32.mrb[0].mxu0
  %v666 = vadd.f32 %v85, %v665
  %v667 = vpop.f32.mrb[0].mxu0
  %668 = vdwg.mxu0
  %v669 = vmax.f32 %v351, 0.0
  %v670 = vmax.f32 %v356, 0.0
  %v671 = vmax.f32 %v361, 0.0
  %v672 = vmax.f32 %v366, 0.0
  %v673 = vmax.f32 %v371, 0.0
  %v674 = vmax.f32 %v376, 0.0
  %v675 = vmax.f32 %v381, 0.0
  %v676 = vmax.f32 %v386, 0.0
  %v677 = vmax.f32 %v391, 0.0
  %v678 = vmax.f32 %v396, 0.0
  %v679 = vmax.f32 %v401, 0.0
  %v680 = vmax.f32 %v406, 0.0
  %v681 = vmax.f32 %v411, 0.0
  %v682 = vmax.f32 %v416, 0.0
  %v683 = vmax.f32 %v421, 0.0
  %v684 = vmax.f32 %v426, 0.0
  %v685 = vmax.f32 %v431, 0.0
  %v686 = vmax.f32 %v436, 0.0
  %v687 = vmax.f32 %v441, 0.0
  %v688 = vmax.f32 %v446, 0.0
  %v689 = vmax.f32 %v451, 0.0
  %v690 = vmax.f32 %v456, 0.0
  %v691 = vmax.f32 %v461, 0.0
  %v692 = vmax.f32 %v466, 0.0
  %v693 = vmax.f32 %v471, 0.0
  %v694 = vmax.f32 %v476, 0.0
  %v695 = vmax.f32 %v481, 0.0
  %v696 = vmax.f32 %v486, 0.0
  %v697 = vmax.f32 %v491, 0.0
  %v698 = vmax.f32 %v496, 0.0
  %v699 = vmax.f32 %v501, 0.0
  %v700 = vmax.f32 %v506, 0.0
  %v701 = vmax.f32 %v511, 0.0
  %v702 = vmax.f32 %v516, 0.0
  %v703 = vmax.f32 %v521, 0.0
  %v704 = vmax.f32 %v526, 0.0
  %v705 = vmax.f32 %v531, 0.0
  %v706 = vmax.f32 %v536, 0.0
  %v707 = vmax.f32 %v541, 0.0
  %v708 = vmax.f32 %v546, 0.0
  %v709 = vmax.f32 %v551, 0.0
  %v710 = vmax.f32 %v556, 0.0
  %v711 = vmax.f32 %v561, 0.0
  %v712 = vmax.f32 %v566, 0.0
  %v713 = vmax.f32 %v571, 0.0
  %v714 = vmax.f32 %v576, 0.0
  %v715 = vmax.f32 %v581, 0.0
  %v716 = vmax.f32 %v586, 0.0
  %v717 = vmax.f32 %v591, 0.0
  %v718 = vmax.f32 %v596, 0.0
  %v719 = vmax.f32 %v601, 0.0
  %v720 = vmax.f32 %v606, 0.0
  %v721 = vmax.f32 %v611, 0.0
  %v722 = vmax.f32 %v616, 0.0
  %v723 = vmax.f32 %v621, 0.0
  %v724 = vmax.f32 %v626, 0.0
  %v725 = vmax.f32 %v631, 0.0
  %v726 = vmax.f32 %v636, 0.0
  %v727 = vmax.f32 %v641, 0.0
  %v728 = vmax.f32 %v646, 0.0
  %v729 = vmax.f32 %v651, 0.0
  %v730 = vmax.f32 %v656, 0.0
  %v731 = vmax.f32 %v661, 0.0
  %v732 = vmax.f32 %v666, 0.0
  %733 = vst [vmem:[%s3] sm:$0xff] %v669
  %734 = vst [vmem:[%s3 + $0x8] sm:$0xff] %v670
  %735 = vst [vmem:[%s3 + $0x10] sm:$0xff] %v671
  %736 = vst [vmem:[%s3 + $0x18] sm:$0xff] %v672
  %737 = vst [vmem:[%s3 + $0x20] sm:$0xff] %v673
  %738 = vst [vmem:[%s3 + $0x28] sm:$0xff] %v674
  %739 = vst [vmem:[%s3 + $0x30] sm:$0xff] %v675
  %740 = vst [vmem:[%s3 + $0x38] sm:$0xff] %v676
  %741 = vst [vmem:[%s3 + $0x40] sm:$0xff] %v677
  %742 = vst [vmem:[%s3 + $0x48] sm:$0xff] %v678
  %743 = vst [vmem:[%s3 + $0x50] sm:$0xff] %v679
  %744 = vst [vmem:[%s3 + $0x58] sm:$0xff] %v680
  %745 = vst [vmem:[%s3 + $0x60] sm:$0xff] %v681
  %746 = vst [vmem:[%s3 + $0x68] sm:$0xff] %v682
  %747 = vst [vmem:[%s3 + $0x70] sm:$0xff] %v683
  %748 = vst [vmem:[%s3 + $0x78] sm:$0xff] %v684
  %749 = vst [vmem:[%s3 + $0x80] sm:$0xff] %v685
  %750 = vst [vmem:[%s3 + $0x88] sm:$0xff] %v686
  %751 = vst [vmem:[%s3 + $0x90] sm:$0xff] %v687
  %752 = vst [vmem:[%s3 + $0x98] sm:$0xff] %v688
  %753 = vst [vmem:[%s3 + $0xa0] sm:$0xff] %v689
  %754 = vst [vmem:[%s3 + $0xa8] sm:$0xff] %v690
  %755 = vst [vmem:[%s3 + $0xb0] sm:$0xff] %v691
  %756 = vst [vmem:[%s3 + $0xb8] sm:$0xff] %v692
  %757 = vst [vmem:[%s3 + $0xc0] sm:$0xff] %v693
  %758 = vst [vmem:[%s3 + $0xc8] sm:$0xff] %v694
  %759 = vst [vmem:[%s3 + $0xd0] sm:$0xff] %v695
  %760 = vst [vmem:[%s3 + $0xd8] sm:$0xff] %v696
  %761 = vst [vmem:[%s3 + $0xe0] sm:$0xff] %v697
  %762 = vst [vmem:[%s3 + $0xe8] sm:$0xff] %v698
  %763 = vst [vmem:[%s3 + $0xf0] sm:$0xff] %v699
  %764 = vst [vmem:[%s3 + $0xf8] sm:$0xff] %v700
  %765 = vst [vmem:[%s3 + $0x100] sm:$0xff] %v701
  %766 = vst [vmem:[%s3 + $0x108] sm:$0xff] %v702
  %767 = vst [vmem:[%s3 + $0x110] sm:$0xff] %v703
  %768 = vst [vmem:[%s3 + $0x118] sm:$0xff] %v704
  %769 = vst [vmem:[%s3 + $0x120] sm:$0xff] %v705
  %770 = vst [vmem:[%s3 + $0x128] sm:$0xff] %v706
  %771 = vst [vmem:[%s3 + $0x130] sm:$0xff] %v707
  %772 = vst [vmem:[%s3 + $0x138] sm:$0xff] %v708
  %773 = vst [vmem:[%s3 + $0x140] sm:$0xff] %v709
  %774 = vst [vmem:[%s3 + $0x148] sm:$0xff] %v710
  %775 = vst [vmem:[%s3 + $0x150] sm:$0xff] %v711
  %776 = vst [vmem:[%s3 + $0x158] sm:$0xff] %v712
  %777 = vst [vmem:[%s3 + $0x160] sm:$0xff] %v713
  %778 = vst [vmem:[%s3 + $0x168] sm:$0xff] %v714
  %779 = vst [vmem:[%s3 + $0x170] sm:$0xff] %v715
  %780 = vst [vmem:[%s3 + $0x178] sm:$0xff] %v716
  %781 = vst [vmem:[%s3 + $0x180] sm:$0xff] %v717
  %782 = vst [vmem:[%s3 + $0x188] sm:$0xff] %v718
  %783 = vst [vmem:[%s3 + $0x190] sm:$0xff] %v719
  %784 = vst [vmem:[%s3 + $0x198] sm:$0xff] %v720
  %785 = vst [vmem:[%s3 + $0x1a0] sm:$0xff] %v721
  %786 = vst [vmem:[%s3 + $0x1a8] sm:$0xff] %v722
  %787 = vst [vmem:[%s3 + $0x1b0] sm:$0xff] %v723
  %788 = vst [vmem:[%s3 + $0x1b8] sm:$0xff] %v724
  %789 = vst [vmem:[%s3 + $0x1c0] sm:$0xff] %v725
  %790 = vst [vmem:[%s3 + $0x1c8] sm:$0xff] %v726
  %791 = vst [vmem:[%s3 + $0x1d0] sm:$0xff] %v727
  %792 = vst [vmem:[%s3 + $0x1d8] sm:$0xff] %v728
  %793 = vst [vmem:[%s3 + $0x1e0] sm:$0xff] %v729
  %794 = vst [vmem:[%s3 + $0x1e8] sm:$0xff] %v730
  %795 = vst [vmem:[%s3 + $0x1f0] sm:$0xff] %v731
  %796 = vst [vmem:[%s3 + $0x1f8] sm:$0xff] %v732
  // Predicated region
  $region14: #{_lambda_.5} parent=0 // pred_check
    _
  $region15: #{_lambda_.5} parent=0 // pred_check_branch
    %798 = sbr.rel (0) target = $region17
  $region16: #{_lambda_.5} parent=0 // pred_region
    _
  $region17: #{_lambda_.5} parent=0 // pred_fallthru
    _
  // Predicated region
  $region18: #{_lambda_.5} parent=0 // pred_check
    _
  $region19: #{_lambda_.5} parent=0 // pred_check_branch
    %800 = sbr.rel (0) target = $region21
  $region20: #{_lambda_.5} parent=0 // pred_region
    _
  $region21: #{_lambda_.5} parent=0 // pred_fallthru
    _

// kernel: _lambda_.6
$region0: #{_lambda_.6}
  #allocation0 [shape = 'u32[]', space=smem, size = 0x4, offset = 0x4, fixed_abs, tag = 'smem constant byte address 0x4 - core index']
  #allocation1 [shape = 'u32[144,128]{1,0:T(1,128)}', space=vmem, size = 0x12000, scoped, tag = 'internal scratch']
  %s0 = inlined_call_operand.vmem [shape: f32[128,144], index: 0, kind: input, shape index: {}]
  %s1 = inlined_call_operand.vmem [shape: f32[144,128], index: 1, kind: input, shape index: {}]
  %s2 = inlined_call_operand.vmem [shape: f32[1,128], index: 2, kind: input, shape index: {}]
  %s3 = inlined_call_operand.vmem [shape: f32[128,128], index: 3, kind: output, shape index: {}]
  %s4 = sld [smem:[#allocation0]]
  $region22: #{_lambda_.6} parent=0
    _
  %s6 = ssub.s32 1, %s4
  %s7 = scalar_select 0, %s6, %s4
  // Predicated region
  $region2: #{_lambda_.6} parent=0 // pred_check
    _
  $region3: #{_lambda_.6} parent=0 // pred_check_branch
    %9 = sbr.rel (0) target = $region5
  $region4: #{_lambda_.6} parent=0 // pred_region
    _
  $region5: #{_lambda_.6} parent=0 // pred_fallthru
    _
  // Predicated region
  $region6: #{_lambda_.6} parent=0 // pred_check
    _
  $region7: #{_lambda_.6} parent=0 // pred_check_branch
    %11 = sbr.rel (0) target = $region9
  $region8: #{_lambda_.6} parent=0 // pred_region
    _
  $region9: #{_lambda_.6} parent=0 // pred_fallthru
    _
  // Predicated region
  $region10: #{_lambda_.6} parent=0 // pred_check
    _
  $region11: #{_lambda_.6} parent=0 // pred_check_branch
    %13 = sbr.rel (0) target = $region13
  $region12: #{_lambda_.6} parent=0 // pred_region
    _
  $region13: #{_lambda_.6} parent=0 // pred_fallthru
    _
  %v14 = vld [vmem:[%s0] sm:$0xff]
  %v15 = vld [vmem:[%s0 + $0x8] sm:$0xff]
  %v16 = vld [vmem:[%s0 + $0x10] sm:$0xff]
  %v17 = vld [vmem:[%s0 + $0x18] sm:$0xff]
  %v18 = vld [vmem:[%s0 + $0x20] sm:$0xff]
  %v19 = vld [vmem:[%s0 + $0x28] sm:$0xff]
  %v20 = vld [vmem:[%s0 + $0x30] sm:$0xff]
  %v21 = vld [vmem:[%s0 + $0x38] sm:$0xff]
  %v22 = vld [vmem:[%s0 + $0x40] sm:$0xff]
  %v23 = vld [vmem:[%s0 + $0x48] sm:$0xff]
  %v24 = vld [vmem:[%s0 + $0x50] sm:$0xff]
  %v25 = vld [vmem:[%s0 + $0x58] sm:$0xff]
  %v26 = vld [vmem:[%s0 + $0x60] sm:$0xff]
  %v27 = vld [vmem:[%s0 + $0x68] sm:$0xff]
  %v28 = vld [vmem:[%s0 + $0x70] sm:$0xff]
  %v29 = vld [vmem:[%s0 + $0x78] sm:$0xff]
  %v30 = vld [vmem:[%s0 + $0x80] sm:$0xff]
  %v31 = vld [vmem:[%s0 + $0x88] sm:$0xff]
  %v32 = vld [vmem:[%s0 + $0x90] sm:$0xff]
  %v33 = vld [vmem:[%s0 + $0x98] sm:$0xff]
  %v34 = vld [vmem:[%s0 + $0xa0] sm:$0xff]
  %v35 = vld [vmem:[%s0 + $0xa8] sm:$0xff]
  %v36 = vld [vmem:[%s0 + $0xb0] sm:$0xff]
  %v37 = vld [vmem:[%s0 + $0xb8] sm:$0xff]
  %v38 = vld [vmem:[%s0 + $0xc0] sm:$0xff]
  %v39 = vld [vmem:[%s0 + $0xc8] sm:$0xff]
  %v40 = vld [vmem:[%s0 + $0xd0] sm:$0xff]
  %v41 = vld [vmem:[%s0 + $0xd8] sm:$0xff]
  %v42 = vld [vmem:[%s0 + $0xe0] sm:$0xff]
  %v43 = vld [vmem:[%s0 + $0xe8] sm:$0xff]
  %v44 = vld [vmem:[%s0 + $0xf0] sm:$0xff]
  %v45 = vld [vmem:[%s0 + $0xf8] sm:$0xff]
  %v46 = vld [vmem:[%s1] sm:$0xff]
  %v47 = vld [vmem:[%s1 + $0x8] sm:$0xff]
  %v48 = vld [vmem:[%s1 + $0x10] sm:$0xff]
  %v49 = vld [vmem:[%s1 + $0x18] sm:$0xff]
  %v50 = vld [vmem:[%s1 + $0x20] sm:$0xff]
  %v51 = vld [vmem:[%s1 + $0x28] sm:$0xff]
  %v52 = vld [vmem:[%s1 + $0x30] sm:$0xff]
  %v53 = vld [vmem:[%s1 + $0x38] sm:$0xff]
  %v54 = vld [vmem:[%s1 + $0x40] sm:$0xff]
  %v55 = vld [vmem:[%s1 + $0x48] sm:$0xff]
  %v56 = vld [vmem:[%s1 + $0x50] sm:$0xff]
  %v57 = vld [vmem:[%s1 + $0x58] sm:$0xff]
  %v58 = vld [vmem:[%s1 + $0x60] sm:$0xff]
  %v59 = vld [vmem:[%s1 + $0x68] sm:$0xff]
  %v60 = vld [vmem:[%s1 + $0x70] sm:$0xff]
  %v61 = vld [vmem:[%s1 + $0x78] sm:$0xff]
  %v62 = vld [vmem:[%s1 + $0x80] sm:$0xff]
  %v63 = vld [vmem:[%s1 + $0x88] sm:$0xff]
  %v64 = vld [vmem:[%s2] sm:$0x1]
  %v66 = vlaneseq
  %v67 = vshrl.u32 %v66, 7
  %v68 = vsub.s32 0, %v67
  %v69 = vrot.slane %v64, %v68
  %vm71 = vcmask 130048
  %v73 = vsel %vm71, %v15, 0
  %v76 = vsel %vm71, %v17, 0
  %v79 = vsel %vm71, %v19, 0
  %v82 = vsel %vm71, %v21, 0
  %v85 = vsel %vm71, %v23, 0
  %v88 = vsel %vm71, %v25, 0
  %v91 = vsel %vm71, %v27, 0
  %v94 = vsel %vm71, %v29, 0
  %v97 = vsel %vm71, %v31, 0
  %v100 = vsel %vm71, %v33, 0
  %v103 = vsel %vm71, %v35, 0
  %v106 = vsel %vm71, %v37, 0
  %v109 = vsel %vm71, %v39, 0
  %v112 = vsel %vm71, %v41, 0
  %v115 = vsel %vm71, %v43, 0
  %v118 = vsel %vm71, %v45, 0
  %120 = vmatprep.subr.mxu0 0.0
  %121 = vmatpush1.msra.mxu0 %v46
  %122 = vmatprep.subr.mxu0 0.0
  %123 = vmatpush1.msra.mxu0 %v47
  %124 = vmatprep.subr.mxu0 0.0
  %125 = vmatpush1.msra.mxu0 %v48
  %126 = vmatprep.subr.mxu0 0.0
  %127 = vmatpush1.msra.mxu0 %v49
  %128 = vmatprep.subr.mxu0 0.0
  %129 = vmatpush1.msra.mxu0 %v50
  %130 = vmatprep.subr.mxu0 0.0
  %131 = vmatpush1.msra.mxu0 %v51
  %132 = vmatprep.subr.mxu0 0.0
  %133 = vmatpush1.msra.mxu0 %v52
  %134 = vmatprep.subr.mxu0 0.0
  %135 = vmatpush1.msra.mxu0 %v53
  %136 = vmatprep.subr.mxu0 0.0
  %137 = vmatpush1.msra.mxu0 %v54
  %138 = vmatprep.subr.mxu0 0.0
  %139 = vmatpush1.msra.mxu0 %v55
  %140 = vmatprep.subr.mxu0 0.0
  %141 = vmatpush1.msra.mxu0 %v56
  %142 = vmatprep.subr.mxu0 0.0
  %143 = vmatpush1.msra.mxu0 %v57
  %144 = vmatprep.subr.mxu0 0.0
  %145 = vmatpush1.msra.mxu0 %v58
  %146 = vmatprep.subr.mxu0 0.0
  %147 = vmatpush1.msra.mxu0 %v59
  %148 = vmatprep.subr.mxu0 0.0
  %149 = vmatpush1.msra.mxu0 %v60
  %150 = vmatprep.subr.mxu0 0.0
  %151 = vmatpush1.msra.mxu0 %v61
  %152 = vmatprep.subr.mxu0 0.0
  %153 = vmatpush1.msra.mxu0 %v62
  %154 = vmatprep.subr.mxu0 0.0
  %155 = vmatpush1.msra.mxu0 %v63
  %156 = vmatprep.subr.mxu0 0.0
  %157 = vmatpush1.msra.mxu0 0.0
  %158 = vmatprep.subr.mxu0 0.0
  %159 = vmatpush1.msra.mxu0 0.0
  %160 = vmatprep.subr.mxu0 0.0
  %161 = vmatpush1.msra.mxu0 0.0
  %162 = vmatprep.subr.mxu0 0.0
  %163 = vmatpush1.msra.mxu0 0.0
  %164 = vmatprep.subr.mxu0 0.0
  %165 = vmatpush1.msra.mxu0 0.0
  %166 = vmatprep.subr.mxu0 0.0
  %167 = vmatpush1.msra.mxu0 0.0
  %168 = vmatprep.subr.mxu0 0.0
  %169 = vmatpush1.msra.mxu0 0.0
  %170 = vmatprep.subr.mxu0 0.0
  %171 = vmatpush1.msra.mxu0 0.0
  %172 = vmatprep.subr.mxu0 0.0
  %173 = vmatpush1.msra.mxu0 0.0
  %174 = vmatprep.subr.mxu0 0.0
  %175 = vmatpush1.msra.mxu0 0.0
  %176 = vmatprep.subr.mxu0 0.0
  %177 = vmatpush1.msra.mxu0 0.0
  %178 = vmatprep.subr.mxu0 0.0
  %179 = vmatpush1.msra.mxu0 0.0
  %180 = vmatprep.subr.mxu0 0.0
  %181 = vmatpush1.msra.mxu0 0.0
  %182 = vmatprep.subr.mxu0 0.0
  %183 = vmatpush1.msra.mxu0 0.0
  %184 = vmatprep.mubr.f32.mxu0 %v73
  %185 = vmatmul.mubr.f32.gmra.mrb[0].mxu0 %v14
  %v186 = vpop.f32.mrb[0].mxu0
  %v187 = vadd.f32 %v69, %v186
  %v188 = vpop.f32.mrb[0].mxu0
  %189 = vmatprep.mubr.f32.mxu0 %v76
  %190 = vmatmul.mubr.f32.gmra.mrb[0].mxu0 %v16
  %v191 = vpop.f32.mrb[0].mxu0
  %v192 = vadd.f32 %v69, %v191
  %v193 = vpop.f32.mrb[0].mxu0
  %194 = vmatprep.mubr.f32.mxu0 %v79
  %195 = vmatmul.mubr.f32.gmra.mrb[0].mxu0 %v18
  %v196 = vpop.f32.mrb[0].mxu0
  %v197 = vadd.f32 %v69, %v196
  %v198 = vpop.f32.mrb[0].mxu0
  %199 = vmatprep.mubr.f32.mxu0 %v82
  %200 = vmatmul.mubr.f32.gmra.mrb[0].mxu0 %v20
  %v201 = vpop.f32.mrb[0].mxu0
  %v202 = vadd.f32 %v69, %v201
  %v203 = vpop.f32.mrb[0].mxu0
  %204 = vmatprep.mubr.f32.mxu0 %v85
  %205 = vmatmul.mubr.f32.gmra.mrb[0].mxu0 %v22
  %v206 = vpop.f32.mrb[0].mxu0
  %v207 = vadd.f32 %v69, %v206
  %v208 = vpop.f32.mrb[0].mxu0
  %209 = vmatprep.mubr.f32.mxu0 %v88
  %210 = vmatmul.mubr.f32.gmra.mrb[0].mxu0 %v24
  %v211 = vpop.f32.mrb[0].mxu0
  %v212 = vadd.f32 %v69, %v211
  %v213 = vpop.f32.mrb[0].mxu0
  %214 = vmatprep.mubr.f32.mxu0 %v91
  %215 = vmatmul.mubr.f32.gmra.mrb[0].mxu0 %v26
  %v216 = vpop.f32.mrb[0].mxu0
  %v217 = vadd.f32 %v69, %v216
  %v218 = vpop.f32.mrb[0].mxu0
  %219 = vmatprep.mubr.f32.mxu0 %v94
  %220 = vmatmul.mubr.f32.gmra.mrb[0].mxu0 %v28
  %v221 = vpop.f32.mrb[0].mxu0
  %v222 = vadd.f32 %v69, %v221
  %v223 = vpop.f32.mrb[0].mxu0
  %224 = vmatprep.mubr.f32.mxu0 %v97
  %225 = vmatmul.mubr.f32.gmra.mrb[0].mxu0 %v30
  %v226 = vpop.f32.mrb[0].mxu0
  %v227 = vadd.f32 %v69, %v226
  %v228 = vpop.f32.mrb[0].mxu0
  %229 = vmatprep.mubr.f32.mxu0 %v100
  %230 = vmatmul.mubr.f32.gmra.mrb[0].mxu0 %v32
  %v231 = vpop.f32.mrb[0].mxu0
  %v232 = vadd.f32 %v69, %v231
  %v233 = vpop.f32.mrb[0].mxu0
  %234 = vmatprep.mubr.f32.mxu0 %v103
  %235 = vmatmul.mubr.f32.gmra.mrb[0].mxu0 %v34
  %v236 = vpop.f32.mrb[0].mxu0
  %v237 = vadd.f32 %v69, %v236
  %v238 = vpop.f32.mrb[0].mxu0
  %239 = vmatprep.mubr.f32.mxu0 %v106
  %240 = vmatmul.mubr.f32.gmra.mrb[0].mxu0 %v36
  %v241 = vpop.f32.mrb[0].mxu0
  %v242 = vadd.f32 %v69, %v241
  %v243 = vpop.f32.mrb[0].mxu0
  %244 = vmatprep.mubr.f32.mxu0 %v109
  %245 = vmatmul.mubr.f32.gmra.mrb[0].mxu0 %v38
  %v246 = vpop.f32.mrb[0].mxu0
  %v247 = vadd.f32 %v69, %v246
  %v248 = vpop.f32.mrb[0].mxu0
  %249 = vmatprep.mubr.f32.mxu0 %v112
  %250 = vmatmul.mubr.f32.gmra.mrb[0].mxu0 %v40
  %v251 = vpop.f32.mrb[0].mxu0
  %v252 = vadd.f32 %v69, %v251
  %v253 = vpop.f32.mrb[0].mxu0
  %254 = vmatprep.mubr.f32.mxu0 %v115
  %255 = vmatmul.mubr.f32.gmra.mrb[0].mxu0 %v42
  %v256 = vpop.f32.mrb[0].mxu0
  %v257 = vadd.f32 %v69, %v256
  %v258 = vpop.f32.mrb[0].mxu0
  %259 = vmatprep.mubr.f32.mxu0 %v118
  %260 = vmatmul.mubr.f32.gmra.mrb[0].mxu0 %v44
  %v261 = vpop.f32.mrb[0].mxu0
  %v262 = vadd.f32 %v69, %v261
  %v263 = vpop.f32.mrb[0].mxu0
  %264 = vdwg.mxu0
  %v265 = vmax.f32 %v187, 0.0
  %v266 = vmax.f32 %v192, 0.0
  %v267 = vmax.f32 %v197, 0.0
  %v268 = vmax.f32 %v202, 0.0
  %v269 = vmax.f32 %v207, 0.0
  %v270 = vmax.f32 %v212, 0.0
  %v271 = vmax.f32 %v217, 0.0
  %v272 = vmax.f32 %v222, 0.0
  %v273 = vmax.f32 %v227, 0.0
  %v274 = vmax.f32 %v232, 0.0
  %v275 = vmax.f32 %v237, 0.0
  %v276 = vmax.f32 %v242, 0.0
  %v277 = vmax.f32 %v247, 0.0
  %v278 = vmax.f32 %v252, 0.0
  %v279 = vmax.f32 %v257, 0.0
  %v280 = vmax.f32 %v262, 0.0
  %281 = vst [vmem:[%s3] sm:$0xff] %v265
  %282 = vst [vmem:[%s3 + $0x8] sm:$0xff] %v266
  %283 = vst [vmem:[%s3 + $0x10] sm:$0xff] %v267
  %284 = vst [vmem:[%s3 + $0x18] sm:$0xff] %v268
  %285 = vst [vmem:[%s3 + $0x20] sm:$0xff] %v269
  %286 = vst [vmem:[%s3 + $0x28] sm:$0xff] %v270
  %287 = vst [vmem:[%s3 + $0x30] sm:$0xff] %v271
  %288 = vst [vmem:[%s3 + $0x38] sm:$0xff] %v272
  %289 = vst [vmem:[%s3 + $0x40] sm:$0xff] %v273
  %290 = vst [vmem:[%s3 + $0x48] sm:$0xff] %v274
  %291 = vst [vmem:[%s3 + $0x50] sm:$0xff] %v275
  %292 = vst [vmem:[%s3 + $0x58] sm:$0xff] %v276
  %293 = vst [vmem:[%s3 + $0x60] sm:$0xff] %v277
  %294 = vst [vmem:[%s3 + $0x68] sm:$0xff] %v278
  %295 = vst [vmem:[%s3 + $0x70] sm:$0xff] %v279
  %296 = vst [vmem:[%s3 + $0x78] sm:$0xff] %v280
  // Predicated region
  $region14: #{_lambda_.6} parent=0 // pred_check
    _
  $region15: #{_lambda_.6} parent=0 // pred_check_branch
    %298 = sbr.rel (0) target = $region17
  $region16: #{_lambda_.6} parent=0 // pred_region
    _
  $region17: #{_lambda_.6} parent=0 // pred_fallthru
    _
  // Predicated region
  $region18: #{_lambda_.6} parent=0 // pred_check
    _
  $region19: #{_lambda_.6} parent=0 // pred_check_branch
    %300 = sbr.rel (0) target = $region21
  $region20: #{_lambda_.6} parent=0 // pred_region
    _
  $region21: #{_lambda_.6} parent=0 // pred_fallthru
    _

// kernel: _lambda_.8
$region0: #{_lambda_.8}
  #allocation0 [shape = 'u32[]', space=smem, size = 0x4, offset = 0x4, fixed_abs, tag = 'smem constant byte address 0x4 - core index']
  #allocation1 [shape = 'u32[144,128]{1,0:T(1,128)}', space=vmem, size = 0x12000, scoped, tag = 'internal scratch']
  %s0 = inlined_call_operand.vmem [shape: f32[128,128], index: 0, kind: input, shape index: {}]
  %s1 = inlined_call_operand.vmem [shape: f32[128,128], index: 1, kind: input, shape index: {}]
  %s2 = inlined_call_operand.vmem [shape: f32[1,128], index: 2, kind: input, shape index: {}]
  %s3 = inlined_call_operand.vmem [shape: f32[128,128], index: 3, kind: output, shape index: {}]
  %s4 = sld [smem:[#allocation0]]
  $region22: #{_lambda_.8} parent=0
    _
  %s6 = ssub.s32 1, %s4
  %s7 = scalar_select 0, %s6, %s4
  // Predicated region
  $region2: #{_lambda_.8} parent=0 // pred_check
    _
  $region3: #{_lambda_.8} parent=0 // pred_check_branch
    %9 = sbr.rel (0) target = $region5
  $region4: #{_lambda_.8} parent=0 // pred_region
    _
  $region5: #{_lambda_.8} parent=0 // pred_fallthru
    _
  // Predicated region
  $region6: #{_lambda_.8} parent=0 // pred_check
    _
  $region7: #{_lambda_.8} parent=0 // pred_check_branch
    %11 = sbr.rel (0) target = $region9
  $region8: #{_lambda_.8} parent=0 // pred_region
    _
  $region9: #{_lambda_.8} parent=0 // pred_fallthru
    _
  // Predicated region
  $region10: #{_lambda_.8} parent=0 // pred_check
    _
  $region11: #{_lambda_.8} parent=0 // pred_check_branch
    %13 = sbr.rel (0) target = $region13
  $region12: #{_lambda_.8} parent=0 // pred_region
    _
  $region13: #{_lambda_.8} parent=0 // pred_fallthru
    _
  %v14 = vld [vmem:[%s0] sm:$0xff]
  %v15 = vld [vmem:[%s0 + $0x8] sm:$0xff]
  %v16 = vld [vmem:[%s0 + $0x10] sm:$0xff]
  %v17 = vld [vmem:[%s0 + $0x18] sm:$0xff]
  %v18 = vld [vmem:[%s0 + $0x20] sm:$0xff]
  %v19 = vld [vmem:[%s0 + $0x28] sm:$0xff]
  %v20 = vld [vmem:[%s0 + $0x30] sm:$0xff]
  %v21 = vld [vmem:[%s0 + $0x38] sm:$0xff]
  %v22 = vld [vmem:[%s0 + $0x40] sm:$0xff]
  %v23 = vld [vmem:[%s0 + $0x48] sm:$0xff]
  %v24 = vld [vmem:[%s0 + $0x50] sm:$0xff]
  %v25 = vld [vmem:[%s0 + $0x58] sm:$0xff]
  %v26 = vld [vmem:[%s0 + $0x60] sm:$0xff]
  %v27 = vld [vmem:[%s0 + $0x68] sm:$0xff]
  %v28 = vld [vmem:[%s0 + $0x70] sm:$0xff]
  %v29 = vld [vmem:[%s0 + $0x78] sm:$0xff]
  %v30 = vld [vmem:[%s1] sm:$0xff]
  %v31 = vld [vmem:[%s1 + $0x8] sm:$0xff]
  %v32 = vld [vmem:[%s1 + $0x10] sm:$0xff]
  %v33 = vld [vmem:[%s1 + $0x18] sm:$0xff]
  %v34 = vld [vmem:[%s1 + $0x20] sm:$0xff]
  %v35 = vld [vmem:[%s1 + $0x28] sm:$0xff]
  %v36 = vld [vmem:[%s1 + $0x30] sm:$0xff]
  %v37 = vld [vmem:[%s1 + $0x38] sm:$0xff]
  %v38 = vld [vmem:[%s1 + $0x40] sm:$0xff]
  %v39 = vld [vmem:[%s1 + $0x48] sm:$0xff]
  %v40 = vld [vmem:[%s1 + $0x50] sm:$0xff]
  %v41 = vld [vmem:[%s1 + $0x58] sm:$0xff]
  %v42 = vld [vmem:[%s1 + $0x60] sm:$0xff]
  %v43 = vld [vmem:[%s1 + $0x68] sm:$0xff]
  %v44 = vld [vmem:[%s1 + $0x70] sm:$0xff]
  %v45 = vld [vmem:[%s1 + $0x78] sm:$0xff]
  %v46 = vld [vmem:[%s2] sm:$0x1]
  %v48 = vlaneseq
  %v49 = vshrl.u32 %v48, 7
  %v50 = vsub.s32 0, %v49
  %v51 = vrot.slane %v46, %v50
  %53 = vmatprep.subr.mxu0 0.0
  %54 = vmatpush1.msra.mxu0 %v30
  %55 = vmatprep.subr.mxu0 0.0
  %56 = vmatpush1.msra.mxu0 %v31
  %57 = vmatprep.subr.mxu0 0.0
  %58 = vmatpush1.msra.mxu0 %v32
  %59 = vmatprep.subr.mxu0 0.0
  %60 = vmatpush1.msra.mxu0 %v33
  %61 = vmatprep.subr.mxu0 0.0
  %62 = vmatpush1.msra.mxu0 %v34
  %63 = vmatprep.subr.mxu0 0.0
  %64 = vmatpush1.msra.mxu0 %v35
  %65 = vmatprep.subr.mxu0 0.0
  %66 = vmatpush1.msra.mxu0 %v36
  %67 = vmatprep.subr.mxu0 0.0
  %68 = vmatpush1.msra.mxu0 %v37
  %69 = vmatprep.subr.mxu0 0.0
  %70 = vmatpush1.msra.mxu0 %v38
  %71 = vmatprep.subr.mxu0 0.0
  %72 = vmatpush1.msra.mxu0 %v39
  %73 = vmatprep.subr.mxu0 0.0
  %74 = vmatpush1.msra.mxu0 %v40
  %75 = vmatprep.subr.mxu0 0.0
  %76 = vmatpush1.msra.mxu0 %v41
  %77 = vmatprep.subr.mxu0 0.0
  %78 = vmatpush1.msra.mxu0 %v42
  %79 = vmatprep.subr.mxu0 0.0
  %80 = vmatpush1.msra.mxu0 %v43
  %81 = vmatprep.subr.mxu0 0.0
  %82 = vmatpush1.msra.mxu0 %v44
  %83 = vmatprep.subr.mxu0 0.0
  %84 = vmatpush1.msra.mxu0 %v45
  %85 = vmatprep.subr.mxu0 0.0
  %86 = vmatpush1.msra.mxu0 0.0
  %87 = vmatprep.subr.mxu0 0.0
  %88 = vmatpush1.msra.mxu0 0.0
  %89 = vmatprep.subr.mxu0 0.0
  %90 = vmatpush1.msra.mxu0 0.0
  %91 = vmatprep.subr.mxu0 0.0
  %92 = vmatpush1.msra.mxu0 0.0
  %93 = vmatprep.subr.mxu0 0.0
  %94 = vmatpush1.msra.mxu0 0.0
  %95 = vmatprep.subr.mxu0 0.0
  %96 = vmatpush1.msra.mxu0 0.0
  %97 = vmatprep.subr.mxu0 0.0
  %98 = vmatpush1.msra.mxu0 0.0
  %99 = vmatprep.subr.mxu0 0.0
  %100 = vmatpush1.msra.mxu0 0.0
  %101 = vmatprep.subr.mxu0 0.0
  %102 = vmatpush1.msra.mxu0 0.0
  %103 = vmatprep.subr.mxu0 0.0
  %104 = vmatpush1.msra.mxu0 0.0
  %105 = vmatprep.subr.mxu0 0.0
  %106 = vmatpush1.msra.mxu0 0.0
  %107 = vmatprep.subr.mxu0 0.0
  %108 = vmatpush1.msra.mxu0 0.0
  %109 = vmatprep.subr.mxu0 0.0
  %110 = vmatpush1.msra.mxu0 0.0
  %111 = vmatprep.subr.mxu0 0.0
  %112 = vmatpush1.msra.mxu0 0.0
  %113 = vmatprep.subr.mxu0 0.0
  %114 = vmatpush1.msra.mxu0 0.0
  %115 = vmatprep.subr.mxu0 0.0
  %116 = vmatpush1.msra.mxu0 0.0
  %117 = vmatprep.mubr.f32.mxu0 0.0
  %118 = vmatmul.mubr.f32.gmra.mrb[0].mxu0 %v14
  %v119 = vpop.f32.mrb[0].mxu0
  %v120 = vadd.f32 %v51, %v119
  %v121 = vpop.f32.mrb[0].mxu0
  %122 = vmatprep.mubr.f32.mxu0 0.0
  %123 = vmatmul.mubr.f32.gmra.mrb[0].mxu0 %v15
  %v124 = vpop.f32.mrb[0].mxu0
  %v125 = vadd.f32 %v51, %v124
  %v126 = vpop.f32.mrb[0].mxu0
  %127 = vmatprep.mubr.f32.mxu0 0.0
  %128 = vmatmul.mubr.f32.gmra.mrb[0].mxu0 %v16
  %v129 = vpop.f32.mrb[0].mxu0
  %v130 = vadd.f32 %v51, %v129
  %v131 = vpop.f32.mrb[0].mxu0
  %132 = vmatprep.mubr.f32.mxu0 0.0
  %133 = vmatmul.mubr.f32.gmra.mrb[0].mxu0 %v17
  %v134 = vpop.f32.mrb[0].mxu0
  %v135 = vadd.f32 %v51, %v134
  %v136 = vpop.f32.mrb[0].mxu0
  %137 = vmatprep.mubr.f32.mxu0 0.0
  %138 = vmatmul.mubr.f32.gmra.mrb[0].mxu0 %v18
  %v139 = vpop.f32.mrb[0].mxu0
  %v140 = vadd.f32 %v51, %v139
  %v141 = vpop.f32.mrb[0].mxu0
  %142 = vmatprep.mubr.f32.mxu0 0.0
  %143 = vmatmul.mubr.f32.gmra.mrb[0].mxu0 %v19
  %v144 = vpop.f32.mrb[0].mxu0
  %v145 = vadd.f32 %v51, %v144
  %v146 = vpop.f32.mrb[0].mxu0
  %147 = vmatprep.mubr.f32.mxu0 0.0
  %148 = vmatmul.mubr.f32.gmra.mrb[0].mxu0 %v20
  %v149 = vpop.f32.mrb[0].mxu0
  %v150 = vadd.f32 %v51, %v149
  %v151 = vpop.f32.mrb[0].mxu0
  %152 = vmatprep.mubr.f32.mxu0 0.0
  %153 = vmatmul.mubr.f32.gmra.mrb[0].mxu0 %v21
  %v154 = vpop.f32.mrb[0].mxu0
  %v155 = vadd.f32 %v51, %v154
  %v156 = vpop.f32.mrb[0].mxu0
  %157 = vmatprep.mubr.f32.mxu0 0.0
  %158 = vmatmul.mubr.f32.gmra.mrb[0].mxu0 %v22
  %v159 = vpop.f32.mrb[0].mxu0
  %v160 = vadd.f32 %v51, %v159
  %v161 = vpop.f32.mrb[0].mxu0
  %162 = vmatprep.mubr.f32.mxu0 0.0
  %163 = vmatmul.mubr.f32.gmra.mrb[0].mxu0 %v23
  %v164 = vpop.f32.mrb[0].mxu0
  %v165 = vadd.f32 %v51, %v164
  %v166 = vpop.f32.mrb[0].mxu0
  %167 = vmatprep.mubr.f32.mxu0 0.0
  %168 = vmatmul.mubr.f32.gmra.mrb[0].mxu0 %v24
  %v169 = vpop.f32.mrb[0].mxu0
  %v170 = vadd.f32 %v51, %v169
  %v171 = vpop.f32.mrb[0].mxu0
  %172 = vmatprep.mubr.f32.mxu0 0.0
  %173 = vmatmul.mubr.f32.gmra.mrb[0].mxu0 %v25
  %v174 = vpop.f32.mrb[0].mxu0
  %v175 = vadd.f32 %v51, %v174
  %v176 = vpop.f32.mrb[0].mxu0
  %177 = vmatprep.mubr.f32.mxu0 0.0
  %178 = vmatmul.mubr.f32.gmra.mrb[0].mxu0 %v26
  %v179 = vpop.f32.mrb[0].mxu0
  %v180 = vadd.f32 %v51, %v179
  %v181 = vpop.f32.mrb[0].mxu0
  %182 = vmatprep.mubr.f32.mxu0 0.0
  %183 = vmatmul.mubr.f32.gmra.mrb[0].mxu0 %v27
  %v184 = vpop.f32.mrb[0].mxu0
  %v185 = vadd.f32 %v51, %v184
  %v186 = vpop.f32.mrb[0].mxu0
  %187 = vmatprep.mubr.f32.mxu0 0.0
  %188 = vmatmul.mubr.f32.gmra.mrb[0].mxu0 %v28
  %v189 = vpop.f32.mrb[0].mxu0
  %v190 = vadd.f32 %v51, %v189
  %v191 = vpop.f32.mrb[0].mxu0
  %192 = vmatprep.mubr.f32.mxu0 0.0
  %193 = vmatmul.mubr.f32.gmra.mrb[0].mxu0 %v29
  %v194 = vpop.f32.mrb[0].mxu0
  %v195 = vadd.f32 %v51, %v194
  %v196 = vpop.f32.mrb[0].mxu0
  %197 = vdwg.mxu0
  %v198 = vmax.f32 %v120, 0.0
  %v199 = vmax.f32 %v125, 0.0
  %v200 = vmax.f32 %v130, 0.0
  %v201 = vmax.f32 %v135, 0.0
  %v202 = vmax.f32 %v140, 0.0
  %v203 = vmax.f32 %v145, 0.0
  %v204 = vmax.f32 %v150, 0.0
  %v205 = vmax.f32 %v155, 0.0
  %v206 = vmax.f32 %v160, 0.0
  %v207 = vmax.f32 %v165, 0.0
  %v208 = vmax.f32 %v170, 0.0
  %v209 = vmax.f32 %v175, 0.0
  %v210 = vmax.f32 %v180, 0.0
  %v211 = vmax.f32 %v185, 0.0
  %v212 = vmax.f32 %v190, 0.0
  %v213 = vmax.f32 %v195, 0.0
  %214 = vst [vmem:[%s3] sm:$0xff] %v198
  %215 = vst [vmem:[%s3 + $0x8] sm:$0xff] %v199
  %216 = vst [vmem:[%s3 + $0x10] sm:$0xff] %v200
  %217 = vst [vmem:[%s3 + $0x18] sm:$0xff] %v201
  %218 = vst [vmem:[%s3 + $0x20] sm:$0xff] %v202
  %219 = vst [vmem:[%s3 + $0x28] sm:$0xff] %v203
  %220 = vst [vmem:[%s3 + $0x30] sm:$0xff] %v204
  %221 = vst [vmem:[%s3 + $0x38] sm:$0xff] %v205
  %222 = vst [vmem:[%s3 + $0x40] sm:$0xff] %v206
  %223 = vst [vmem:[%s3 + $0x48] sm:$0xff] %v207
  %224 = vst [vmem:[%s3 + $0x50] sm:$0xff] %v208
  %225 = vst [vmem:[%s3 + $0x58] sm:$0xff] %v209
  %226 = vst [vmem:[%s3 + $0x60] sm:$0xff] %v210
  %227 = vst [vmem:[%s3 + $0x68] sm:$0xff] %v211
  %228 = vst [vmem:[%s3 + $0x70] sm:$0xff] %v212
  %229 = vst [vmem:[%s3 + $0x78] sm:$0xff] %v213
  // Predicated region
  $region14: #{_lambda_.8} parent=0 // pred_check
    _
  $region15: #{_lambda_.8} parent=0 // pred_check_branch
    %231 = sbr.rel (0) target = $region17
  $region16: #{_lambda_.8} parent=0 // pred_region
    _
  $region17: #{_lambda_.8} parent=0 // pred_fallthru
    _
  // Predicated region
  $region18: #{_lambda_.8} parent=0 // pred_check
    _
  $region19: #{_lambda_.8} parent=0 // pred_check_branch
    %233 = sbr.rel (0) target = $region21
  $region20: #{_lambda_.8} parent=0 // pred_region
    _
  $region21: #{_lambda_.8} parent=0 // pred_fallthru
    _

// kernel: _lambda_.7
$region0: #{_lambda_.7}
  #allocation0 [shape = 'u32[]', space=smem, size = 0x4, offset = 0x4, fixed_abs, tag = 'smem constant byte address 0x4 - core index']
  #allocation1 [shape = 'u32[144,128]{1,0:T(1,128)}', space=vmem, size = 0x12000, scoped, tag = 'internal scratch']
  %s0 = inlined_call_operand.vmem [shape: f32[8,2048], index: 0, kind: input, shape index: {}]
  %s1 = inlined_call_operand.vmem [shape: f32[2048,64], index: 1, kind: input, shape index: {}]
  %s2 = inlined_call_operand.vmem [shape: f32[1,64], index: 2, kind: input, shape index: {}]
  %s3 = inlined_call_operand.vmem [shape: f32[64,64], index: 3, kind: input, shape index: {}]
  %s4 = inlined_call_operand.vmem [shape: f32[1,64], index: 4, kind: input, shape index: {}]
  %s5 = inlined_call_operand.vmem [shape: f32[64,2048], index: 5, kind: input, shape index: {}]
  %s6 = inlined_call_operand.vmem [shape: f32[1,2048], index: 6, kind: input, shape index: {}]
  %s7 = inlined_call_operand.vmem [shape: f32[8,2048], index: 7, kind: output, shape index: {}]
  %s8 = sld [smem:[#allocation0]]
  $region38: #{_lambda_.7} parent=0
    _
  %s10 = ssub.s32 1, %s8
  %s11 = scalar_select 0, %s10, %s8
  // Predicated region
  $region2: #{_lambda_.7} parent=0 // pred_check
    _
  $region3: #{_lambda_.7} parent=0 // pred_check_branch
    %13 = sbr.rel (0) target = $region5
  $region4: #{_lambda_.7} parent=0 // pred_region
    _
  $region5: #{_lambda_.7} parent=0 // pred_fallthru
    _
  // Predicated region
  $region6: #{_lambda_.7} parent=0 // pred_check
    _
  $region7: #{_lambda_.7} parent=0 // pred_check_branch
    %15 = sbr.rel (0) target = $region9
  $region8: #{_lambda_.7} parent=0 // pred_region
    _
  $region9: #{_lambda_.7} parent=0 // pred_fallthru
    _
  // Predicated region
  $region10: #{_lambda_.7} parent=0 // pred_check
    _
  $region11: #{_lambda_.7} parent=0 // pred_check_branch
    %17 = sbr.rel (0) target = $region13
  $region12: #{_lambda_.7} parent=0 // pred_region
    _
  $region13: #{_lambda_.7} parent=0 // pred_fallthru
    _
  // Predicated region
  $region14: #{_lambda_.7} parent=0 // pred_check
    _
  $region15: #{_lambda_.7} parent=0 // pred_check_branch
    %19 = sbr.rel (0) target = $region17
  $region16: #{_lambda_.7} parent=0 // pred_region
    _
  $region17: #{_lambda_.7} parent=0 // pred_fallthru
    _
  // Predicated region
  $region18: #{_lambda_.7} parent=0 // pred_check
    _
  $region19: #{_lambda_.7} parent=0 // pred_check_branch
    %21 = sbr.rel (0) target = $region21
  $region20: #{_lambda_.7} parent=0 // pred_region
    _
  $region21: #{_lambda_.7} parent=0 // pred_fallthru
    _
  // Predicated region
  $region22: #{_lambda_.7} parent=0 // pred_check
    _
  $region23: #{_lambda_.7} parent=0 // pred_check_branch
    %23 = sbr.rel (0) target = $region25
  $region24: #{_lambda_.7} parent=0 // pred_region
    _
  $region25: #{_lambda_.7} parent=0 // pred_fallthru
    _
  // Predicated region
  $region26: #{_lambda_.7} parent=0 // pred_check
    _
  $region27: #{_lambda_.7} parent=0 // pred_check_branch
    %25 = sbr.rel (0) target = $region29
  $region28: #{_lambda_.7} parent=0 // pred_region
    _
  $region29: #{_lambda_.7} parent=0 // pred_fallthru
    _
  %v26 = vld [vmem:[%s0] sm:$0xff]
  %v27 = vld [vmem:[%s0 + $0x8] sm:$0xff]
  %v28 = vld [vmem:[%s0 + $0x10] sm:$0xff]
  %v29 = vld [vmem:[%s0 + $0x18] sm:$0xff]
  %v30 = vld [vmem:[%s0 + $0x20] sm:$0xff]
  %v31 = vld [vmem:[%s0 + $0x28] sm:$0xff]
  %v32 = vld [vmem:[%s0 + $0x30] sm:$0xff]
  %v33 = vld [vmem:[%s0 + $0x38] sm:$0xff]
  %v34 = vld [vmem:[%s0 + $0x40] sm:$0xff]
  %v35 = vld [vmem:[%s0 + $0x48] sm:$0xff]
  %v36 = vld [vmem:[%s0 + $0x50] sm:$0xff]
  %v37 = vld [vmem:[%s0 + $0x58] sm:$0xff]
  %v38 = vld [vmem:[%s0 + $0x60] sm:$0xff]
  %v39 = vld [vmem:[%s0 + $0x68] sm:$0xff]
  %v40 = vld [vmem:[%s0 + $0x70] sm:$0xff]
  %v41 = vld [vmem:[%s0 + $0x78] sm:$0xff]
  %v42 = vld [vmem:[%s1] sm:$0xff]
  %v43 = vld [vmem:[%s1 + $0x8] sm:$0xff]
  %v44 = vld [vmem:[%s1 + $0x10] sm:$0xff]
  %v45 = vld [vmem:[%s1 + $0x18] sm:$0xff]
  %v46 = vld [vmem:[%s1 + $0x20] sm:$0xff]
  %v47 = vld [vmem:[%s1 + $0x28] sm:$0xff]
  %v48 = vld [vmem:[%s1 + $0x30] sm:$0xff]
  %v49 = vld [vmem:[%s1 + $0x38] sm:$0xff]
  %v50 = vld [vmem:[%s1 + $0x40] sm:$0xff]
  %v51 = vld [vmem:[%s1 + $0x48] sm:$0xff]
  %v52 = vld [vmem:[%s1 + $0x50] sm:$0xff]
  %v53 = vld [vmem:[%s1 + $0x58] sm:$0xff]
  %v54 = vld [vmem:[%s1 + $0x60] sm:$0xff]
  %v55 = vld [vmem:[%s1 + $0x68] sm:$0xff]
  %v56 = vld [vmem:[%s1 + $0x70] sm:$0xff]
  %v57 = vld [vmem:[%s1 + $0x78] sm:$0xff]
  %v58 = vld [vmem:[%s1 + $0x80] sm:$0xff]
  %v59 = vld [vmem:[%s1 + $0x88] sm:$0xff]
  %v60 = vld [vmem:[%s1 + $0x90] sm:$0xff]
  %v61 = vld [vmem:[%s1 + $0x98] sm:$0xff]
  %v62 = vld [vmem:[%s1 + $0xa0] sm:$0xff]
  %v63 = vld [vmem:[%s1 + $0xa8] sm:$0xff]
  %v64 = vld [vmem:[%s1 + $0xb0] sm:$0xff]
  %v65 = vld [vmem:[%s1 + $0xb8] sm:$0xff]
  %v66 = vld [vmem:[%s1 + $0xc0] sm:$0xff]
  %v67 = vld [vmem:[%s1 + $0xc8] sm:$0xff]
  %v68 = vld [vmem:[%s1 + $0xd0] sm:$0xff]
  %v69 = vld [vmem:[%s1 + $0xd8] sm:$0xff]
  %v70 = vld [vmem:[%s1 + $0xe0] sm:$0xff]
  %v71 = vld [vmem:[%s1 + $0xe8] sm:$0xff]
  %v72 = vld [vmem:[%s1 + $0xf0] sm:$0xff]
  %v73 = vld [vmem:[%s1 + $0xf8] sm:$0xff]
  %v74 = vld [vmem:[%s1 + $0x100] sm:$0xff]
  %v75 = vld [vmem:[%s1 + $0x108] sm:$0xff]
  %v76 = vld [vmem:[%s1 + $0x110] sm:$0xff]
  %v77 = vld [vmem:[%s1 + $0x118] sm:$0xff]
  %v78 = vld [vmem:[%s1 + $0x120] sm:$0xff]
  %v79 = vld [vmem:[%s1 + $0x128] sm:$0xff]
  %v80 = vld [vmem:[%s1 + $0x130] sm:$0xff]
  %v81 = vld [vmem:[%s1 + $0x138] sm:$0xff]
  %v82 = vld [vmem:[%s1 + $0x140] sm:$0xff]
  %v83 = vld [vmem:[%s1 + $0x148] sm:$0xff]
  %v84 = vld [vmem:[%s1 + $0x150] sm:$0xff]
  %v85 = vld [vmem:[%s1 + $0x158] sm:$0xff]
  %v86 = vld [vmem:[%s1 + $0x160] sm:$0xff]
  %v87 = vld [vmem:[%s1 + $0x168] sm:$0xff]
  %v88 = vld [vmem:[%s1 + $0x170] sm:$0xff]
  %v89 = vld [vmem:[%s1 + $0x178] sm:$0xff]
  %v90 = vld [vmem:[%s1 + $0x180] sm:$0xff]
  %v91 = vld [vmem:[%s1 + $0x188] sm:$0xff]
  %v92 = vld [vmem:[%s1 + $0x190] sm:$0xff]
  %v93 = vld [vmem:[%s1 + $0x198] sm:$0xff]
  %v94 = vld [vmem:[%s1 + $0x1a0] sm:$0xff]
  %v95 = vld [vmem:[%s1 + $0x1a8] sm:$0xff]
  %v96 = vld [vmem:[%s1 + $0x1b0] sm:$0xff]
  %v97 = vld [vmem:[%s1 + $0x1b8] sm:$0xff]
  %v98 = vld [vmem:[%s1 + $0x1c0] sm:$0xff]
  %v99 = vld [vmem:[%s1 + $0x1c8] sm:$0xff]
  %v100 = vld [vmem:[%s1 + $0x1d0] sm:$0xff]
  %v101 = vld [vmem:[%s1 + $0x1d8] sm:$0xff]
  %v102 = vld [vmem:[%s1 + $0x1e0] sm:$0xff]
  %v103 = vld [vmem:[%s1 + $0x1e8] sm:$0xff]
  %v104 = vld [vmem:[%s1 + $0x1f0] sm:$0xff]
  %v105 = vld [vmem:[%s1 + $0x1f8] sm:$0xff]
  %v106 = vld [vmem:[%s1 + $0x200] sm:$0xff]
  %v107 = vld [vmem:[%s1 + $0x208] sm:$0xff]
  %v108 = vld [vmem:[%s1 + $0x210] sm:$0xff]
  %v109 = vld [vmem:[%s1 + $0x218] sm:$0xff]
  %v110 = vld [vmem:[%s1 + $0x220] sm:$0xff]
  %v111 = vld [vmem:[%s1 + $0x228] sm:$0xff]
  %v112 = vld [vmem:[%s1 + $0x230] sm:$0xff]
  %v113 = vld [vmem:[%s1 + $0x238] sm:$0xff]
  %v114 = vld [vmem:[%s1 + $0x240] sm:$0xff]
  %v115 = vld [vmem:[%s1 + $0x248] sm:$0xff]
  %v116 = vld [vmem:[%s1 + $0x250] sm:$0xff]
  %v117 = vld [vmem:[%s1 + $0x258] sm:$0xff]
  %v118 = vld [vmem:[%s1 + $0x260] sm:$0xff]
  %v119 = vld [vmem:[%s1 + $0x268] sm:$0xff]
  %v120 = vld [vmem:[%s1 + $0x270] sm:$0xff]
  %v121 = vld [vmem:[%s1 + $0x278] sm:$0xff]
  %v122 = vld [vmem:[%s1 + $0x280] sm:$0xff]
  %v123 = vld [vmem:[%s1 + $0x288] sm:$0xff]
  %v124 = vld [vmem:[%s1 + $0x290] sm:$0xff]
  %v125 = vld [vmem:[%s1 + $0x298] sm:$0xff]
  %v126 = vld [vmem:[%s1 + $0x2a0] sm:$0xff]
  %v127 = vld [vmem:[%s1 + $0x2a8] sm:$0xff]
  %v128 = vld [vmem:[%s1 + $0x2b0] sm:$0xff]
  %v129 = vld [vmem:[%s1 + $0x2b8] sm:$0xff]
  %v130 = vld [vmem:[%s1 + $0x2c0] sm:$0xff]
  %v131 = vld [vmem:[%s1 + $0x2c8] sm:$0xff]
  %v132 = vld [vmem:[%s1 + $0x2d0] sm:$0xff]
  %v133 = vld [vmem:[%s1 + $0x2d8] sm:$0xff]
  %v134 = vld [vmem:[%s1 + $0x2e0] sm:$0xff]
  %v135 = vld [vmem:[%s1 + $0x2e8] sm:$0xff]
  %v136 = vld [vmem:[%s1 + $0x2f0] sm:$0xff]
  %v137 = vld [vmem:[%s1 + $0x2f8] sm:$0xff]
  %v138 = vld [vmem:[%s1 + $0x300] sm:$0xff]
  %v139 = vld [vmem:[%s1 + $0x308] sm:$0xff]
  %v140 = vld [vmem:[%s1 + $0x310] sm:$0xff]
  %v141 = vld [vmem:[%s1 + $0x318] sm:$0xff]
  %v142 = vld [vmem:[%s1 + $0x320] sm:$0xff]
  %v143 = vld [vmem:[%s1 + $0x328] sm:$0xff]
  %v144 = vld [vmem:[%s1 + $0x330] sm:$0xff]
  %v145 = vld [vmem:[%s1 + $0x338] sm:$0xff]
  %v146 = vld [vmem:[%s1 + $0x340] sm:$0xff]
  %v147 = vld [vmem:[%s1 + $0x348] sm:$0xff]
  %v148 = vld [vmem:[%s1 + $0x350] sm:$0xff]
  %v149 = vld [vmem:[%s1 + $0x358] sm:$0xff]
  %v150 = vld [vmem:[%s1 + $0x360] sm:$0xff]
  %v151 = vld [vmem:[%s1 + $0x368] sm:$0xff]
  %v152 = vld [vmem:[%s1 + $0x370] sm:$0xff]
  %v153 = vld [vmem:[%s1 + $0x378] sm:$0xff]
  %v154 = vld [vmem:[%s1 + $0x380] sm:$0xff]
  %v155 = vld [vmem:[%s1 + $0x388] sm:$0xff]
  %v156 = vld [vmem:[%s1 + $0x390] sm:$0xff]
  %v157 = vld [vmem:[%s1 + $0x398] sm:$0xff]
  %v158 = vld [vmem:[%s1 + $0x3a0] sm:$0xff]
  %v159 = vld [vmem:[%s1 + $0x3a8] sm:$0xff]
  %v160 = vld [vmem:[%s1 + $0x3b0] sm:$0xff]
  %v161 = vld [vmem:[%s1 + $0x3b8] sm:$0xff]
  %v162 = vld [vmem:[%s1 + $0x3c0] sm:$0xff]
  %v163 = vld [vmem:[%s1 + $0x3c8] sm:$0xff]
  %v164 = vld [vmem:[%s1 + $0x3d0] sm:$0xff]
  %v165 = vld [vmem:[%s1 + $0x3d8] sm:$0xff]
  %v166 = vld [vmem:[%s1 + $0x3e0] sm:$0xff]
  %v167 = vld [vmem:[%s1 + $0x3e8] sm:$0xff]
  %v168 = vld [vmem:[%s1 + $0x3f0] sm:$0xff]
  %v169 = vld [vmem:[%s1 + $0x3f8] sm:$0xff]
  %v170 = vld [vmem:[%s1 + $0x400] sm:$0xff]
  %v171 = vld [vmem:[%s1 + $0x408] sm:$0xff]
  %v172 = vld [vmem:[%s1 + $0x410] sm:$0xff]
  %v173 = vld [vmem:[%s1 + $0x418] sm:$0xff]
  %v174 = vld [vmem:[%s1 + $0x420] sm:$0xff]
  %v175 = vld [vmem:[%s1 + $0x428] sm:$0xff]
  %v176 = vld [vmem:[%s1 + $0x430] sm:$0xff]
  %v177 = vld [vmem:[%s1 + $0x438] sm:$0xff]
  %v178 = vld [vmem:[%s1 + $0x440] sm:$0xff]
  %v179 = vld [vmem:[%s1 + $0x448] sm:$0xff]
  %v180 = vld [vmem:[%s1 + $0x450] sm:$0xff]
  %v181 = vld [vmem:[%s1 + $0x458] sm:$0xff]
  %v182 = vld [vmem:[%s1 + $0x460] sm:$0xff]
  %v183 = vld [vmem:[%s1 + $0x468] sm:$0xff]
  %v184 = vld [vmem:[%s1 + $0x470] sm:$0xff]
  %v185 = vld [vmem:[%s1 + $0x478] sm:$0xff]
  %v186 = vld [vmem:[%s1 + $0x480] sm:$0xff]
  %v187 = vld [vmem:[%s1 + $0x488] sm:$0xff]
  %v188 = vld [vmem:[%s1 + $0x490] sm:$0xff]
  %v189 = vld [vmem:[%s1 + $0x498] sm:$0xff]
  %v190 = vld [vmem:[%s1 + $0x4a0] sm:$0xff]
  %v191 = vld [vmem:[%s1 + $0x4a8] sm:$0xff]
  %v192 = vld [vmem:[%s1 + $0x4b0] sm:$0xff]
  %v193 = vld [vmem:[%s1 + $0x4b8] sm:$0xff]
  %v194 = vld [vmem:[%s1 + $0x4c0] sm:$0xff]
  %v195 = vld [vmem:[%s1 + $0x4c8] sm:$0xff]
  %v196 = vld [vmem:[%s1 + $0x4d0] sm:$0xff]
  %v197 = vld [vmem:[%s1 + $0x4d8] sm:$0xff]
  %v198 = vld [vmem:[%s1 + $0x4e0] sm:$0xff]
  %v199 = vld [vmem:[%s1 + $0x4e8] sm:$0xff]
  %v200 = vld [vmem:[%s1 + $0x4f0] sm:$0xff]
  %v201 = vld [vmem:[%s1 + $0x4f8] sm:$0xff]
  %v202 = vld [vmem:[%s1 + $0x500] sm:$0xff]
  %v203 = vld [vmem:[%s1 + $0x508] sm:$0xff]
  %v204 = vld [vmem:[%s1 + $0x510] sm:$0xff]
  %v205 = vld [vmem:[%s1 + $0x518] sm:$0xff]
  %v206 = vld [vmem:[%s1 + $0x520] sm:$0xff]
  %v207 = vld [vmem:[%s1 + $0x528] sm:$0xff]
  %v208 = vld [vmem:[%s1 + $0x530] sm:$0xff]
  %v209 = vld [vmem:[%s1 + $0x538] sm:$0xff]
  %v210 = vld [vmem:[%s1 + $0x540] sm:$0xff]
  %v211 = vld [vmem:[%s1 + $0x548] sm:$0xff]
  %v212 = vld [vmem:[%s1 + $0x550] sm:$0xff]
  %v213 = vld [vmem:[%s1 + $0x558] sm:$0xff]
  %v214 = vld [vmem:[%s1 + $0x560] sm:$0xff]
  %v215 = vld [vmem:[%s1 + $0x568] sm:$0xff]
  %v216 = vld [vmem:[%s1 + $0x570] sm:$0xff]
  %v217 = vld [vmem:[%s1 + $0x578] sm:$0xff]
  %v218 = vld [vmem:[%s1 + $0x580] sm:$0xff]
  %v219 = vld [vmem:[%s1 + $0x588] sm:$0xff]
  %v220 = vld [vmem:[%s1 + $0x590] sm:$0xff]
  %v221 = vld [vmem:[%s1 + $0x598] sm:$0xff]
  %v222 = vld [vmem:[%s1 + $0x5a0] sm:$0xff]
  %v223 = vld [vmem:[%s1 + $0x5a8] sm:$0xff]
  %v224 = vld [vmem:[%s1 + $0x5b0] sm:$0xff]
  %v225 = vld [vmem:[%s1 + $0x5b8] sm:$0xff]
  %v226 = vld [vmem:[%s1 + $0x5c0] sm:$0xff]
  %v227 = vld [vmem:[%s1 + $0x5c8] sm:$0xff]
  %v228 = vld [vmem:[%s1 + $0x5d0] sm:$0xff]
  %v229 = vld [vmem:[%s1 + $0x5d8] sm:$0xff]
  %v230 = vld [vmem:[%s1 + $0x5e0] sm:$0xff]
  %v231 = vld [vmem:[%s1 + $0x5e8] sm:$0xff]
  %v232 = vld [vmem:[%s1 + $0x5f0] sm:$0xff]
  %v233 = vld [vmem:[%s1 + $0x5f8] sm:$0xff]
  %v234 = vld [vmem:[%s1 + $0x600] sm:$0xff]
  %v235 = vld [vmem:[%s1 + $0x608] sm:$0xff]
  %v236 = vld [vmem:[%s1 + $0x610] sm:$0xff]
  %v237 = vld [vmem:[%s1 + $0x618] sm:$0xff]
  %v238 = vld [vmem:[%s1 + $0x620] sm:$0xff]
  %v239 = vld [vmem:[%s1 + $0x628] sm:$0xff]
  %v240 = vld [vmem:[%s1 + $0x630] sm:$0xff]
  %v241 = vld [vmem:[%s1 + $0x638] sm:$0xff]
  %v242 = vld [vmem:[%s1 + $0x640] sm:$0xff]
  %v243 = vld [vmem:[%s1 + $0x648] sm:$0xff]
  %v244 = vld [vmem:[%s1 + $0x650] sm:$0xff]
  %v245 = vld [vmem:[%s1 + $0x658] sm:$0xff]
  %v246 = vld [vmem:[%s1 + $0x660] sm:$0xff]
  %v247 = vld [vmem:[%s1 + $0x668] sm:$0xff]
  %v248 = vld [vmem:[%s1 + $0x670] sm:$0xff]
  %v249 = vld [vmem:[%s1 + $0x678] sm:$0xff]
  %v250 = vld [vmem:[%s1 + $0x680] sm:$0xff]
  %v251 = vld [vmem:[%s1 + $0x688] sm:$0xff]
  %v252 = vld [vmem:[%s1 + $0x690] sm:$0xff]
  %v253 = vld [vmem:[%s1 + $0x698] sm:$0xff]
  %v254 = vld [vmem:[%s1 + $0x6a0] sm:$0xff]
  %v255 = vld [vmem:[%s1 + $0x6a8] sm:$0xff]
  %v256 = vld [vmem:[%s1 + $0x6b0] sm:$0xff]
  %v257 = vld [vmem:[%s1 + $0x6b8] sm:$0xff]
  %v258 = vld [vmem:[%s1 + $0x6c0] sm:$0xff]
  %v259 = vld [vmem:[%s1 + $0x6c8] sm:$0xff]
  %v260 = vld [vmem:[%s1 + $0x6d0] sm:$0xff]
  %v261 = vld [vmem:[%s1 + $0x6d8] sm:$0xff]
  %v262 = vld [vmem:[%s1 + $0x6e0] sm:$0xff]
  %v263 = vld [vmem:[%s1 + $0x6e8] sm:$0xff]
  %v264 = vld [vmem:[%s1 + $0x6f0] sm:$0xff]
  %v265 = vld [vmem:[%s1 + $0x6f8] sm:$0xff]
  %v266 = vld [vmem:[%s1 + $0x700] sm:$0xff]
  %v267 = vld [vmem:[%s1 + $0x708] sm:$0xff]
  %v268 = vld [vmem:[%s1 + $0x710] sm:$0xff]
  %v269 = vld [vmem:[%s1 + $0x718] sm:$0xff]
  %v270 = vld [vmem:[%s1 + $0x720] sm:$0xff]
  %v271 = vld [vmem:[%s1 + $0x728] sm:$0xff]
  %v272 = vld [vmem:[%s1 + $0x730] sm:$0xff]
  %v273 = vld [vmem:[%s1 + $0x738] sm:$0xff]
  %v274 = vld [vmem:[%s1 + $0x740] sm:$0xff]
  %v275 = vld [vmem:[%s1 + $0x748] sm:$0xff]
  %v276 = vld [vmem:[%s1 + $0x750] sm:$0xff]
  %v277 = vld [vmem:[%s1 + $0x758] sm:$0xff]
  %v278 = vld [vmem:[%s1 + $0x760] sm:$0xff]
  %v279 = vld [vmem:[%s1 + $0x768] sm:$0xff]
  %v280 = vld [vmem:[%s1 + $0x770] sm:$0xff]
  %v281 = vld [vmem:[%s1 + $0x778] sm:$0xff]
  %v282 = vld [vmem:[%s1 + $0x780] sm:$0xff]
  %v283 = vld [vmem:[%s1 + $0x788] sm:$0xff]
  %v284 = vld [vmem:[%s1 + $0x790] sm:$0xff]
  %v285 = vld [vmem:[%s1 + $0x798] sm:$0xff]
  %v286 = vld [vmem:[%s1 + $0x7a0] sm:$0xff]
  %v287 = vld [vmem:[%s1 + $0x7a8] sm:$0xff]
  %v288 = vld [vmem:[%s1 + $0x7b0] sm:$0xff]
  %v289 = vld [vmem:[%s1 + $0x7b8] sm:$0xff]
  %v290 = vld [vmem:[%s1 + $0x7c0] sm:$0xff]
  %v291 = vld [vmem:[%s1 + $0x7c8] sm:$0xff]
  %v292 = vld [vmem:[%s1 + $0x7d0] sm:$0xff]
  %v293 = vld [vmem:[%s1 + $0x7d8] sm:$0xff]
  %v294 = vld [vmem:[%s1 + $0x7e0] sm:$0xff]
  %v295 = vld [vmem:[%s1 + $0x7e8] sm:$0xff]
  %v296 = vld [vmem:[%s1 + $0x7f0] sm:$0xff]
  %v297 = vld [vmem:[%s1 + $0x7f8] sm:$0xff]
  %v298 = vld [vmem:[%s2] sm:$0x1]
  %v300 = vlaneseq
  %v301 = vshrl.u32 %v300, 7
  %v302 = vsub.s32 0, %v301
  %v303 = vrot.slane %v298, %v302
  %305 = vmatprep.subr.mxu0 0.0
  %306 = vmatpush1.msra.mxu0 %v42
  %307 = vmatprep.subr.mxu0 0.0
  %308 = vmatpush1.msra.mxu0 %v43
  %309 = vmatprep.subr.mxu0 0.0
  %310 = vmatpush1.msra.mxu0 %v44
  %311 = vmatprep.subr.mxu0 0.0
  %312 = vmatpush1.msra.mxu0 %v45
  %313 = vmatprep.subr.mxu0 0.0
  %314 = vmatpush1.msra.mxu0 %v46
  %315 = vmatprep.subr.mxu0 0.0
  %316 = vmatpush1.msra.mxu0 %v47
  %317 = vmatprep.subr.mxu0 0.0
  %318 = vmatpush1.msra.mxu0 %v48
  %319 = vmatprep.subr.mxu0 0.0
  %320 = vmatpush1.msra.mxu0 %v49
  %321 = vmatprep.subr.mxu0 0.0
  %322 = vmatpush1.msra.mxu0 %v50
  %323 = vmatprep.subr.mxu0 0.0
  %324 = vmatpush1.msra.mxu0 %v51
  %325 = vmatprep.subr.mxu0 0.0
  %326 = vmatpush1.msra.mxu0 %v52
  %327 = vmatprep.subr.mxu0 0.0
  %328 = vmatpush1.msra.mxu0 %v53
  %329 = vmatprep.subr.mxu0 0.0
  %330 = vmatpush1.msra.mxu0 %v54
  %331 = vmatprep.subr.mxu0 0.0
  %332 = vmatpush1.msra.mxu0 %v55
  %333 = vmatprep.subr.mxu0 0.0
  %334 = vmatpush1.msra.mxu0 %v56
  %335 = vmatprep.subr.mxu0 0.0
  %336 = vmatpush1.msra.mxu0 %v57
  %337 = vmatprep.subr.mxu0 0.0
  %338 = vmatpush1.msra.mxu0 %v58
  %339 = vmatprep.subr.mxu0 0.0
  %340 = vmatpush1.msra.mxu0 %v59
  %341 = vmatprep.subr.mxu0 0.0
  %342 = vmatpush1.msra.mxu0 %v60
  %343 = vmatprep.subr.mxu0 0.0
  %344 = vmatpush1.msra.mxu0 %v61
  %345 = vmatprep.subr.mxu0 0.0
  %346 = vmatpush1.msra.mxu0 %v62
  %347 = vmatprep.subr.mxu0 0.0
  %348 = vmatpush1.msra.mxu0 %v63
  %349 = vmatprep.subr.mxu0 0.0
  %350 = vmatpush1.msra.mxu0 %v64
  %351 = vmatprep.subr.mxu0 0.0
  %352 = vmatpush1.msra.mxu0 %v65
  %353 = vmatprep.subr.mxu0 0.0
  %354 = vmatpush1.msra.mxu0 %v66
  %355 = vmatprep.subr.mxu0 0.0
  %356 = vmatpush1.msra.mxu0 %v67
  %357 = vmatprep.subr.mxu0 0.0
  %358 = vmatpush1.msra.mxu0 %v68
  %359 = vmatprep.subr.mxu0 0.0
  %360 = vmatpush1.msra.mxu0 %v69
  %361 = vmatprep.subr.mxu0 0.0
  %362 = vmatpush1.msra.mxu0 %v70
  %363 = vmatprep.subr.mxu0 0.0
  %364 = vmatpush1.msra.mxu0 %v71
  %365 = vmatprep.subr.mxu0 0.0
  %366 = vmatpush1.msra.mxu0 %v72
  %367 = vmatprep.subr.mxu0 0.0
  %368 = vmatpush1.msra.mxu0 %v73
  %369 = vmatprep.mubr.f32.mxu0 %v27
  %370 = vmatmul.mubr.f32.gmra.mrb[0].mxu0 %v26
  %v371 = vpop.f32.mrb[0].mxu0
  %v372 = vadd.f32 %v303, %v371
  %v373 = vpop.f32.mrb[0].mxu0
  %374 = vdwg.mxu0
  %375 = vmatprep.subr.mxu0 0.0
  %376 = vmatpush1.msra.mxu0 %v74
  %377 = vmatprep.subr.mxu0 0.0
  %378 = vmatpush1.msra.mxu0 %v75
  %379 = vmatprep.subr.mxu0 0.0
  %380 = vmatpush1.msra.mxu0 %v76
  %381 = vmatprep.subr.mxu0 0.0
  %382 = vmatpush1.msra.mxu0 %v77
  %383 = vmatprep.subr.mxu0 0.0
  %384 = vmatpush1.msra.mxu0 %v78
  %385 = vmatprep.subr.mxu0 0.0
  %386 = vmatpush1.msra.mxu0 %v79
  %387 = vmatprep.subr.mxu0 0.0
  %388 = vmatpush1.msra.mxu0 %v80
  %389 = vmatprep.subr.mxu0 0.0
  %390 = vmatpush1.msra.mxu0 %v81
  %391 = vmatprep.subr.mxu0 0.0
  %392 = vmatpush1.msra.mxu0 %v82
  %393 = vmatprep.subr.mxu0 0.0
  %394 = vmatpush1.msra.mxu0 %v83
  %395 = vmatprep.subr.mxu0 0.0
  %396 = vmatpush1.msra.mxu0 %v84
  %397 = vmatprep.subr.mxu0 0.0
  %398 = vmatpush1.msra.mxu0 %v85
  %399 = vmatprep.subr.mxu0 0.0
  %400 = vmatpush1.msra.mxu0 %v86
  %401 = vmatprep.subr.mxu0 0.0
  %402 = vmatpush1.msra.mxu0 %v87
  %403 = vmatprep.subr.mxu0 0.0
  %404 = vmatpush1.msra.mxu0 %v88
  %405 = vmatprep.subr.mxu0 0.0
  %406 = vmatpush1.msra.mxu0 %v89
  %407 = vmatprep.subr.mxu0 0.0
  %408 = vmatpush1.msra.mxu0 %v90
  %409 = vmatprep.subr.mxu0 0.0
  %410 = vmatpush1.msra.mxu0 %v91
  %411 = vmatprep.subr.mxu0 0.0
  %412 = vmatpush1.msra.mxu0 %v92
  %413 = vmatprep.subr.mxu0 0.0
  %414 = vmatpush1.msra.mxu0 %v93
  %415 = vmatprep.subr.mxu0 0.0
  %416 = vmatpush1.msra.mxu0 %v94
  %417 = vmatprep.subr.mxu0 0.0
  %418 = vmatpush1.msra.mxu0 %v95
  %419 = vmatprep.subr.mxu0 0.0
  %420 = vmatpush1.msra.mxu0 %v96
  %421 = vmatprep.subr.mxu0 0.0
  %422 = vmatpush1.msra.mxu0 %v97
  %423 = vmatprep.subr.mxu0 0.0
  %424 = vmatpush1.msra.mxu0 %v98
  %425 = vmatprep.subr.mxu0 0.0
  %426 = vmatpush1.msra.mxu0 %v99
  %427 = vmatprep.subr.mxu0 0.0
  %428 = vmatpush1.msra.mxu0 %v100
  %429 = vmatprep.subr.mxu0 0.0
  %430 = vmatpush1.msra.mxu0 %v101
  %431 = vmatprep.subr.mxu0 0.0
  %432 = vmatpush1.msra.mxu0 %v102
  %433 = vmatprep.subr.mxu0 0.0
  %434 = vmatpush1.msra.mxu0 %v103
  %435 = vmatprep.subr.mxu0 0.0
  %436 = vmatpush1.msra.mxu0 %v104
  %437 = vmatprep.subr.mxu0 0.0
  %438 = vmatpush1.msra.mxu0 %v105
  %439 = vmatprep.mubr.f32.mxu0 %v29
  %440 = vmatmul.mubr.f32.gmra.mrb[0].mxu0 %v28
  %v441 = vpop.f32.mrb[0].mxu0
  %v442 = vadd.f32 %v372, %v441
  %v443 = vpop.f32.mrb[0].mxu0
  %444 = vdwg.mxu0
  %445 = vmatprep.subr.mxu0 0.0
  %446 = vmatpush1.msra.mxu0 %v106
  %447 = vmatprep.subr.mxu0 0.0
  %448 = vmatpush1.msra.mxu0 %v107
  %449 = vmatprep.subr.mxu0 0.0
  %450 = vmatpush1.msra.mxu0 %v108
  %451 = vmatprep.subr.mxu0 0.0
  %452 = vmatpush1.msra.mxu0 %v109
  %453 = vmatprep.subr.mxu0 0.0
  %454 = vmatpush1.msra.mxu0 %v110
  %455 = vmatprep.subr.mxu0 0.0
  %456 = vmatpush1.msra.mxu0 %v111
  %457 = vmatprep.subr.mxu0 0.0
  %458 = vmatpush1.msra.mxu0 %v112
  %459 = vmatprep.subr.mxu0 0.0
  %460 = vmatpush1.msra.mxu0 %v113
  %461 = vmatprep.subr.mxu0 0.0
  %462 = vmatpush1.msra.mxu0 %v114
  %463 = vmatprep.subr.mxu0 0.0
  %464 = vmatpush1.msra.mxu0 %v115
  %465 = vmatprep.subr.mxu0 0.0
  %466 = vmatpush1.msra.mxu0 %v116
  %467 = vmatprep.subr.mxu0 0.0
  %468 = vmatpush1.msra.mxu0 %v117
  %469 = vmatprep.subr.mxu0 0.0
  %470 = vmatpush1.msra.mxu0 %v118
  %471 = vmatprep.subr.mxu0 0.0
  %472 = vmatpush1.msra.mxu0 %v119
  %473 = vmatprep.subr.mxu0 0.0
  %474 = vmatpush1.msra.mxu0 %v120
  %475 = vmatprep.subr.mxu0 0.0
  %476 = vmatpush1.msra.mxu0 %v121
  %477 = vmatprep.subr.mxu0 0.0
  %478 = vmatpush1.msra.mxu0 %v122
  %479 = vmatprep.subr.mxu0 0.0
  %480 = vmatpush1.msra.mxu0 %v123
  %481 = vmatprep.subr.mxu0 0.0
  %482 = vmatpush1.msra.mxu0 %v124
  %483 = vmatprep.subr.mxu0 0.0
  %484 = vmatpush1.msra.mxu0 %v125
  %485 = vmatprep.subr.mxu0 0.0
  %486 = vmatpush1.msra.mxu0 %v126
  %487 = vmatprep.subr.mxu0 0.0
  %488 = vmatpush1.msra.mxu0 %v127
  %489 = vmatprep.subr.mxu0 0.0
  %490 = vmatpush1.msra.mxu0 %v128
  %491 = vmatprep.subr.mxu0 0.0
  %492 = vmatpush1.msra.mxu0 %v129
  %493 = vmatprep.subr.mxu0 0.0
  %494 = vmatpush1.msra.mxu0 %v130
  %495 = vmatprep.subr.mxu0 0.0
  %496 = vmatpush1.msra.mxu0 %v131
  %497 = vmatprep.subr.mxu0 0.0
  %498 = vmatpush1.msra.mxu0 %v132
  %499 = vmatprep.subr.mxu0 0.0
  %500 = vmatpush1.msra.mxu0 %v133
  %501 = vmatprep.subr.mxu0 0.0
  %502 = vmatpush1.msra.mxu0 %v134
  %503 = vmatprep.subr.mxu0 0.0
  %504 = vmatpush1.msra.mxu0 %v135
  %505 = vmatprep.subr.mxu0 0.0
  %506 = vmatpush1.msra.mxu0 %v136
  %507 = vmatprep.subr.mxu0 0.0
  %508 = vmatpush1.msra.mxu0 %v137
  %509 = vmatprep.mubr.f32.mxu0 %v31
  %510 = vmatmul.mubr.f32.gmra.mrb[0].mxu0 %v30
  %v511 = vpop.f32.mrb[0].mxu0
  %v512 = vadd.f32 %v442, %v511
  %v513 = vpop.f32.mrb[0].mxu0
  %514 = vdwg.mxu0
  %515 = vmatprep.subr.mxu0 0.0
  %516 = vmatpush1.msra.mxu0 %v138
  %517 = vmatprep.subr.mxu0 0.0
  %518 = vmatpush1.msra.mxu0 %v139
  %519 = vmatprep.subr.mxu0 0.0
  %520 = vmatpush1.msra.mxu0 %v140
  %521 = vmatprep.subr.mxu0 0.0
  %522 = vmatpush1.msra.mxu0 %v141
  %523 = vmatprep.subr.mxu0 0.0
  %524 = vmatpush1.msra.mxu0 %v142
  %525 = vmatprep.subr.mxu0 0.0
  %526 = vmatpush1.msra.mxu0 %v143
  %527 = vmatprep.subr.mxu0 0.0
  %528 = vmatpush1.msra.mxu0 %v144
  %529 = vmatprep.subr.mxu0 0.0
  %530 = vmatpush1.msra.mxu0 %v145
  %531 = vmatprep.subr.mxu0 0.0
  %532 = vmatpush1.msra.mxu0 %v146
  %533 = vmatprep.subr.mxu0 0.0
  %534 = vmatpush1.msra.mxu0 %v147
  %535 = vmatprep.subr.mxu0 0.0
  %536 = vmatpush1.msra.mxu0 %v148
  %537 = vmatprep.subr.mxu0 0.0
  %538 = vmatpush1.msra.mxu0 %v149
  %539 = vmatprep.subr.mxu0 0.0
  %540 = vmatpush1.msra.mxu0 %v150
  %541 = vmatprep.subr.mxu0 0.0
  %542 = vmatpush1.msra.mxu0 %v151
  %543 = vmatprep.subr.mxu0 0.0
  %544 = vmatpush1.msra.mxu0 %v152
  %545 = vmatprep.subr.mxu0 0.0
  %546 = vmatpush1.msra.mxu0 %v153
  %547 = vmatprep.subr.mxu0 0.0
  %548 = vmatpush1.msra.mxu0 %v154
  %549 = vmatprep.subr.mxu0 0.0
  %550 = vmatpush1.msra.mxu0 %v155
  %551 = vmatprep.subr.mxu0 0.0
  %552 = vmatpush1.msra.mxu0 %v156
  %553 = vmatprep.subr.mxu0 0.0
  %554 = vmatpush1.msra.mxu0 %v157
  %555 = vmatprep.subr.mxu0 0.0
  %556 = vmatpush1.msra.mxu0 %v158
  %557 = vmatprep.subr.mxu0 0.0
  %558 = vmatpush1.msra.mxu0 %v159
  %559 = vmatprep.subr.mxu0 0.0
  %560 = vmatpush1.msra.mxu0 %v160
  %561 = vmatprep.subr.mxu0 0.0
  %562 = vmatpush1.msra.mxu0 %v161
  %563 = vmatprep.subr.mxu0 0.0
  %564 = vmatpush1.msra.mxu0 %v162
  %565 = vmatprep.subr.mxu0 0.0
  %566 = vmatpush1.msra.mxu0 %v163
  %567 = vmatprep.subr.mxu0 0.0
  %568 = vmatpush1.msra.mxu0 %v164
  %569 = vmatprep.subr.mxu0 0.0
  %570 = vmatpush1.msra.mxu0 %v165
  %571 = vmatprep.subr.mxu0 0.0
  %572 = vmatpush1.msra.mxu0 %v166
  %573 = vmatprep.subr.mxu0 0.0
  %574 = vmatpush1.msra.mxu0 %v167
  %575 = vmatprep.subr.mxu0 0.0
  %576 = vmatpush1.msra.mxu0 %v168
  %577 = vmatprep.subr.mxu0 0.0
  %578 = vmatpush1.msra.mxu0 %v169
  %579 = vmatprep.mubr.f32.mxu0 %v33
  %580 = vmatmul.mubr.f32.gmra.mrb[0].mxu0 %v32
  %v581 = vpop.f32.mrb[0].mxu0
  %v582 = vadd.f32 %v512, %v581
  %v583 = vpop.f32.mrb[0].mxu0
  %584 = vdwg.mxu0
  %585 = vmatprep.subr.mxu0 0.0
  %586 = vmatpush1.msra.mxu0 %v170
  %587 = vmatprep.subr.mxu0 0.0
  %588 = vmatpush1.msra.mxu0 %v171
  %589 = vmatprep.subr.mxu0 0.0
  %590 = vmatpush1.msra.mxu0 %v172
  %591 = vmatprep.subr.mxu0 0.0
  %592 = vmatpush1.msra.mxu0 %v173
  %593 = vmatprep.subr.mxu0 0.0
  %594 = vmatpush1.msra.mxu0 %v174
  %595 = vmatprep.subr.mxu0 0.0
  %596 = vmatpush1.msra.mxu0 %v175
  %597 = vmatprep.subr.mxu0 0.0
  %598 = vmatpush1.msra.mxu0 %v176
  %599 = vmatprep.subr.mxu0 0.0
  %600 = vmatpush1.msra.mxu0 %v177
  %601 = vmatprep.subr.mxu0 0.0
  %602 = vmatpush1.msra.mxu0 %v178
  %603 = vmatprep.subr.mxu0 0.0
  %604 = vmatpush1.msra.mxu0 %v179
  %605 = vmatprep.subr.mxu0 0.0
  %606 = vmatpush1.msra.mxu0 %v180
  %607 = vmatprep.subr.mxu0 0.0
  %608 = vmatpush1.msra.mxu0 %v181
  %609 = vmatprep.subr.mxu0 0.0
  %610 = vmatpush1.msra.mxu0 %v182
  %611 = vmatprep.subr.mxu0 0.0
  %612 = vmatpush1.msra.mxu0 %v183
  %613 = vmatprep.subr.mxu0 0.0
  %614 = vmatpush1.msra.mxu0 %v184
  %615 = vmatprep.subr.mxu0 0.0
  %616 = vmatpush1.msra.mxu0 %v185
  %617 = vmatprep.subr.mxu0 0.0
  %618 = vmatpush1.msra.mxu0 %v186
  %619 = vmatprep.subr.mxu0 0.0
  %620 = vmatpush1.msra.mxu0 %v187
  %621 = vmatprep.subr.mxu0 0.0
  %622 = vmatpush1.msra.mxu0 %v188
  %623 = vmatprep.subr.mxu0 0.0
  %624 = vmatpush1.msra.mxu0 %v189
  %625 = vmatprep.subr.mxu0 0.0
  %626 = vmatpush1.msra.mxu0 %v190
  %627 = vmatprep.subr.mxu0 0.0
  %628 = vmatpush1.msra.mxu0 %v191
  %629 = vmatprep.subr.mxu0 0.0
  %630 = vmatpush1.msra.mxu0 %v192
  %631 = vmatprep.subr.mxu0 0.0
  %632 = vmatpush1.msra.mxu0 %v193
  %633 = vmatprep.subr.mxu0 0.0
  %634 = vmatpush1.msra.mxu0 %v194
  %635 = vmatprep.subr.mxu0 0.0
  %636 = vmatpush1.msra.mxu0 %v195
  %637 = vmatprep.subr.mxu0 0.0
  %638 = vmatpush1.msra.mxu0 %v196
  %639 = vmatprep.subr.mxu0 0.0
  %640 = vmatpush1.msra.mxu0 %v197
  %641 = vmatprep.subr.mxu0 0.0
  %642 = vmatpush1.msra.mxu0 %v198
  %643 = vmatprep.subr.mxu0 0.0
  %644 = vmatpush1.msra.mxu0 %v199
  %645 = vmatprep.subr.mxu0 0.0
  %646 = vmatpush1.msra.mxu0 %v200
  %647 = vmatprep.subr.mxu0 0.0
  %648 = vmatpush1.msra.mxu0 %v201
  %649 = vmatprep.mubr.f32.mxu0 %v35
  %650 = vmatmul.mubr.f32.gmra.mrb[0].mxu0 %v34
  %v651 = vpop.f32.mrb[0].mxu0
  %v652 = vadd.f32 %v582, %v651
  %v653 = vpop.f32.mrb[0].mxu0
  %654 = vdwg.mxu0
  %655 = vmatprep.subr.mxu0 0.0
  %656 = vmatpush1.msra.mxu0 %v202
  %657 = vmatprep.subr.mxu0 0.0
  %658 = vmatpush1.msra.mxu0 %v203
  %659 = vmatprep.subr.mxu0 0.0
  %660 = vmatpush1.msra.mxu0 %v204
  %661 = vmatprep.subr.mxu0 0.0
  %662 = vmatpush1.msra.mxu0 %v205
  %663 = vmatprep.subr.mxu0 0.0
  %664 = vmatpush1.msra.mxu0 %v206
  %665 = vmatprep.subr.mxu0 0.0
  %666 = vmatpush1.msra.mxu0 %v207
  %667 = vmatprep.subr.mxu0 0.0
  %668 = vmatpush1.msra.mxu0 %v208
  %669 = vmatprep.subr.mxu0 0.0
  %670 = vmatpush1.msra.mxu0 %v209
  %671 = vmatprep.subr.mxu0 0.0
  %672 = vmatpush1.msra.mxu0 %v210
  %673 = vmatprep.subr.mxu0 0.0
  %674 = vmatpush1.msra.mxu0 %v211
  %675 = vmatprep.subr.mxu0 0.0
  %676 = vmatpush1.msra.mxu0 %v212
  %677 = vmatprep.subr.mxu0 0.0
  %678 = vmatpush1.msra.mxu0 %v213
  %679 = vmatprep.subr.mxu0 0.0
  %680 = vmatpush1.msra.mxu0 %v214
  %681 = vmatprep.subr.mxu0 0.0
  %682 = vmatpush1.msra.mxu0 %v215
  %683 = vmatprep.subr.mxu0 0.0
  %684 = vmatpush1.msra.mxu0 %v216
  %685 = vmatprep.subr.mxu0 0.0
  %686 = vmatpush1.msra.mxu0 %v217
  %687 = vmatprep.subr.mxu0 0.0
  %688 = vmatpush1.msra.mxu0 %v218
  %689 = vmatprep.subr.mxu0 0.0
  %690 = vmatpush1.msra.mxu0 %v219
  %691 = vmatprep.subr.mxu0 0.0
  %692 = vmatpush1.msra.mxu0 %v220
  %693 = vmatprep.subr.mxu0 0.0
  %694 = vmatpush1.msra.mxu0 %v221
  %695 = vmatprep.subr.mxu0 0.0
  %696 = vmatpush1.msra.mxu0 %v222
  %697 = vmatprep.subr.mxu0 0.0
  %698 = vmatpush1.msra.mxu0 %v223
  %699 = vmatprep.subr.mxu0 0.0
  %700 = vmatpush1.msra.mxu0 %v224
  %701 = vmatprep.subr.mxu0 0.0
  %702 = vmatpush1.msra.mxu0 %v225
  %703 = vmatprep.subr.mxu0 0.0
  %704 = vmatpush1.msra.mxu0 %v226
  %705 = vmatprep.subr.mxu0 0.0
  %706 = vmatpush1.msra.mxu0 %v227
  %707 = vmatprep.subr.mxu0 0.0
  %708 = vmatpush1.msra.mxu0 %v228
  %709 = vmatprep.subr.mxu0 0.0
  %710 = vmatpush1.msra.mxu0 %v229
  %711 = vmatprep.subr.mxu0 0.0
  %712 = vmatpush1.msra.mxu0 %v230
  %713 = vmatprep.subr.mxu0 0.0
  %714 = vmatpush1.msra.mxu0 %v231
  %715 = vmatprep.subr.mxu0 0.0
  %716 = vmatpush1.msra.mxu0 %v232
  %717 = vmatprep.subr.mxu0 0.0
  %718 = vmatpush1.msra.mxu0 %v233
  %719 = vmatprep.mubr.f32.mxu0 %v37
  %720 = vmatmul.mubr.f32.gmra.mrb[0].mxu0 %v36
  %v721 = vpop.f32.mrb[0].mxu0
  %v722 = vadd.f32 %v652, %v721
  %v723 = vpop.f32.mrb[0].mxu0
  %724 = vdwg.mxu0
  %725 = vmatprep.subr.mxu0 0.0
  %726 = vmatpush1.msra.mxu0 %v234
  %727 = vmatprep.subr.mxu0 0.0
  %728 = vmatpush1.msra.mxu0 %v235
  %729 = vmatprep.subr.mxu0 0.0
  %730 = vmatpush1.msra.mxu0 %v236
  %731 = vmatprep.subr.mxu0 0.0
  %732 = vmatpush1.msra.mxu0 %v237
  %733 = vmatprep.subr.mxu0 0.0
  %734 = vmatpush1.msra.mxu0 %v238
  %735 = vmatprep.subr.mxu0 0.0
  %736 = vmatpush1.msra.mxu0 %v239
  %737 = vmatprep.subr.mxu0 0.0
  %738 = vmatpush1.msra.mxu0 %v240
  %739 = vmatprep.subr.mxu0 0.0
  %740 = vmatpush1.msra.mxu0 %v241
  %741 = vmatprep.subr.mxu0 0.0
  %742 = vmatpush1.msra.mxu0 %v242
  %743 = vmatprep.subr.mxu0 0.0
  %744 = vmatpush1.msra.mxu0 %v243
  %745 = vmatprep.subr.mxu0 0.0
  %746 = vmatpush1.msra.mxu0 %v244
  %747 = vmatprep.subr.mxu0 0.0
  %748 = vmatpush1.msra.mxu0 %v245
  %749 = vmatprep.subr.mxu0 0.0
  %750 = vmatpush1.msra.mxu0 %v246
  %751 = vmatprep.subr.mxu0 0.0
  %752 = vmatpush1.msra.mxu0 %v247
  %753 = vmatprep.subr.mxu0 0.0
  %754 = vmatpush1.msra.mxu0 %v248
  %755 = vmatprep.subr.mxu0 0.0
  %756 = vmatpush1.msra.mxu0 %v249
  %757 = vmatprep.subr.mxu0 0.0
  %758 = vmatpush1.msra.mxu0 %v250
  %759 = vmatprep.subr.mxu0 0.0
  %760 = vmatpush1.msra.mxu0 %v251
  %761 = vmatprep.subr.mxu0 0.0
  %762 = vmatpush1.msra.mxu0 %v252
  %763 = vmatprep.subr.mxu0 0.0
  %764 = vmatpush1.msra.mxu0 %v253
  %765 = vmatprep.subr.mxu0 0.0
  %766 = vmatpush1.msra.mxu0 %v254
  %767 = vmatprep.subr.mxu0 0.0
  %768 = vmatpush1.msra.mxu0 %v255
  %769 = vmatprep.subr.mxu0 0.0
  %770 = vmatpush1.msra.mxu0 %v256
  %771 = vmatprep.subr.mxu0 0.0
  %772 = vmatpush1.msra.mxu0 %v257
  %773 = vmatprep.subr.mxu0 0.0
  %774 = vmatpush1.msra.mxu0 %v258
  %775 = vmatprep.subr.mxu0 0.0
  %776 = vmatpush1.msra.mxu0 %v259
  %777 = vmatprep.subr.mxu0 0.0
  %778 = vmatpush1.msra.mxu0 %v260
  %779 = vmatprep.subr.mxu0 0.0
  %780 = vmatpush1.msra.mxu0 %v261
  %781 = vmatprep.subr.mxu0 0.0
  %782 = vmatpush1.msra.mxu0 %v262
  %783 = vmatprep.subr.mxu0 0.0
  %784 = vmatpush1.msra.mxu0 %v263
  %785 = vmatprep.subr.mxu0 0.0
  %786 = vmatpush1.msra.mxu0 %v264
  %787 = vmatprep.subr.mxu0 0.0
  %788 = vmatpush1.msra.mxu0 %v265
  %789 = vmatprep.mubr.f32.mxu0 %v39
  %790 = vmatmul.mubr.f32.gmra.mrb[0].mxu0 %v38
  %v791 = vpop.f32.mrb[0].mxu0
  %v792 = vadd.f32 %v722, %v791
  %v793 = vpop.f32.mrb[0].mxu0
  %794 = vdwg.mxu0
  %795 = vmatprep.subr.mxu0 0.0
  %796 = vmatpush1.msra.mxu0 %v266
  %797 = vmatprep.subr.mxu0 0.0
  %798 = vmatpush1.msra.mxu0 %v267
  %799 = vmatprep.subr.mxu0 0.0
  %800 = vmatpush1.msra.mxu0 %v268
  %801 = vmatprep.subr.mxu0 0.0
  %802 = vmatpush1.msra.mxu0 %v269
  %803 = vmatprep.subr.mxu0 0.0
  %804 = vmatpush1.msra.mxu0 %v270
  %805 = vmatprep.subr.mxu0 0.0
  %806 = vmatpush1.msra.mxu0 %v271
  %807 = vmatprep.subr.mxu0 0.0
  %808 = vmatpush1.msra.mxu0 %v272
  %809 = vmatprep.subr.mxu0 0.0
  %810 = vmatpush1.msra.mxu0 %v273
  %811 = vmatprep.subr.mxu0 0.0
  %812 = vmatpush1.msra.mxu0 %v274
  %813 = vmatprep.subr.mxu0 0.0
  %814 = vmatpush1.msra.mxu0 %v275
  %815 = vmatprep.subr.mxu0 0.0
  %816 = vmatpush1.msra.mxu0 %v276
  %817 = vmatprep.subr.mxu0 0.0
  %818 = vmatpush1.msra.mxu0 %v277
  %819 = vmatprep.subr.mxu0 0.0
  %820 = vmatpush1.msra.mxu0 %v278
  %821 = vmatprep.subr.mxu0 0.0
  %822 = vmatpush1.msra.mxu0 %v279
  %823 = vmatprep.subr.mxu0 0.0
  %824 = vmatpush1.msra.mxu0 %v280
  %825 = vmatprep.subr.mxu0 0.0
  %826 = vmatpush1.msra.mxu0 %v281
  %827 = vmatprep.subr.mxu0 0.0
  %828 = vmatpush1.msra.mxu0 %v282
  %829 = vmatprep.subr.mxu0 0.0
  %830 = vmatpush1.msra.mxu0 %v283
  %831 = vmatprep.subr.mxu0 0.0
  %832 = vmatpush1.msra.mxu0 %v284
  %833 = vmatprep.subr.mxu0 0.0
  %834 = vmatpush1.msra.mxu0 %v285
  %835 = vmatprep.subr.mxu0 0.0
  %836 = vmatpush1.msra.mxu0 %v286
  %837 = vmatprep.subr.mxu0 0.0
  %838 = vmatpush1.msra.mxu0 %v287
  %839 = vmatprep.subr.mxu0 0.0
  %840 = vmatpush1.msra.mxu0 %v288
  %841 = vmatprep.subr.mxu0 0.0
  %842 = vmatpush1.msra.mxu0 %v289
  %843 = vmatprep.subr.mxu0 0.0
  %844 = vmatpush1.msra.mxu0 %v290
  %845 = vmatprep.subr.mxu0 0.0
  %846 = vmatpush1.msra.mxu0 %v291
  %847 = vmatprep.subr.mxu0 0.0
  %848 = vmatpush1.msra.mxu0 %v292
  %849 = vmatprep.subr.mxu0 0.0
  %850 = vmatpush1.msra.mxu0 %v293
  %851 = vmatprep.subr.mxu0 0.0
  %852 = vmatpush1.msra.mxu0 %v294
  %853 = vmatprep.subr.mxu0 0.0
  %854 = vmatpush1.msra.mxu0 %v295
  %855 = vmatprep.subr.mxu0 0.0
  %856 = vmatpush1.msra.mxu0 %v296
  %857 = vmatprep.subr.mxu0 0.0
  %858 = vmatpush1.msra.mxu0 %v297
  %859 = vmatprep.mubr.f32.mxu0 %v41
  %860 = vmatmul.mubr.f32.gmra.mrb[0].mxu0 %v40
  %v861 = vpop.f32.mrb[0].mxu0
  %v862 = vadd.f32 %v792, %v861
  %v863 = vpop.f32.mrb[0].mxu0
  %864 = vdwg.mxu0
  %v865 = vmax.f32 %v862, 0.0
  %v866 = vld [vmem:[%s3] sm:$0xff]
  %v867 = vld [vmem:[%s3 + $0x8] sm:$0xff]
  %v868 = vld [vmem:[%s3 + $0x10] sm:$0xff]
  %v869 = vld [vmem:[%s3 + $0x18] sm:$0xff]
  %v870 = vld [vmem:[%s3 + $0x20] sm:$0xff]
  %v871 = vld [vmem:[%s3 + $0x28] sm:$0xff]
  %v872 = vld [vmem:[%s3 + $0x30] sm:$0xff]
  %v873 = vld [vmem:[%s3 + $0x38] sm:$0xff]
  %v874 = vld [vmem:[%s4] sm:$0x1]
  %v876 = vlaneseq
  %v877 = vshrl.u32 %v876, 7
  %v878 = vsub.s32 0, %v877
  %v879 = vrot.slane %v874, %v878
  %vm881 = vcmask 523264
  %v883 = vsel %vm881, %v865, 0
  %885 = vmatprep.subr.mxu0 0.0
  %886 = vmatpush1.msra.mxu0 %v866
  %887 = vmatprep.subr.mxu0 0.0
  %888 = vmatpush1.msra.mxu0 %v867
  %889 = vmatprep.subr.mxu0 0.0
  %890 = vmatpush1.msra.mxu0 %v868
  %891 = vmatprep.subr.mxu0 0.0
  %892 = vmatpush1.msra.mxu0 %v869
  %893 = vmatprep.subr.mxu0 0.0
  %894 = vmatpush1.msra.mxu0 %v870
  %895 = vmatprep.subr.mxu0 0.0
  %896 = vmatpush1.msra.mxu0 %v871
  %897 = vmatprep.subr.mxu0 0.0
  %898 = vmatpush1.msra.mxu0 %v872
  %899 = vmatprep.subr.mxu0 0.0
  %900 = vmatpush1.msra.mxu0 %v873
  %901 = vmatprep.subr.mxu0 0.0
  %902 = vmatpush1.msra.mxu0 0.0
  %903 = vmatprep.subr.mxu0 0.0
  %904 = vmatpush1.msra.mxu0 0.0
  %905 = vmatprep.subr.mxu0 0.0
  %906 = vmatpush1.msra.mxu0 0.0
  %907 = vmatprep.subr.mxu0 0.0
  %908 = vmatpush1.msra.mxu0 0.0
  %909 = vmatprep.subr.mxu0 0.0
  %910 = vmatpush1.msra.mxu0 0.0
  %911 = vmatprep.subr.mxu0 0.0
  %912 = vmatpush1.msra.mxu0 0.0
  %913 = vmatprep.subr.mxu0 0.0
  %914 = vmatpush1.msra.mxu0 0.0
  %915 = vmatprep.subr.mxu0 0.0
  %916 = vmatpush1.msra.mxu0 0.0
  %917 = vmatprep.subr.mxu0 0.0
  %918 = vmatpush1.msra.mxu0 0.0
  %919 = vmatprep.subr.mxu0 0.0
  %920 = vmatpush1.msra.mxu0 0.0
  %921 = vmatprep.subr.mxu0 0.0
  %922 = vmatpush1.msra.mxu0 0.0
  %923 = vmatprep.subr.mxu0 0.0
  %924 = vmatpush1.msra.mxu0 0.0
  %925 = vmatprep.subr.mxu0 0.0
  %926 = vmatpush1.msra.mxu0 0.0
  %927 = vmatprep.subr.mxu0 0.0
  %928 = vmatpush1.msra.mxu0 0.0
  %929 = vmatprep.subr.mxu0 0.0
  %930 = vmatpush1.msra.mxu0 0.0
  %931 = vmatprep.subr.mxu0 0.0
  %932 = vmatpush1.msra.mxu0 0.0
  %933 = vmatprep.subr.mxu0 0.0
  %934 = vmatpush1.msra.mxu0 0.0
  %935 = vmatprep.subr.mxu0 0.0
  %936 = vmatpush1.msra.mxu0 0.0
  %937 = vmatprep.subr.mxu0 0.0
  %938 = vmatpush1.msra.mxu0 0.0
  %939 = vmatprep.subr.mxu0 0.0
  %940 = vmatpush1.msra.mxu0 0.0
  %941 = vmatprep.subr.mxu0 0.0
  %942 = vmatpush1.msra.mxu0 0.0
  %943 = vmatprep.subr.mxu0 0.0
  %944 = vmatpush1.msra.mxu0 0.0
  %945 = vmatprep.subr.mxu0 0.0
  %946 = vmatpush1.msra.mxu0 0.0
  %947 = vmatprep.subr.mxu0 0.0
  %948 = vmatpush1.msra.mxu0 0.0
  %949 = vmatprep.mubr.f32.mxu0 0.0
  %950 = vmatmul.mubr.f32.gmra.mrb[0].mxu0 %v883
  %v951 = vpop.f32.mrb[0].mxu0
  %v952 = vadd.f32 %v879, %v951
  %v953 = vpop.f32.mrb[0].mxu0
  %954 = vdwg.mxu0
  %v955 = vmax.f32 %v952, 0.0
  %v956 = vld [vmem:[%s5] sm:$0xff]
  %v957 = vld [vmem:[%s5 + $0x8] sm:$0xff]
  %v958 = vld [vmem:[%s5 + $0x10] sm:$0xff]
  %v959 = vld [vmem:[%s5 + $0x18] sm:$0xff]
  %v960 = vld [vmem:[%s5 + $0x20] sm:$0xff]
  %v961 = vld [vmem:[%s5 + $0x28] sm:$0xff]
  %v962 = vld [vmem:[%s5 + $0x30] sm:$0xff]
  %v963 = vld [vmem:[%s5 + $0x38] sm:$0xff]
  %v964 = vld [vmem:[%s5 + $0x40] sm:$0xff]
  %v965 = vld [vmem:[%s5 + $0x48] sm:$0xff]
  %v966 = vld [vmem:[%s5 + $0x50] sm:$0xff]
  %v967 = vld [vmem:[%s5 + $0x58] sm:$0xff]
  %v968 = vld [vmem:[%s5 + $0x60] sm:$0xff]
  %v969 = vld [vmem:[%s5 + $0x68] sm:$0xff]
  %v970 = vld [vmem:[%s5 + $0x70] sm:$0xff]
  %v971 = vld [vmem:[%s5 + $0x78] sm:$0xff]
  %v972 = vld [vmem:[%s5 + $0x80] sm:$0xff]
  %v973 = vld [vmem:[%s5 + $0x88] sm:$0xff]
  %v974 = vld [vmem:[%s5 + $0x90] sm:$0xff]
  %v975 = vld [vmem:[%s5 + $0x98] sm:$0xff]
  %v976 = vld [vmem:[%s5 + $0xa0] sm:$0xff]
  %v977 = vld [vmem:[%s5 + $0xa8] sm:$0xff]
  %v978 = vld [vmem:[%s5 + $0xb0] sm:$0xff]
  %v979 = vld [vmem:[%s5 + $0xb8] sm:$0xff]
  %v980 = vld [vmem:[%s5 + $0xc0] sm:$0xff]
  %v981 = vld [vmem:[%s5 + $0xc8] sm:$0xff]
  %v982 = vld [vmem:[%s5 + $0xd0] sm:$0xff]
  %v983 = vld [vmem:[%s5 + $0xd8] sm:$0xff]
  %v984 = vld [vmem:[%s5 + $0xe0] sm:$0xff]
  %v985 = vld [vmem:[%s5 + $0xe8] sm:$0xff]
  %v986 = vld [vmem:[%s5 + $0xf0] sm:$0xff]
  %v987 = vld [vmem:[%s5 + $0xf8] sm:$0xff]
  %v988 = vld [vmem:[%s5 + $0x100] sm:$0xff]
  %v989 = vld [vmem:[%s5 + $0x108] sm:$0xff]
  %v990 = vld [vmem:[%s5 + $0x110] sm:$0xff]
  %v991 = vld [vmem:[%s5 + $0x118] sm:$0xff]
  %v992 = vld [vmem:[%s5 + $0x120] sm:$0xff]
  %v993 = vld [vmem:[%s5 + $0x128] sm:$0xff]
  %v994 = vld [vmem:[%s5 + $0x130] sm:$0xff]
  %v995 = vld [vmem:[%s5 + $0x138] sm:$0xff]
  %v996 = vld [vmem:[%s5 + $0x140] sm:$0xff]
  %v997 = vld [vmem:[%s5 + $0x148] sm:$0xff]
  %v998 = vld [vmem:[%s5 + $0x150] sm:$0xff]
  %v999 = vld [vmem:[%s5 + $0x158] sm:$0xff]
  %v1000 = vld [vmem:[%s5 + $0x160] sm:$0xff]
  %v1001 = vld [vmem:[%s5 + $0x168] sm:$0xff]
  %v1002 = vld [vmem:[%s5 + $0x170] sm:$0xff]
  %v1003 = vld [vmem:[%s5 + $0x178] sm:$0xff]
  %v1004 = vld [vmem:[%s5 + $0x180] sm:$0xff]
  %v1005 = vld [vmem:[%s5 + $0x188] sm:$0xff]
  %v1006 = vld [vmem:[%s5 + $0x190] sm:$0xff]
  %v1007 = vld [vmem:[%s5 + $0x198] sm:$0xff]
  %v1008 = vld [vmem:[%s5 + $0x1a0] sm:$0xff]
  %v1009 = vld [vmem:[%s5 + $0x1a8] sm:$0xff]
  %v1010 = vld [vmem:[%s5 + $0x1b0] sm:$0xff]
  %v1011 = vld [vmem:[%s5 + $0x1b8] sm:$0xff]
  %v1012 = vld [vmem:[%s5 + $0x1c0] sm:$0xff]
  %v1013 = vld [vmem:[%s5 + $0x1c8] sm:$0xff]
  %v1014 = vld [vmem:[%s5 + $0x1d0] sm:$0xff]
  %v1015 = vld [vmem:[%s5 + $0x1d8] sm:$0xff]
  %v1016 = vld [vmem:[%s5 + $0x1e0] sm:$0xff]
  %v1017 = vld [vmem:[%s5 + $0x1e8] sm:$0xff]
  %v1018 = vld [vmem:[%s5 + $0x1f0] sm:$0xff]
  %v1019 = vld [vmem:[%s5 + $0x1f8] sm:$0xff]
  %v1020 = vld [vmem:[%s5 + $0x200] sm:$0xff]
  %v1021 = vld [vmem:[%s5 + $0x208] sm:$0xff]
  %v1022 = vld [vmem:[%s5 + $0x210] sm:$0xff]
  %v1023 = vld [vmem:[%s5 + $0x218] sm:$0xff]
  %v1024 = vld [vmem:[%s5 + $0x220] sm:$0xff]
  %v1025 = vld [vmem:[%s5 + $0x228] sm:$0xff]
  %v1026 = vld [vmem:[%s5 + $0x230] sm:$0xff]
  %v1027 = vld [vmem:[%s5 + $0x238] sm:$0xff]
  %v1028 = vld [vmem:[%s5 + $0x240] sm:$0xff]
  %v1029 = vld [vmem:[%s5 + $0x248] sm:$0xff]
  %v1030 = vld [vmem:[%s5 + $0x250] sm:$0xff]
  %v1031 = vld [vmem:[%s5 + $0x258] sm:$0xff]
  %v1032 = vld [vmem:[%s5 + $0x260] sm:$0xff]
  %v1033 = vld [vmem:[%s5 + $0x268] sm:$0xff]
  %v1034 = vld [vmem:[%s5 + $0x270] sm:$0xff]
  %v1035 = vld [vmem:[%s5 + $0x278] sm:$0xff]
  %v1036 = vld [vmem:[%s5 + $0x280] sm:$0xff]
  %v1037 = vld [vmem:[%s5 + $0x288] sm:$0xff]
  %v1038 = vld [vmem:[%s5 + $0x290] sm:$0xff]
  %v1039 = vld [vmem:[%s5 + $0x298] sm:$0xff]
  %v1040 = vld [vmem:[%s5 + $0x2a0] sm:$0xff]
  %v1041 = vld [vmem:[%s5 + $0x2a8] sm:$0xff]
  %v1042 = vld [vmem:[%s5 + $0x2b0] sm:$0xff]
  %v1043 = vld [vmem:[%s5 + $0x2b8] sm:$0xff]
  %v1044 = vld [vmem:[%s5 + $0x2c0] sm:$0xff]
  %v1045 = vld [vmem:[%s5 + $0x2c8] sm:$0xff]
  %v1046 = vld [vmem:[%s5 + $0x2d0] sm:$0xff]
  %v1047 = vld [vmem:[%s5 + $0x2d8] sm:$0xff]
  %v1048 = vld [vmem:[%s5 + $0x2e0] sm:$0xff]
  %v1049 = vld [vmem:[%s5 + $0x2e8] sm:$0xff]
  %v1050 = vld [vmem:[%s5 + $0x2f0] sm:$0xff]
  %v1051 = vld [vmem:[%s5 + $0x2f8] sm:$0xff]
  %v1052 = vld [vmem:[%s5 + $0x300] sm:$0xff]
  %v1053 = vld [vmem:[%s5 + $0x308] sm:$0xff]
  %v1054 = vld [vmem:[%s5 + $0x310] sm:$0xff]
  %v1055 = vld [vmem:[%s5 + $0x318] sm:$0xff]
  %v1056 = vld [vmem:[%s5 + $0x320] sm:$0xff]
  %v1057 = vld [vmem:[%s5 + $0x328] sm:$0xff]
  %v1058 = vld [vmem:[%s5 + $0x330] sm:$0xff]
  %v1059 = vld [vmem:[%s5 + $0x338] sm:$0xff]
  %v1060 = vld [vmem:[%s5 + $0x340] sm:$0xff]
  %v1061 = vld [vmem:[%s5 + $0x348] sm:$0xff]
  %v1062 = vld [vmem:[%s5 + $0x350] sm:$0xff]
  %v1063 = vld [vmem:[%s5 + $0x358] sm:$0xff]
  %v1064 = vld [vmem:[%s5 + $0x360] sm:$0xff]
  %v1065 = vld [vmem:[%s5 + $0x368] sm:$0xff]
  %v1066 = vld [vmem:[%s5 + $0x370] sm:$0xff]
  %v1067 = vld [vmem:[%s5 + $0x378] sm:$0xff]
  %v1068 = vld [vmem:[%s5 + $0x380] sm:$0xff]
  %v1069 = vld [vmem:[%s5 + $0x388] sm:$0xff]
  %v1070 = vld [vmem:[%s5 + $0x390] sm:$0xff]
  %v1071 = vld [vmem:[%s5 + $0x398] sm:$0xff]
  %v1072 = vld [vmem:[%s5 + $0x3a0] sm:$0xff]
  %v1073 = vld [vmem:[%s5 + $0x3a8] sm:$0xff]
  %v1074 = vld [vmem:[%s5 + $0x3b0] sm:$0xff]
  %v1075 = vld [vmem:[%s5 + $0x3b8] sm:$0xff]
  %v1076 = vld [vmem:[%s5 + $0x3c0] sm:$0xff]
  %v1077 = vld [vmem:[%s5 + $0x3c8] sm:$0xff]
  %v1078 = vld [vmem:[%s5 + $0x3d0] sm:$0xff]
  %v1079 = vld [vmem:[%s5 + $0x3d8] sm:$0xff]
  %v1080 = vld [vmem:[%s5 + $0x3e0] sm:$0xff]
  %v1081 = vld [vmem:[%s5 + $0x3e8] sm:$0xff]
  %v1082 = vld [vmem:[%s5 + $0x3f0] sm:$0xff]
  %v1083 = vld [vmem:[%s5 + $0x3f8] sm:$0xff]
  %v1084 = vld [vmem:[%s6] sm:$0xff]
  %v1085 = vld [vmem:[%s6 + $0x8] sm:$0xff]
  %v1088 = vlaneseq
  %v1089 = vshrl.u32 %v1088, 7
  %v1090 = vsub.s32 0, %v1089
  %v1091 = vrot.slane %v1084, %v1090
  %v1092 = vlaneseq
  %v1093 = vshrl.u32 %v1092, 7
  %v1094 = vsub.s32 1, %v1093
  %v1095 = vrot.slane %v1084, %v1094
  %v1096 = vlaneseq
  %v1097 = vshrl.u32 %v1096, 7
  %v1098 = vsub.s32 2, %v1097
  %v1099 = vrot.slane %v1084, %v1098
  %v1100 = vlaneseq
  %v1101 = vshrl.u32 %v1100, 7
  %v1102 = vsub.s32 3, %v1101
  %v1103 = vrot.slane %v1084, %v1102
  %v1104 = vlaneseq
  %v1105 = vshrl.u32 %v1104, 7
  %v1106 = vsub.s32 4, %v1105
  %v1107 = vrot.slane %v1084, %v1106
  %v1108 = vlaneseq
  %v1109 = vshrl.u32 %v1108, 7
  %v1110 = vsub.s32 5, %v1109
  %v1111 = vrot.slane %v1084, %v1110
  %v1112 = vlaneseq
  %v1113 = vshrl.u32 %v1112, 7
  %v1114 = vsub.s32 6, %v1113
  %v1115 = vrot.slane %v1084, %v1114
  %v1116 = vlaneseq
  %v1117 = vshrl.u32 %v1116, 7
  %v1118 = vsub.s32 7, %v1117
  %v1119 = vrot.slane %v1084, %v1118
  %v1120 = vlaneseq
  %v1121 = vshrl.u32 %v1120, 7
  %v1122 = vsub.s32 0, %v1121
  %v1123 = vrot.slane %v1085, %v1122
  %v1124 = vlaneseq
  %v1125 = vshrl.u32 %v1124, 7
  %v1126 = vsub.s32 1, %v1125
  %v1127 = vrot.slane %v1085, %v1126
  %v1128 = vlaneseq
  %v1129 = vshrl.u32 %v1128, 7
  %v1130 = vsub.s32 2, %v1129
  %v1131 = vrot.slane %v1085, %v1130
  %v1132 = vlaneseq
  %v1133 = vshrl.u32 %v1132, 7
  %v1134 = vsub.s32 3, %v1133
  %v1135 = vrot.slane %v1085, %v1134
  %v1136 = vlaneseq
  %v1137 = vshrl.u32 %v1136, 7
  %v1138 = vsub.s32 4, %v1137
  %v1139 = vrot.slane %v1085, %v1138
  %v1140 = vlaneseq
  %v1141 = vshrl.u32 %v1140, 7
  %v1142 = vsub.s32 5, %v1141
  %v1143 = vrot.slane %v1085, %v1142
  %v1144 = vlaneseq
  %v1145 = vshrl.u32 %v1144, 7
  %v1146 = vsub.s32 6, %v1145
  %v1147 = vrot.slane %v1085, %v1146
  %v1148 = vlaneseq
  %v1149 = vshrl.u32 %v1148, 7
  %v1150 = vsub.s32 7, %v1149
  %v1151 = vrot.slane %v1085, %v1150
  %v1169 = vsel %vm881, %v955, 0
  %1171 = vmatprep.subr.mxu0 %v957
  %1172 = vmatpush1.msra.mxu0 %v956
  %1173 = vmatprep.subr.mxu0 %v973
  %1174 = vmatpush1.msra.mxu0 %v972
  %1175 = vmatprep.subr.mxu0 %v989
  %1176 = vmatpush1.msra.mxu0 %v988
  %1177 = vmatprep.subr.mxu0 %v1005
  %1178 = vmatpush1.msra.mxu0 %v1004
  %1179 = vmatprep.subr.mxu0 %v1021
  %1180 = vmatpush1.msra.mxu0 %v1020
  %1181 = vmatprep.subr.mxu0 %v1037
  %1182 = vmatpush1.msra.mxu0 %v1036
  %1183 = vmatprep.subr.mxu0 %v1053
  %1184 = vmatpush1.msra.mxu0 %v1052
  %1185 = vmatprep.subr.mxu0 %v1069
  %1186 = vmatpush1.msra.mxu0 %v1068
  %1187 = vmatprep.subr.mxu0 0.0
  %1188 = vmatpush1.msra.mxu0 0.0
  %1189 = vmatprep.subr.mxu0 0.0
  %1190 = vmatpush1.msra.mxu0 0.0
  %1191 = vmatprep.subr.mxu0 0.0
  %1192 = vmatpush1.msra.mxu0 0.0
  %1193 = vmatprep.subr.mxu0 0.0
  %1194 = vmatpush1.msra.mxu0 0.0
  %1195 = vmatprep.subr.mxu0 0.0
  %1196 = vmatpush1.msra.mxu0 0.0
  %1197 = vmatprep.subr.mxu0 0.0
  %1198 = vmatpush1.msra.mxu0 0.0
  %1199 = vmatprep.subr.mxu0 0.0
  %1200 = vmatpush1.msra.mxu0 0.0
  %1201 = vmatprep.subr.mxu0 0.0
  %1202 = vmatpush1.msra.mxu0 0.0
  %1203 = vmatprep.subr.mxu0 0.0
  %1204 = vmatpush1.msra.mxu0 0.0
  %1205 = vmatprep.subr.mxu0 0.0
  %1206 = vmatpush1.msra.mxu0 0.0
  %1207 = vmatprep.subr.mxu0 0.0
  %1208 = vmatpush1.msra.mxu0 0.0
  %1209 = vmatprep.subr.mxu0 0.0
  %1210 = vmatpush1.msra.mxu0 0.0
  %1211 = vmatprep.subr.mxu0 0.0
  %1212 = vmatpush1.msra.mxu0 0.0
  %1213 = vmatprep.subr.mxu0 0.0
  %1214 = vmatpush1.msra.mxu0 0.0
  %1215 = vmatprep.subr.mxu0 0.0
  %1216 = vmatpush1.msra.mxu0 0.0
  %1217 = vmatprep.subr.mxu0 0.0
  %1218 = vmatpush1.msra.mxu0 0.0
  %1219 = vmatprep.subr.mxu0 0.0
  %1220 = vmatpush1.msra.mxu0 0.0
  %1221 = vmatprep.subr.mxu0 0.0
  %1222 = vmatpush1.msra.mxu0 0.0
  %1223 = vmatprep.subr.mxu0 0.0
  %1224 = vmatpush1.msra.mxu0 0.0
  %1225 = vmatprep.subr.mxu0 0.0
  %1226 = vmatpush1.msra.mxu0 0.0
  %1227 = vmatprep.subr.mxu0 0.0
  %1228 = vmatpush1.msra.mxu0 0.0
  %1229 = vmatprep.subr.mxu0 0.0
  %1230 = vmatpush1.msra.mxu0 0.0
  %1231 = vmatprep.subr.mxu0 0.0
  %1232 = vmatpush1.msra.mxu0 0.0
  %1233 = vmatprep.subr.mxu0 0.0
  %1234 = vmatpush1.msra.mxu0 0.0
  %1235 = vmatprep.mubr.f32.mxu0 0.0
  %1236 = vmatmul.mubr.f32.gmra.mrb[0].mxu0 %v1169
  %v1237 = vpop.f32.mrb[0].mxu0
  %v1238 = vadd.f32 %v1091, %v1237
  %v1239 = vpop.f32.mrb[0].mxu0
  %v1240 = vadd.f32 %v1095, %v1239
  %1241 = vdwg.mxu0
  %1242 = vmatprep.subr.mxu0 %v959
  %1243 = vmatpush1.msra.mxu0 %v958
  %1244 = vmatprep.subr.mxu0 %v975
  %1245 = vmatpush1.msra.mxu0 %v974
  %1246 = vmatprep.subr.mxu0 %v991
  %1247 = vmatpush1.msra.mxu0 %v990
  %1248 = vmatprep.subr.mxu0 %v1007
  %1249 = vmatpush1.msra.mxu0 %v1006
  %1250 = vmatprep.subr.mxu0 %v1023
  %1251 = vmatpush1.msra.mxu0 %v1022
  %1252 = vmatprep.subr.mxu0 %v1039
  %1253 = vmatpush1.msra.mxu0 %v1038
  %1254 = vmatprep.subr.mxu0 %v1055
  %1255 = vmatpush1.msra.mxu0 %v1054
  %1256 = vmatprep.subr.mxu0 %v1071
  %1257 = vmatpush1.msra.mxu0 %v1070
  %1258 = vmatprep.subr.mxu0 0.0
  %1259 = vmatpush1.msra.mxu0 0.0
  %1260 = vmatprep.subr.mxu0 0.0
  %1261 = vmatpush1.msra.mxu0 0.0
  %1262 = vmatprep.subr.mxu0 0.0
  %1263 = vmatpush1.msra.mxu0 0.0
  %1264 = vmatprep.subr.mxu0 0.0
  %1265 = vmatpush1.msra.mxu0 0.0
  %1266 = vmatprep.subr.mxu0 0.0
  %1267 = vmatpush1.msra.mxu0 0.0
  %1268 = vmatprep.subr.mxu0 0.0
  %1269 = vmatpush1.msra.mxu0 0.0
  %1270 = vmatprep.subr.mxu0 0.0
  %1271 = vmatpush1.msra.mxu0 0.0
  %1272 = vmatprep.subr.mxu0 0.0
  %1273 = vmatpush1.msra.mxu0 0.0
  %1274 = vmatprep.subr.mxu0 0.0
  %1275 = vmatpush1.msra.mxu0 0.0
  %1276 = vmatprep.subr.mxu0 0.0
  %1277 = vmatpush1.msra.mxu0 0.0
  %1278 = vmatprep.subr.mxu0 0.0
  %1279 = vmatpush1.msra.mxu0 0.0
  %1280 = vmatprep.subr.mxu0 0.0
  %1281 = vmatpush1.msra.mxu0 0.0
  %1282 = vmatprep.subr.mxu0 0.0
  %1283 = vmatpush1.msra.mxu0 0.0
  %1284 = vmatprep.subr.mxu0 0.0
  %1285 = vmatpush1.msra.mxu0 0.0
  %1286 = vmatprep.subr.mxu0 0.0
  %1287 = vmatpush1.msra.mxu0 0.0
  %1288 = vmatprep.subr.mxu0 0.0
  %1289 = vmatpush1.msra.mxu0 0.0
  %1290 = vmatprep.subr.mxu0 0.0
  %1291 = vmatpush1.msra.mxu0 0.0
  %1292 = vmatprep.subr.mxu0 0.0
  %1293 = vmatpush1.msra.mxu0 0.0
  %1294 = vmatprep.subr.mxu0 0.0
  %1295 = vmatpush1.msra.mxu0 0.0
  %1296 = vmatprep.subr.mxu0 0.0
  %1297 = vmatpush1.msra.mxu0 0.0
  %1298 = vmatprep.subr.mxu0 0.0
  %1299 = vmatpush1.msra.mxu0 0.0
  %1300 = vmatprep.subr.mxu0 0.0
  %1301 = vmatpush1.msra.mxu0 0.0
  %1302 = vmatprep.subr.mxu0 0.0
  %1303 = vmatpush1.msra.mxu0 0.0
  %1304 = vmatprep.subr.mxu0 0.0
  %1305 = vmatpush1.msra.mxu0 0.0
  %1306 = vmatprep.mubr.f32.mxu0 0.0
  %1307 = vmatmul.mubr.f32.gmra.mrb[0].mxu0 %v1169
  %v1308 = vpop.f32.mrb[0].mxu0
  %v1309 = vadd.f32 %v1099, %v1308
  %v1310 = vpop.f32.mrb[0].mxu0
  %v1311 = vadd.f32 %v1103, %v1310
  %1312 = vdwg.mxu0
  %1313 = vmatprep.subr.mxu0 %v961
  %1314 = vmatpush1.msra.mxu0 %v960
  %1315 = vmatprep.subr.mxu0 %v977
  %1316 = vmatpush1.msra.mxu0 %v976
  %1317 = vmatprep.subr.mxu0 %v993
  %1318 = vmatpush1.msra.mxu0 %v992
  %1319 = vmatprep.subr.mxu0 %v1009
  %1320 = vmatpush1.msra.mxu0 %v1008
  %1321 = vmatprep.subr.mxu0 %v1025
  %1322 = vmatpush1.msra.mxu0 %v1024
  %1323 = vmatprep.subr.mxu0 %v1041
  %1324 = vmatpush1.msra.mxu0 %v1040
  %1325 = vmatprep.subr.mxu0 %v1057
  %1326 = vmatpush1.msra.mxu0 %v1056
  %1327 = vmatprep.subr.mxu0 %v1073
  %1328 = vmatpush1.msra.mxu0 %v1072
  %1329 = vmatprep.subr.mxu0 0.0
  %1330 = vmatpush1.msra.mxu0 0.0
  %1331 = vmatprep.subr.mxu0 0.0
  %1332 = vmatpush1.msra.mxu0 0.0
  %1333 = vmatprep.subr.mxu0 0.0
  %1334 = vmatpush1.msra.mxu0 0.0
  %1335 = vmatprep.subr.mxu0 0.0
  %1336 = vmatpush1.msra.mxu0 0.0
  %1337 = vmatprep.subr.mxu0 0.0
  %1338 = vmatpush1.msra.mxu0 0.0
  %1339 = vmatprep.subr.mxu0 0.0
  %1340 = vmatpush1.msra.mxu0 0.0
  %1341 = vmatprep.subr.mxu0 0.0
  %1342 = vmatpush1.msra.mxu0 0.0
  %1343 = vmatprep.subr.mxu0 0.0
  %1344 = vmatpush1.msra.mxu0 0.0
  %1345 = vmatprep.subr.mxu0 0.0
  %1346 = vmatpush1.msra.mxu0 0.0
  %1347 = vmatprep.subr.mxu0 0.0
  %1348 = vmatpush1.msra.mxu0 0.0
  %1349 = vmatprep.subr.mxu0 0.0
  %1350 = vmatpush1.msra.mxu0 0.0
  %1351 = vmatprep.subr.mxu0 0.0
  %1352 = vmatpush1.msra.mxu0 0.0
  %1353 = vmatprep.subr.mxu0 0.0
  %1354 = vmatpush1.msra.mxu0 0.0
  %1355 = vmatprep.subr.mxu0 0.0
  %1356 = vmatpush1.msra.mxu0 0.0
  %1357 = vmatprep.subr.mxu0 0.0
  %1358 = vmatpush1.msra.mxu0 0.0
  %1359 = vmatprep.subr.mxu0 0.0
  %1360 = vmatpush1.msra.mxu0 0.0
  %1361 = vmatprep.subr.mxu0 0.0
  %1362 = vmatpush1.msra.mxu0 0.0
  %1363 = vmatprep.subr.mxu0 0.0
  %1364 = vmatpush1.msra.mxu0 0.0
  %1365 = vmatprep.subr.mxu0 0.0
  %1366 = vmatpush1.msra.mxu0 0.0
  %1367 = vmatprep.subr.mxu0 0.0
  %1368 = vmatpush1.msra.mxu0 0.0
  %1369 = vmatprep.subr.mxu0 0.0
  %1370 = vmatpush1.msra.mxu0 0.0
  %1371 = vmatprep.subr.mxu0 0.0
  %1372 = vmatpush1.msra.mxu0 0.0
  %1373 = vmatprep.subr.mxu0 0.0
  %1374 = vmatpush1.msra.mxu0 0.0
  %1375 = vmatprep.subr.mxu0 0.0
  %1376 = vmatpush1.msra.mxu0 0.0
  %1377 = vmatprep.mubr.f32.mxu0 0.0
  %1378 = vmatmul.mubr.f32.gmra.mrb[0].mxu0 %v1169
  %v1379 = vpop.f32.mrb[0].mxu0
  %v1380 = vadd.f32 %v1107, %v1379
  %v1381 = vpop.f32.mrb[0].mxu0
  %v1382 = vadd.f32 %v1111, %v1381
  %1383 = vdwg.mxu0
  %1384 = vmatprep.subr.mxu0 %v963
  %1385 = vmatpush1.msra.mxu0 %v962
  %1386 = vmatprep.subr.mxu0 %v979
  %1387 = vmatpush1.msra.mxu0 %v978
  %1388 = vmatprep.subr.mxu0 %v995
  %1389 = vmatpush1.msra.mxu0 %v994
  %1390 = vmatprep.subr.mxu0 %v1011
  %1391 = vmatpush1.msra.mxu0 %v1010
  %1392 = vmatprep.subr.mxu0 %v1027
  %1393 = vmatpush1.msra.mxu0 %v1026
  %1394 = vmatprep.subr.mxu0 %v1043
  %1395 = vmatpush1.msra.mxu0 %v1042
  %1396 = vmatprep.subr.mxu0 %v1059
  %1397 = vmatpush1.msra.mxu0 %v1058
  %1398 = vmatprep.subr.mxu0 %v1075
  %1399 = vmatpush1.msra.mxu0 %v1074
  %1400 = vmatprep.subr.mxu0 0.0
  %1401 = vmatpush1.msra.mxu0 0.0
  %1402 = vmatprep.subr.mxu0 0.0
  %1403 = vmatpush1.msra.mxu0 0.0
  %1404 = vmatprep.subr.mxu0 0.0
  %1405 = vmatpush1.msra.mxu0 0.0
  %1406 = vmatprep.subr.mxu0 0.0
  %1407 = vmatpush1.msra.mxu0 0.0
  %1408 = vmatprep.subr.mxu0 0.0
  %1409 = vmatpush1.msra.mxu0 0.0
  %1410 = vmatprep.subr.mxu0 0.0
  %1411 = vmatpush1.msra.mxu0 0.0
  %1412 = vmatprep.subr.mxu0 0.0
  %1413 = vmatpush1.msra.mxu0 0.0
  %1414 = vmatprep.subr.mxu0 0.0
  %1415 = vmatpush1.msra.mxu0 0.0
  %1416 = vmatprep.subr.mxu0 0.0
  %1417 = vmatpush1.msra.mxu0 0.0
  %1418 = vmatprep.subr.mxu0 0.0
  %1419 = vmatpush1.msra.mxu0 0.0
  %1420 = vmatprep.subr.mxu0 0.0
  %1421 = vmatpush1.msra.mxu0 0.0
  %1422 = vmatprep.subr.mxu0 0.0
  %1423 = vmatpush1.msra.mxu0 0.0
  %1424 = vmatprep.subr.mxu0 0.0
  %1425 = vmatpush1.msra.mxu0 0.0
  %1426 = vmatprep.subr.mxu0 0.0
  %1427 = vmatpush1.msra.mxu0 0.0
  %1428 = vmatprep.subr.mxu0 0.0
  %1429 = vmatpush1.msra.mxu0 0.0
  %1430 = vmatprep.subr.mxu0 0.0
  %1431 = vmatpush1.msra.mxu0 0.0
  %1432 = vmatprep.subr.mxu0 0.0
  %1433 = vmatpush1.msra.mxu0 0.0
  %1434 = vmatprep.subr.mxu0 0.0
  %1435 = vmatpush1.msra.mxu0 0.0
  %1436 = vmatprep.subr.mxu0 0.0
  %1437 = vmatpush1.msra.mxu0 0.0
  %1438 = vmatprep.subr.mxu0 0.0
  %1439 = vmatpush1.msra.mxu0 0.0
  %1440 = vmatprep.subr.mxu0 0.0
  %1441 = vmatpush1.msra.mxu0 0.0
  %1442 = vmatprep.subr.mxu0 0.0
  %1443 = vmatpush1.msra.mxu0 0.0
  %1444 = vmatprep.subr.mxu0 0.0
  %1445 = vmatpush1.msra.mxu0 0.0
  %1446 = vmatprep.subr.mxu0 0.0
  %1447 = vmatpush1.msra.mxu0 0.0
  %1448 = vmatprep.mubr.f32.mxu0 0.0
  %1449 = vmatmul.mubr.f32.gmra.mrb[0].mxu0 %v1169
  %v1450 = vpop.f32.mrb[0].mxu0
  %v1451 = vadd.f32 %v1115, %v1450
  %v1452 = vpop.f32.mrb[0].mxu0
  %v1453 = vadd.f32 %v1119, %v1452
  %1454 = vdwg.mxu0
  %1455 = vmatprep.subr.mxu0 %v965
  %1456 = vmatpush1.msra.mxu0 %v964
  %1457 = vmatprep.subr.mxu0 %v981
  %1458 = vmatpush1.msra.mxu0 %v980
  %1459 = vmatprep.subr.mxu0 %v997
  %1460 = vmatpush1.msra.mxu0 %v996
  %1461 = vmatprep.subr.mxu0 %v1013
  %1462 = vmatpush1.msra.mxu0 %v1012
  %1463 = vmatprep.subr.mxu0 %v1029
  %1464 = vmatpush1.msra.mxu0 %v1028
  %1465 = vmatprep.subr.mxu0 %v1045
  %1466 = vmatpush1.msra.mxu0 %v1044
  %1467 = vmatprep.subr.mxu0 %v1061
  %1468 = vmatpush1.msra.mxu0 %v1060
  %1469 = vmatprep.subr.mxu0 %v1077
  %1470 = vmatpush1.msra.mxu0 %v1076
  %1471 = vmatprep.subr.mxu0 0.0
  %1472 = vmatpush1.msra.mxu0 0.0
  %1473 = vmatprep.subr.mxu0 0.0
  %1474 = vmatpush1.msra.mxu0 0.0
  %1475 = vmatprep.subr.mxu0 0.0
  %1476 = vmatpush1.msra.mxu0 0.0
  %1477 = vmatprep.subr.mxu0 0.0
  %1478 = vmatpush1.msra.mxu0 0.0
  %1479 = vmatprep.subr.mxu0 0.0
  %1480 = vmatpush1.msra.mxu0 0.0
  %1481 = vmatprep.subr.mxu0 0.0
  %1482 = vmatpush1.msra.mxu0 0.0
  %1483 = vmatprep.subr.mxu0 0.0
  %1484 = vmatpush1.msra.mxu0 0.0
  %1485 = vmatprep.subr.mxu0 0.0
  %1486 = vmatpush1.msra.mxu0 0.0
  %1487 = vmatprep.subr.mxu0 0.0
  %1488 = vmatpush1.msra.mxu0 0.0
  %1489 = vmatprep.subr.mxu0 0.0
  %1490 = vmatpush1.msra.mxu0 0.0
  %1491 = vmatprep.subr.mxu0 0.0
  %1492 = vmatpush1.msra.mxu0 0.0
  %1493 = vmatprep.subr.mxu0 0.0
  %1494 = vmatpush1.msra.mxu0 0.0
  %1495 = vmatprep.subr.mxu0 0.0
  %1496 = vmatpush1.msra.mxu0 0.0
  %1497 = vmatprep.subr.mxu0 0.0
  %1498 = vmatpush1.msra.mxu0 0.0
  %1499 = vmatprep.subr.mxu0 0.0
  %1500 = vmatpush1.msra.mxu0 0.0
  %1501 = vmatprep.subr.mxu0 0.0
  %1502 = vmatpush1.msra.mxu0 0.0
  %1503 = vmatprep.subr.mxu0 0.0
  %1504 = vmatpush1.msra.mxu0 0.0
  %1505 = vmatprep.subr.mxu0 0.0
  %1506 = vmatpush1.msra.mxu0 0.0
  %1507 = vmatprep.subr.mxu0 0.0
  %1508 = vmatpush1.msra.mxu0 0.0
  %1509 = vmatprep.subr.mxu0 0.0
  %1510 = vmatpush1.msra.mxu0 0.0
  %1511 = vmatprep.subr.mxu0 0.0
  %1512 = vmatpush1.msra.mxu0 0.0
  %1513 = vmatprep.subr.mxu0 0.0
  %1514 = vmatpush1.msra.mxu0 0.0
  %1515 = vmatprep.subr.mxu0 0.0
  %1516 = vmatpush1.msra.mxu0 0.0
  %1517 = vmatprep.subr.mxu0 0.0
  %1518 = vmatpush1.msra.mxu0 0.0
  %1519 = vmatprep.mubr.f32.mxu0 0.0
  %1520 = vmatmul.mubr.f32.gmra.mrb[0].mxu0 %v1169
  %v1521 = vpop.f32.mrb[0].mxu0
  %v1522 = vadd.f32 %v1123, %v1521
  %v1523 = vpop.f32.mrb[0].mxu0
  %v1524 = vadd.f32 %v1127, %v1523
  %1525 = vdwg.mxu0
  %1526 = vmatprep.subr.mxu0 %v967
  %1527 = vmatpush1.msra.mxu0 %v966
  %1528 = vmatprep.subr.mxu0 %v983
  %1529 = vmatpush1.msra.mxu0 %v982
  %1530 = vmatprep.subr.mxu0 %v999
  %1531 = vmatpush1.msra.mxu0 %v998
  %1532 = vmatprep.subr.mxu0 %v1015
  %1533 = vmatpush1.msra.mxu0 %v1014
  %1534 = vmatprep.subr.mxu0 %v1031
  %1535 = vmatpush1.msra.mxu0 %v1030
  %1536 = vmatprep.subr.mxu0 %v1047
  %1537 = vmatpush1.msra.mxu0 %v1046
  %1538 = vmatprep.subr.mxu0 %v1063
  %1539 = vmatpush1.msra.mxu0 %v1062
  %1540 = vmatprep.subr.mxu0 %v1079
  %1541 = vmatpush1.msra.mxu0 %v1078
  %1542 = vmatprep.subr.mxu0 0.0
  %1543 = vmatpush1.msra.mxu0 0.0
  %1544 = vmatprep.subr.mxu0 0.0
  %1545 = vmatpush1.msra.mxu0 0.0
  %1546 = vmatprep.subr.mxu0 0.0
  %1547 = vmatpush1.msra.mxu0 0.0
  %1548 = vmatprep.subr.mxu0 0.0
  %1549 = vmatpush1.msra.mxu0 0.0
  %1550 = vmatprep.subr.mxu0 0.0
  %1551 = vmatpush1.msra.mxu0 0.0
  %1552 = vmatprep.subr.mxu0 0.0
  %1553 = vmatpush1.msra.mxu0 0.0
  %1554 = vmatprep.subr.mxu0 0.0
  %1555 = vmatpush1.msra.mxu0 0.0
  %1556 = vmatprep.subr.mxu0 0.0
  %1557 = vmatpush1.msra.mxu0 0.0
  %1558 = vmatprep.subr.mxu0 0.0
  %1559 = vmatpush1.msra.mxu0 0.0
  %1560 = vmatprep.subr.mxu0 0.0
  %1561 = vmatpush1.msra.mxu0 0.0
  %1562 = vmatprep.subr.mxu0 0.0
  %1563 = vmatpush1.msra.mxu0 0.0
  %1564 = vmatprep.subr.mxu0 0.0
  %1565 = vmatpush1.msra.mxu0 0.0
  %1566 = vmatprep.subr.mxu0 0.0
  %1567 = vmatpush1.msra.mxu0 0.0
  %1568 = vmatprep.subr.mxu0 0.0
  %1569 = vmatpush1.msra.mxu0 0.0
  %1570 = vmatprep.subr.mxu0 0.0
  %1571 = vmatpush1.msra.mxu0 0.0
  %1572 = vmatprep.subr.mxu0 0.0
  %1573 = vmatpush1.msra.mxu0 0.0
  %1574 = vmatprep.subr.mxu0 0.0
  %1575 = vmatpush1.msra.mxu0 0.0
  %1576 = vmatprep.subr.mxu0 0.0
  %1577 = vmatpush1.msra.mxu0 0.0
  %1578 = vmatprep.subr.mxu0 0.0
  %1579 = vmatpush1.msra.mxu0 0.0
  %1580 = vmatprep.subr.mxu0 0.0
  %1581 = vmatpush1.msra.mxu0 0.0
  %1582 = vmatprep.subr.mxu0 0.0
  %1583 = vmatpush1.msra.mxu0 0.0
  %1584 = vmatprep.subr.mxu0 0.0
  %1585 = vmatpush1.msra.mxu0 0.0
  %1586 = vmatprep.subr.mxu0 0.0
  %1587 = vmatpush1.msra.mxu0 0.0
  %1588 = vmatprep.subr.mxu0 0.0
  %1589 = vmatpush1.msra.mxu0 0.0
  %1590 = vmatprep.mubr.f32.mxu0 0.0
  %1591 = vmatmul.mubr.f32.gmra.mrb[0].mxu0 %v1169
  %v1592 = vpop.f32.mrb[0].mxu0
  %v1593 = vadd.f32 %v1131, %v1592
  %v1594 = vpop.f32.mrb[0].mxu0
  %v1595 = vadd.f32 %v1135, %v1594
  %1596 = vdwg.mxu0
  %1597 = vmatprep.subr.mxu0 %v969
  %1598 = vmatpush1.msra.mxu0 %v968
  %1599 = vmatprep.subr.mxu0 %v985
  %1600 = vmatpush1.msra.mxu0 %v984
  %1601 = vmatprep.subr.mxu0 %v1001
  %1602 = vmatpush1.msra.mxu0 %v1000
  %1603 = vmatprep.subr.mxu0 %v1017
  %1604 = vmatpush1.msra.mxu0 %v1016
  %1605 = vmatprep.subr.mxu0 %v1033
  %1606 = vmatpush1.msra.mxu0 %v1032
  %1607 = vmatprep.subr.mxu0 %v1049
  %1608 = vmatpush1.msra.mxu0 %v1048
  %1609 = vmatprep.subr.mxu0 %v1065
  %1610 = vmatpush1.msra.mxu0 %v1064
  %1611 = vmatprep.subr.mxu0 %v1081
  %1612 = vmatpush1.msra.mxu0 %v1080
  %1613 = vmatprep.subr.mxu0 0.0
  %1614 = vmatpush1.msra.mxu0 0.0
  %1615 = vmatprep.subr.mxu0 0.0
  %1616 = vmatpush1.msra.mxu0 0.0
  %1617 = vmatprep.subr.mxu0 0.0
  %1618 = vmatpush1.msra.mxu0 0.0
  %1619 = vmatprep.subr.mxu0 0.0
  %1620 = vmatpush1.msra.mxu0 0.0
  %1621 = vmatprep.subr.mxu0 0.0
  %1622 = vmatpush1.msra.mxu0 0.0
  %1623 = vmatprep.subr.mxu0 0.0
  %1624 = vmatpush1.msra.mxu0 0.0
  %1625 = vmatprep.subr.mxu0 0.0
  %1626 = vmatpush1.msra.mxu0 0.0
  %1627 = vmatprep.subr.mxu0 0.0
  %1628 = vmatpush1.msra.mxu0 0.0
  %1629 = vmatprep.subr.mxu0 0.0
  %1630 = vmatpush1.msra.mxu0 0.0
  %1631 = vmatprep.subr.mxu0 0.0
  %1632 = vmatpush1.msra.mxu0 0.0
  %1633 = vmatprep.subr.mxu0 0.0
  %1634 = vmatpush1.msra.mxu0 0.0
  %1635 = vmatprep.subr.mxu0 0.0
  %1636 = vmatpush1.msra.mxu0 0.0
  %1637 = vmatprep.subr.mxu0 0.0
  %1638 = vmatpush1.msra.mxu0 0.0
  %1639 = vmatprep.subr.mxu0 0.0
  %1640 = vmatpush1.msra.mxu0 0.0
  %1641 = vmatprep.subr.mxu0 0.0
  %1642 = vmatpush1.msra.mxu0 0.0
  %1643 = vmatprep.subr.mxu0 0.0
  %1644 = vmatpush1.msra.mxu0 0.0
  %1645 = vmatprep.subr.mxu0 0.0
  %1646 = vmatpush1.msra.mxu0 0.0
  %1647 = vmatprep.subr.mxu0 0.0
  %1648 = vmatpush1.msra.mxu0 0.0
  %1649 = vmatprep.subr.mxu0 0.0
  %1650 = vmatpush1.msra.mxu0 0.0
  %1651 = vmatprep.subr.mxu0 0.0
  %1652 = vmatpush1.msra.mxu0 0.0
  %1653 = vmatprep.subr.mxu0 0.0
  %1654 = vmatpush1.msra.mxu0 0.0
  %1655 = vmatprep.subr.mxu0 0.0
  %1656 = vmatpush1.msra.mxu0 0.0
  %1657 = vmatprep.subr.mxu0 0.0
  %1658 = vmatpush1.msra.mxu0 0.0
  %1659 = vmatprep.subr.mxu0 0.0
  %1660 = vmatpush1.msra.mxu0 0.0
  %1661 = vmatprep.mubr.f32.mxu0 0.0
  %1662 = vmatmul.mubr.f32.gmra.mrb[0].mxu0 %v1169
  %v1663 = vpop.f32.mrb[0].mxu0
  %v1664 = vadd.f32 %v1139, %v1663
  %v1665 = vpop.f32.mrb[0].mxu0
  %v1666 = vadd.f32 %v1143, %v1665
  %1667 = vdwg.mxu0
  %1668 = vmatprep.subr.mxu0 %v971
  %1669 = vmatpush1.msra.mxu0 %v970
  %1670 = vmatprep.subr.mxu0 %v987
  %1671 = vmatpush1.msra.mxu0 %v986
  %1672 = vmatprep.subr.mxu0 %v1003
  %1673 = vmatpush1.msra.mxu0 %v1002
  %1674 = vmatprep.subr.mxu0 %v1019
  %1675 = vmatpush1.msra.mxu0 %v1018
  %1676 = vmatprep.subr.mxu0 %v1035
  %1677 = vmatpush1.msra.mxu0 %v1034
  %1678 = vmatprep.subr.mxu0 %v1051
  %1679 = vmatpush1.msra.mxu0 %v1050
  %1680 = vmatprep.subr.mxu0 %v1067
  %1681 = vmatpush1.msra.mxu0 %v1066
  %1682 = vmatprep.subr.mxu0 %v1083
  %1683 = vmatpush1.msra.mxu0 %v1082
  %1684 = vmatprep.subr.mxu0 0.0
  %1685 = vmatpush1.msra.mxu0 0.0
  %1686 = vmatprep.subr.mxu0 0.0
  %1687 = vmatpush1.msra.mxu0 0.0
  %1688 = vmatprep.subr.mxu0 0.0
  %1689 = vmatpush1.msra.mxu0 0.0
  %1690 = vmatprep.subr.mxu0 0.0
  %1691 = vmatpush1.msra.mxu0 0.0
  %1692 = vmatprep.subr.mxu0 0.0
  %1693 = vmatpush1.msra.mxu0 0.0
  %1694 = vmatprep.subr.mxu0 0.0
  %1695 = vmatpush1.msra.mxu0 0.0
  %1696 = vmatprep.subr.mxu0 0.0
  %1697 = vmatpush1.msra.mxu0 0.0
  %1698 = vmatprep.subr.mxu0 0.0
  %1699 = vmatpush1.msra.mxu0 0.0
  %1700 = vmatprep.subr.mxu0 0.0
  %1701 = vmatpush1.msra.mxu0 0.0
  %1702 = vmatprep.subr.mxu0 0.0
  %1703 = vmatpush1.msra.mxu0 0.0
  %1704 = vmatprep.subr.mxu0 0.0
  %1705 = vmatpush1.msra.mxu0 0.0
  %1706 = vmatprep.subr.mxu0 0.0
  %1707 = vmatpush1.msra.mxu0 0.0
  %1708 = vmatprep.subr.mxu0 0.0
  %1709 = vmatpush1.msra.mxu0 0.0
  %1710 = vmatprep.subr.mxu0 0.0
  %1711 = vmatpush1.msra.mxu0 0.0
  %1712 = vmatprep.subr.mxu0 0.0
  %1713 = vmatpush1.msra.mxu0 0.0
  %1714 = vmatprep.subr.mxu0 0.0
  %1715 = vmatpush1.msra.mxu0 0.0
  %1716 = vmatprep.subr.mxu0 0.0
  %1717 = vmatpush1.msra.mxu0 0.0
  %1718 = vmatprep.subr.mxu0 0.0
  %1719 = vmatpush1.msra.mxu0 0.0
  %1720 = vmatprep.subr.mxu0 0.0
  %1721 = vmatpush1.msra.mxu0 0.0
  %1722 = vmatprep.subr.mxu0 0.0
  %1723 = vmatpush1.msra.mxu0 0.0
  %1724 = vmatprep.subr.mxu0 0.0
  %1725 = vmatpush1.msra.mxu0 0.0
  %1726 = vmatprep.subr.mxu0 0.0
  %1727 = vmatpush1.msra.mxu0 0.0
  %1728 = vmatprep.subr.mxu0 0.0
  %1729 = vmatpush1.msra.mxu0 0.0
  %1730 = vmatprep.subr.mxu0 0.0
  %1731 = vmatpush1.msra.mxu0 0.0
  %1732 = vmatprep.mubr.f32.mxu0 0.0
  %1733 = vmatmul.mubr.f32.gmra.mrb[0].mxu0 %v1169
  %v1734 = vpop.f32.mrb[0].mxu0
  %v1735 = vadd.f32 %v1147, %v1734
  %v1736 = vpop.f32.mrb[0].mxu0
  %v1737 = vadd.f32 %v1151, %v1736
  %1738 = vdwg.mxu0
  %v1739 = vmax.f32 %v1238, 0.0
  %v1740 = vmax.f32 %v1240, 0.0
  %v1741 = vmax.f32 %v1309, 0.0
  %v1742 = vmax.f32 %v1311, 0.0
  %v1743 = vmax.f32 %v1380, 0.0
  %v1744 = vmax.f32 %v1382, 0.0
  %v1745 = vmax.f32 %v1451, 0.0
  %v1746 = vmax.f32 %v1453, 0.0
  %v1747 = vmax.f32 %v1522, 0.0
  %v1748 = vmax.f32 %v1524, 0.0
  %v1749 = vmax.f32 %v1593, 0.0
  %v1750 = vmax.f32 %v1595, 0.0
  %v1751 = vmax.f32 %v1664, 0.0
  %v1752 = vmax.f32 %v1666, 0.0
  %v1753 = vmax.f32 %v1735, 0.0
  %v1754 = vmax.f32 %v1737, 0.0
  %1755 = vst [vmem:[%s7] sm:$0xff] %v1739
  %1756 = vst [vmem:[%s7 + $0x8] sm:$0xff] %v1740
  %1757 = vst [vmem:[%s7 + $0x10] sm:$0xff] %v1741
  %1758 = vst [vmem:[%s7 + $0x18] sm:$0xff] %v1742
  %1759 = vst [vmem:[%s7 + $0x20] sm:$0xff] %v1743
  %1760 = vst [vmem:[%s7 + $0x28] sm:$0xff] %v1744
  %1761 = vst [vmem:[%s7 + $0x30] sm:$0xff] %v1745
  %1762 = vst [vmem:[%s7 + $0x38] sm:$0xff] %v1746
  %1763 = vst [vmem:[%s7 + $0x40] sm:$0xff] %v1747
  %1764 = vst [vmem:[%s7 + $0x48] sm:$0xff] %v1748
  %1765 = vst [vmem:[%s7 + $0x50] sm:$0xff] %v1749
  %1766 = vst [vmem:[%s7 + $0x58] sm:$0xff] %v1750
  %1767 = vst [vmem:[%s7 + $0x60] sm:$0xff] %v1751
  %1768 = vst [vmem:[%s7 + $0x68] sm:$0xff] %v1752
  %1769 = vst [vmem:[%s7 + $0x70] sm:$0xff] %v1753
  %1770 = vst [vmem:[%s7 + $0x78] sm:$0xff] %v1754
  // Predicated region
  $region30: #{_lambda_.7} parent=0 // pred_check
    _
  $region31: #{_lambda_.7} parent=0 // pred_check_branch
    %1772 = sbr.rel (0) target = $region33
  $region32: #{_lambda_.7} parent=0 // pred_region
    _
  $region33: #{_lambda_.7} parent=0 // pred_fallthru
    _
  // Predicated region
  $region34: #{_lambda_.7} parent=0 // pred_check
    _
  $region35: #{_lambda_.7} parent=0 // pred_check_branch
    %1774 = sbr.rel (0) target = $region37
  $region36: #{_lambda_.7} parent=0 // pred_region
    _
  $region37: #{_lambda_.7} parent=0 // pred_fallthru
    _

// kernel: _lambda_.9
$region0: #{_lambda_.9}
  #allocation0 [shape = 'u32[]', space=smem, size = 0x4, offset = 0x4, fixed_abs, tag = 'smem constant byte address 0x4 - core index']
  #allocation1 [shape = 'u32[144,128]{1,0:T(1,128)}', space=vmem, size = 0x12000, scoped, tag = 'internal scratch']
  %s0 = inlined_call_operand.vmem [shape: f32[512,64], index: 0, kind: input, shape index: {}]
  %s1 = inlined_call_operand.vmem [shape: f32[64,128], index: 1, kind: input, shape index: {}]
  %s2 = inlined_call_operand.vmem [shape: f32[1,128], index: 2, kind: input, shape index: {}]
  %s3 = inlined_call_operand.vmem [shape: f32[512,128], index: 3, kind: output, shape index: {}]
  %s4 = sld [smem:[#allocation0]]
  $region22: #{_lambda_.9} parent=0
    _
  %s6 = ssub.s32 1, %s4
  %s7 = scalar_select 0, %s6, %s4
  // Predicated region
  $region2: #{_lambda_.9} parent=0 // pred_check
    _
  $region3: #{_lambda_.9} parent=0 // pred_check_branch
    %9 = sbr.rel (0) target = $region5
  $region4: #{_lambda_.9} parent=0 // pred_region
    _
  $region5: #{_lambda_.9} parent=0 // pred_fallthru
    _
  // Predicated region
  $region6: #{_lambda_.9} parent=0 // pred_check
    _
  $region7: #{_lambda_.9} parent=0 // pred_check_branch
    %11 = sbr.rel (0) target = $region9
  $region8: #{_lambda_.9} parent=0 // pred_region
    _
  $region9: #{_lambda_.9} parent=0 // pred_fallthru
    _
  // Predicated region
  $region10: #{_lambda_.9} parent=0 // pred_check
    _
  $region11: #{_lambda_.9} parent=0 // pred_check_branch
    %13 = sbr.rel (0) target = $region13
  $region12: #{_lambda_.9} parent=0 // pred_region
    _
  $region13: #{_lambda_.9} parent=0 // pred_fallthru
    _
  %v14 = vld [vmem:[%s0] sm:$0xff]
  %v15 = vld [vmem:[%s0 + $0x8] sm:$0xff]
  %v16 = vld [vmem:[%s0 + $0x10] sm:$0xff]
  %v17 = vld [vmem:[%s0 + $0x18] sm:$0xff]
  %v18 = vld [vmem:[%s0 + $0x20] sm:$0xff]
  %v19 = vld [vmem:[%s0 + $0x28] sm:$0xff]
  %v20 = vld [vmem:[%s0 + $0x30] sm:$0xff]
  %v21 = vld [vmem:[%s0 + $0x38] sm:$0xff]
  %v22 = vld [vmem:[%s0 + $0x40] sm:$0xff]
  %v23 = vld [vmem:[%s0 + $0x48] sm:$0xff]
  %v24 = vld [vmem:[%s0 + $0x50] sm:$0xff]
  %v25 = vld [vmem:[%s0 + $0x58] sm:$0xff]
  %v26 = vld [vmem:[%s0 + $0x60] sm:$0xff]
  %v27 = vld [vmem:[%s0 + $0x68] sm:$0xff]
  %v28 = vld [vmem:[%s0 + $0x70] sm:$0xff]
  %v29 = vld [vmem:[%s0 + $0x78] sm:$0xff]
  %v30 = vld [vmem:[%s0 + $0x80] sm:$0xff]
  %v31 = vld [vmem:[%s0 + $0x88] sm:$0xff]
  %v32 = vld [vmem:[%s0 + $0x90] sm:$0xff]
  %v33 = vld [vmem:[%s0 + $0x98] sm:$0xff]
  %v34 = vld [vmem:[%s0 + $0xa0] sm:$0xff]
  %v35 = vld [vmem:[%s0 + $0xa8] sm:$0xff]
  %v36 = vld [vmem:[%s0 + $0xb0] sm:$0xff]
  %v37 = vld [vmem:[%s0 + $0xb8] sm:$0xff]
  %v38 = vld [vmem:[%s0 + $0xc0] sm:$0xff]
  %v39 = vld [vmem:[%s0 + $0xc8] sm:$0xff]
  %v40 = vld [vmem:[%s0 + $0xd0] sm:$0xff]
  %v41 = vld [vmem:[%s0 + $0xd8] sm:$0xff]
  %v42 = vld [vmem:[%s0 + $0xe0] sm:$0xff]
  %v43 = vld [vmem:[%s0 + $0xe8] sm:$0xff]
  %v44 = vld [vmem:[%s0 + $0xf0] sm:$0xff]
  %v45 = vld [vmem:[%s0 + $0xf8] sm:$0xff]
  %v46 = vld [vmem:[%s0 + $0x100] sm:$0xff]
  %v47 = vld [vmem:[%s0 + $0x108] sm:$0xff]
  %v48 = vld [vmem:[%s0 + $0x110] sm:$0xff]
  %v49 = vld [vmem:[%s0 + $0x118] sm:$0xff]
  %v50 = vld [vmem:[%s0 + $0x120] sm:$0xff]
  %v51 = vld [vmem:[%s0 + $0x128] sm:$0xff]
  %v52 = vld [vmem:[%s0 + $0x130] sm:$0xff]
  %v53 = vld [vmem:[%s0 + $0x138] sm:$0xff]
  %v54 = vld [vmem:[%s0 + $0x140] sm:$0xff]
  %v55 = vld [vmem:[%s0 + $0x148] sm:$0xff]
  %v56 = vld [vmem:[%s0 + $0x150] sm:$0xff]
  %v57 = vld [vmem:[%s0 + $0x158] sm:$0xff]
  %v58 = vld [vmem:[%s0 + $0x160] sm:$0xff]
  %v59 = vld [vmem:[%s0 + $0x168] sm:$0xff]
  %v60 = vld [vmem:[%s0 + $0x170] sm:$0xff]
  %v61 = vld [vmem:[%s0 + $0x178] sm:$0xff]
  %v62 = vld [vmem:[%s0 + $0x180] sm:$0xff]
  %v63 = vld [vmem:[%s0 + $0x188] sm:$0xff]
  %v64 = vld [vmem:[%s0 + $0x190] sm:$0xff]
  %v65 = vld [vmem:[%s0 + $0x198] sm:$0xff]
  %v66 = vld [vmem:[%s0 + $0x1a0] sm:$0xff]
  %v67 = vld [vmem:[%s0 + $0x1a8] sm:$0xff]
  %v68 = vld [vmem:[%s0 + $0x1b0] sm:$0xff]
  %v69 = vld [vmem:[%s0 + $0x1b8] sm:$0xff]
  %v70 = vld [vmem:[%s0 + $0x1c0] sm:$0xff]
  %v71 = vld [vmem:[%s0 + $0x1c8] sm:$0xff]
  %v72 = vld [vmem:[%s0 + $0x1d0] sm:$0xff]
  %v73 = vld [vmem:[%s0 + $0x1d8] sm:$0xff]
  %v74 = vld [vmem:[%s0 + $0x1e0] sm:$0xff]
  %v75 = vld [vmem:[%s0 + $0x1e8] sm:$0xff]
  %v76 = vld [vmem:[%s0 + $0x1f0] sm:$0xff]
  %v77 = vld [vmem:[%s0 + $0x1f8] sm:$0xff]
  %v78 = vld [vmem:[%s1] sm:$0xff]
  %v79 = vld [vmem:[%s1 + $0x8] sm:$0xff]
  %v80 = vld [vmem:[%s1 + $0x10] sm:$0xff]
  %v81 = vld [vmem:[%s1 + $0x18] sm:$0xff]
  %v82 = vld [vmem:[%s1 + $0x20] sm:$0xff]
  %v83 = vld [vmem:[%s1 + $0x28] sm:$0xff]
  %v84 = vld [vmem:[%s1 + $0x30] sm:$0xff]
  %v85 = vld [vmem:[%s1 + $0x38] sm:$0xff]
  %v86 = vld [vmem:[%s2] sm:$0x1]
  %v88 = vlaneseq
  %v89 = vshrl.u32 %v88, 7
  %v90 = vsub.s32 0, %v89
  %v91 = vrot.slane %v86, %v90
  %vm93 = vcmask 523264
  %v95 = vsel %vm93, %v14, 0
  %v98 = vsel %vm93, %v15, 0
  %v101 = vsel %vm93, %v16, 0
  %v104 = vsel %vm93, %v17, 0
  %v107 = vsel %vm93, %v18, 0
  %v110 = vsel %vm93, %v19, 0
  %v113 = vsel %vm93, %v20, 0
  %v116 = vsel %vm93, %v21, 0
  %v119 = vsel %vm93, %v22, 0
  %v122 = vsel %vm93, %v23, 0
  %v125 = vsel %vm93, %v24, 0
  %v128 = vsel %vm93, %v25, 0
  %v131 = vsel %vm93, %v26, 0
  %v134 = vsel %vm93, %v27, 0
  %v137 = vsel %vm93, %v28, 0
  %v140 = vsel %vm93, %v29, 0
  %v143 = vsel %vm93, %v30, 0
  %v146 = vsel %vm93, %v31, 0
  %v149 = vsel %vm93, %v32, 0
  %v152 = vsel %vm93, %v33, 0
  %v155 = vsel %vm93, %v34, 0
  %v158 = vsel %vm93, %v35, 0
  %v161 = vsel %vm93, %v36, 0
  %v164 = vsel %vm93, %v37, 0
  %v167 = vsel %vm93, %v38, 0
  %v170 = vsel %vm93, %v39, 0
  %v173 = vsel %vm93, %v40, 0
  %v176 = vsel %vm93, %v41, 0
  %v179 = vsel %vm93, %v42, 0
  %v182 = vsel %vm93, %v43, 0
  %v185 = vsel %vm93, %v44, 0
  %v188 = vsel %vm93, %v45, 0
  %v191 = vsel %vm93, %v46, 0
  %v194 = vsel %vm93, %v47, 0
  %v197 = vsel %vm93, %v48, 0
  %v200 = vsel %vm93, %v49, 0
  %v203 = vsel %vm93, %v50, 0
  %v206 = vsel %vm93, %v51, 0
  %v209 = vsel %vm93, %v52, 0
  %v212 = vsel %vm93, %v53, 0
  %v215 = vsel %vm93, %v54, 0
  %v218 = vsel %vm93, %v55, 0
  %v221 = vsel %vm93, %v56, 0
  %v224 = vsel %vm93, %v57, 0
  %v227 = vsel %vm93, %v58, 0
  %v230 = vsel %vm93, %v59, 0
  %v233 = vsel %vm93, %v60, 0
  %v236 = vsel %vm93, %v61, 0
  %v239 = vsel %vm93, %v62, 0
  %v242 = vsel %vm93, %v63, 0
  %v245 = vsel %vm93, %v64, 0
  %v248 = vsel %vm93, %v65, 0
  %v251 = vsel %vm93, %v66, 0
  %v254 = vsel %vm93, %v67, 0
  %v257 = vsel %vm93, %v68, 0
  %v260 = vsel %vm93, %v69, 0
  %v263 = vsel %vm93, %v70, 0
  %v266 = vsel %vm93, %v71, 0
  %v269 = vsel %vm93, %v72, 0
  %v272 = vsel %vm93, %v73, 0
  %v275 = vsel %vm93, %v74, 0
  %v278 = vsel %vm93, %v75, 0
  %v281 = vsel %vm93, %v76, 0
  %v284 = vsel %vm93, %v77, 0
  %286 = vmatprep.subr.mxu0 0.0
  %287 = vmatpush1.msra.mxu0 %v78
  %288 = vmatprep.subr.mxu0 0.0
  %289 = vmatpush1.msra.mxu0 %v79
  %290 = vmatprep.subr.mxu0 0.0
  %291 = vmatpush1.msra.mxu0 %v80
  %292 = vmatprep.subr.mxu0 0.0
  %293 = vmatpush1.msra.mxu0 %v81
  %294 = vmatprep.subr.mxu0 0.0
  %295 = vmatpush1.msra.mxu0 %v82
  %296 = vmatprep.subr.mxu0 0.0
  %297 = vmatpush1.msra.mxu0 %v83
  %298 = vmatprep.subr.mxu0 0.0
  %299 = vmatpush1.msra.mxu0 %v84
  %300 = vmatprep.subr.mxu0 0.0
  %301 = vmatpush1.msra.mxu0 %v85
  %302 = vmatprep.subr.mxu0 0.0
  %303 = vmatpush1.msra.mxu0 0.0
  %304 = vmatprep.subr.mxu0 0.0
  %305 = vmatpush1.msra.mxu0 0.0
  %306 = vmatprep.subr.mxu0 0.0
  %307 = vmatpush1.msra.mxu0 0.0
  %308 = vmatprep.subr.mxu0 0.0
  %309 = vmatpush1.msra.mxu0 0.0
  %310 = vmatprep.subr.mxu0 0.0
  %311 = vmatpush1.msra.mxu0 0.0
  %312 = vmatprep.subr.mxu0 0.0
  %313 = vmatpush1.msra.mxu0 0.0
  %314 = vmatprep.subr.mxu0 0.0
  %315 = vmatpush1.msra.mxu0 0.0
  %316 = vmatprep.subr.mxu0 0.0
  %317 = vmatpush1.msra.mxu0 0.0
  %318 = vmatprep.subr.mxu0 0.0
  %319 = vmatpush1.msra.mxu0 0.0
  %320 = vmatprep.subr.mxu0 0.0
  %321 = vmatpush1.msra.mxu0 0.0
  %322 = vmatprep.subr.mxu0 0.0
  %323 = vmatpush1.msra.mxu0 0.0
  %324 = vmatprep.subr.mxu0 0.0
  %325 = vmatpush1.msra.mxu0 0.0
  %326 = vmatprep.subr.mxu0 0.0
  %327 = vmatpush1.msra.mxu0 0.0
  %328 = vmatprep.subr.mxu0 0.0
  %329 = vmatpush1.msra.mxu0 0.0
  %330 = vmatprep.subr.mxu0 0.0
  %331 = vmatpush1.msra.mxu0 0.0
  %332 = vmatprep.subr.mxu0 0.0
  %333 = vmatpush1.msra.mxu0 0.0
  %334 = vmatprep.subr.mxu0 0.0
  %335 = vmatpush1.msra.mxu0 0.0
  %336 = vmatprep.subr.mxu0 0.0
  %337 = vmatpush1.msra.mxu0 0.0
  %338 = vmatprep.subr.mxu0 0.0
  %339 = vmatpush1.msra.mxu0 0.0
  %340 = vmatprep.subr.mxu0 0.0
  %341 = vmatpush1.msra.mxu0 0.0
  %342 = vmatprep.subr.mxu0 0.0
  %343 = vmatpush1.msra.mxu0 0.0
  %344 = vmatprep.subr.mxu0 0.0
  %345 = vmatpush1.msra.mxu0 0.0
  %346 = vmatprep.subr.mxu0 0.0
  %347 = vmatpush1.msra.mxu0 0.0
  %348 = vmatprep.subr.mxu0 0.0
  %349 = vmatpush1.msra.mxu0 0.0
  %350 = vmatprep.mubr.f32.mxu0 0.0
  %351 = vmatmul.mubr.f32.gmra.mrb[0].mxu0 %v95
  %v352 = vpop.f32.mrb[0].mxu0
  %v353 = vadd.f32 %v91, %v352
  %v354 = vpop.f32.mrb[0].mxu0
  %355 = vmatprep.mubr.f32.mxu0 0.0
  %356 = vmatmul.mubr.f32.gmra.mrb[0].mxu0 %v98
  %v357 = vpop.f32.mrb[0].mxu0
  %v358 = vadd.f32 %v91, %v357
  %v359 = vpop.f32.mrb[0].mxu0
  %360 = vmatprep.mubr.f32.mxu0 0.0
  %361 = vmatmul.mubr.f32.gmra.mrb[0].mxu0 %v101
  %v362 = vpop.f32.mrb[0].mxu0
  %v363 = vadd.f32 %v91, %v362
  %v364 = vpop.f32.mrb[0].mxu0
  %365 = vmatprep.mubr.f32.mxu0 0.0
  %366 = vmatmul.mubr.f32.gmra.mrb[0].mxu0 %v104
  %v367 = vpop.f32.mrb[0].mxu0
  %v368 = vadd.f32 %v91, %v367
  %v369 = vpop.f32.mrb[0].mxu0
  %370 = vmatprep.mubr.f32.mxu0 0.0
  %371 = vmatmul.mubr.f32.gmra.mrb[0].mxu0 %v107
  %v372 = vpop.f32.mrb[0].mxu0
  %v373 = vadd.f32 %v91, %v372
  %v374 = vpop.f32.mrb[0].mxu0
  %375 = vmatprep.mubr.f32.mxu0 0.0
  %376 = vmatmul.mubr.f32.gmra.mrb[0].mxu0 %v110
  %v377 = vpop.f32.mrb[0].mxu0
  %v378 = vadd.f32 %v91, %v377
  %v379 = vpop.f32.mrb[0].mxu0
  %380 = vmatprep.mubr.f32.mxu0 0.0
  %381 = vmatmul.mubr.f32.gmra.mrb[0].mxu0 %v113
  %v382 = vpop.f32.mrb[0].mxu0
  %v383 = vadd.f32 %v91, %v382
  %v384 = vpop.f32.mrb[0].mxu0
  %385 = vmatprep.mubr.f32.mxu0 0.0
  %386 = vmatmul.mubr.f32.gmra.mrb[0].mxu0 %v116
  %v387 = vpop.f32.mrb[0].mxu0
  %v388 = vadd.f32 %v91, %v387
  %v389 = vpop.f32.mrb[0].mxu0
  %390 = vmatprep.mubr.f32.mxu0 0.0
  %391 = vmatmul.mubr.f32.gmra.mrb[0].mxu0 %v119
  %v392 = vpop.f32.mrb[0].mxu0
  %v393 = vadd.f32 %v91, %v392
  %v394 = vpop.f32.mrb[0].mxu0
  %395 = vmatprep.mubr.f32.mxu0 0.0
  %396 = vmatmul.mubr.f32.gmra.mrb[0].mxu0 %v122
  %v397 = vpop.f32.mrb[0].mxu0
  %v398 = vadd.f32 %v91, %v397
  %v399 = vpop.f32.mrb[0].mxu0
  %400 = vmatprep.mubr.f32.mxu0 0.0
  %401 = vmatmul.mubr.f32.gmra.mrb[0].mxu0 %v125
  %v402 = vpop.f32.mrb[0].mxu0
  %v403 = vadd.f32 %v91, %v402
  %v404 = vpop.f32.mrb[0].mxu0
  %405 = vmatprep.mubr.f32.mxu0 0.0
  %406 = vmatmul.mubr.f32.gmra.mrb[0].mxu0 %v128
  %v407 = vpop.f32.mrb[0].mxu0
  %v408 = vadd.f32 %v91, %v407
  %v409 = vpop.f32.mrb[0].mxu0
  %410 = vmatprep.mubr.f32.mxu0 0.0
  %411 = vmatmul.mubr.f32.gmra.mrb[0].mxu0 %v131
  %v412 = vpop.f32.mrb[0].mxu0
  %v413 = vadd.f32 %v91, %v412
  %v414 = vpop.f32.mrb[0].mxu0
  %415 = vmatprep.mubr.f32.mxu0 0.0
  %416 = vmatmul.mubr.f32.gmra.mrb[0].mxu0 %v134
  %v417 = vpop.f32.mrb[0].mxu0
  %v418 = vadd.f32 %v91, %v417
  %v419 = vpop.f32.mrb[0].mxu0
  %420 = vmatprep.mubr.f32.mxu0 0.0
  %421 = vmatmul.mubr.f32.gmra.mrb[0].mxu0 %v137
  %v422 = vpop.f32.mrb[0].mxu0
  %v423 = vadd.f32 %v91, %v422
  %v424 = vpop.f32.mrb[0].mxu0
  %425 = vmatprep.mubr.f32.mxu0 0.0
  %426 = vmatmul.mubr.f32.gmra.mrb[0].mxu0 %v140
  %v427 = vpop.f32.mrb[0].mxu0
  %v428 = vadd.f32 %v91, %v427
  %v429 = vpop.f32.mrb[0].mxu0
  %430 = vmatprep.mubr.f32.mxu0 0.0
  %431 = vmatmul.mubr.f32.gmra.mrb[0].mxu0 %v143
  %v432 = vpop.f32.mrb[0].mxu0
  %v433 = vadd.f32 %v91, %v432
  %v434 = vpop.f32.mrb[0].mxu0
  %435 = vmatprep.mubr.f32.mxu0 0.0
  %436 = vmatmul.mubr.f32.gmra.mrb[0].mxu0 %v146
  %v437 = vpop.f32.mrb[0].mxu0
  %v438 = vadd.f32 %v91, %v437
  %v439 = vpop.f32.mrb[0].mxu0
  %440 = vmatprep.mubr.f32.mxu0 0.0
  %441 = vmatmul.mubr.f32.gmra.mrb[0].mxu0 %v149
  %v442 = vpop.f32.mrb[0].mxu0
  %v443 = vadd.f32 %v91, %v442
  %v444 = vpop.f32.mrb[0].mxu0
  %445 = vmatprep.mubr.f32.mxu0 0.0
  %446 = vmatmul.mubr.f32.gmra.mrb[0].mxu0 %v152
  %v447 = vpop.f32.mrb[0].mxu0
  %v448 = vadd.f32 %v91, %v447
  %v449 = vpop.f32.mrb[0].mxu0
  %450 = vmatprep.mubr.f32.mxu0 0.0
  %451 = vmatmul.mubr.f32.gmra.mrb[0].mxu0 %v155
  %v452 = vpop.f32.mrb[0].mxu0
  %v453 = vadd.f32 %v91, %v452
  %v454 = vpop.f32.mrb[0].mxu0
  %455 = vmatprep.mubr.f32.mxu0 0.0
  %456 = vmatmul.mubr.f32.gmra.mrb[0].mxu0 %v158
  %v457 = vpop.f32.mrb[0].mxu0
  %v458 = vadd.f32 %v91, %v457
  %v459 = vpop.f32.mrb[0].mxu0
  %460 = vmatprep.mubr.f32.mxu0 0.0
  %461 = vmatmul.mubr.f32.gmra.mrb[0].mxu0 %v161
  %v462 = vpop.f32.mrb[0].mxu0
  %v463 = vadd.f32 %v91, %v462
  %v464 = vpop.f32.mrb[0].mxu0
  %465 = vmatprep.mubr.f32.mxu0 0.0
  %466 = vmatmul.mubr.f32.gmra.mrb[0].mxu0 %v164
  %v467 = vpop.f32.mrb[0].mxu0
  %v468 = vadd.f32 %v91, %v467
  %v469 = vpop.f32.mrb[0].mxu0
  %470 = vmatprep.mubr.f32.mxu0 0.0
  %471 = vmatmul.mubr.f32.gmra.mrb[0].mxu0 %v167
  %v472 = vpop.f32.mrb[0].mxu0
  %v473 = vadd.f32 %v91, %v472
  %v474 = vpop.f32.mrb[0].mxu0
  %475 = vmatprep.mubr.f32.mxu0 0.0
  %476 = vmatmul.mubr.f32.gmra.mrb[0].mxu0 %v170
  %v477 = vpop.f32.mrb[0].mxu0
  %v478 = vadd.f32 %v91, %v477
  %v479 = vpop.f32.mrb[0].mxu0
  %480 = vmatprep.mubr.f32.mxu0 0.0
  %481 = vmatmul.mubr.f32.gmra.mrb[0].mxu0 %v173
  %v482 = vpop.f32.mrb[0].mxu0
  %v483 = vadd.f32 %v91, %v482
  %v484 = vpop.f32.mrb[0].mxu0
  %485 = vmatprep.mubr.f32.mxu0 0.0
  %486 = vmatmul.mubr.f32.gmra.mrb[0].mxu0 %v176
  %v487 = vpop.f32.mrb[0].mxu0
  %v488 = vadd.f32 %v91, %v487
  %v489 = vpop.f32.mrb[0].mxu0
  %490 = vmatprep.mubr.f32.mxu0 0.0
  %491 = vmatmul.mubr.f32.gmra.mrb[0].mxu0 %v179
  %v492 = vpop.f32.mrb[0].mxu0
  %v493 = vadd.f32 %v91, %v492
  %v494 = vpop.f32.mrb[0].mxu0
  %495 = vmatprep.mubr.f32.mxu0 0.0
  %496 = vmatmul.mubr.f32.gmra.mrb[0].mxu0 %v182
  %v497 = vpop.f32.mrb[0].mxu0
  %v498 = vadd.f32 %v91, %v497
  %v499 = vpop.f32.mrb[0].mxu0
  %500 = vmatprep.mubr.f32.mxu0 0.0
  %501 = vmatmul.mubr.f32.gmra.mrb[0].mxu0 %v185
  %v502 = vpop.f32.mrb[0].mxu0
  %v503 = vadd.f32 %v91, %v502
  %v504 = vpop.f32.mrb[0].mxu0
  %505 = vmatprep.mubr.f32.mxu0 0.0
  %506 = vmatmul.mubr.f32.gmra.mrb[0].mxu0 %v188
  %v507 = vpop.f32.mrb[0].mxu0
  %v508 = vadd.f32 %v91, %v507
  %v509 = vpop.f32.mrb[0].mxu0
  %510 = vmatprep.mubr.f32.mxu0 0.0
  %511 = vmatmul.mubr.f32.gmra.mrb[0].mxu0 %v191
  %v512 = vpop.f32.mrb[0].mxu0
  %v513 = vadd.f32 %v91, %v512
  %v514 = vpop.f32.mrb[0].mxu0
  %515 = vmatprep.mubr.f32.mxu0 0.0
  %516 = vmatmul.mubr.f32.gmra.mrb[0].mxu0 %v194
  %v517 = vpop.f32.mrb[0].mxu0
  %v518 = vadd.f32 %v91, %v517
  %v519 = vpop.f32.mrb[0].mxu0
  %520 = vmatprep.mubr.f32.mxu0 0.0
  %521 = vmatmul.mubr.f32.gmra.mrb[0].mxu0 %v197
  %v522 = vpop.f32.mrb[0].mxu0
  %v523 = vadd.f32 %v91, %v522
  %v524 = vpop.f32.mrb[0].mxu0
  %525 = vmatprep.mubr.f32.mxu0 0.0
  %526 = vmatmul.mubr.f32.gmra.mrb[0].mxu0 %v200
  %v527 = vpop.f32.mrb[0].mxu0
  %v528 = vadd.f32 %v91, %v527
  %v529 = vpop.f32.mrb[0].mxu0
  %530 = vmatprep.mubr.f32.mxu0 0.0
  %531 = vmatmul.mubr.f32.gmra.mrb[0].mxu0 %v203
  %v532 = vpop.f32.mrb[0].mxu0
  %v533 = vadd.f32 %v91, %v532
  %v534 = vpop.f32.mrb[0].mxu0
  %535 = vmatprep.mubr.f32.mxu0 0.0
  %536 = vmatmul.mubr.f32.gmra.mrb[0].mxu0 %v206
  %v537 = vpop.f32.mrb[0].mxu0
  %v538 = vadd.f32 %v91, %v537
  %v539 = vpop.f32.mrb[0].mxu0
  %540 = vmatprep.mubr.f32.mxu0 0.0
  %541 = vmatmul.mubr.f32.gmra.mrb[0].mxu0 %v209
  %v542 = vpop.f32.mrb[0].mxu0
  %v543 = vadd.f32 %v91, %v542
  %v544 = vpop.f32.mrb[0].mxu0
  %545 = vmatprep.mubr.f32.mxu0 0.0
  %546 = vmatmul.mubr.f32.gmra.mrb[0].mxu0 %v212
  %v547 = vpop.f32.mrb[0].mxu0
  %v548 = vadd.f32 %v91, %v547
  %v549 = vpop.f32.mrb[0].mxu0
  %550 = vmatprep.mubr.f32.mxu0 0.0
  %551 = vmatmul.mubr.f32.gmra.mrb[0].mxu0 %v215
  %v552 = vpop.f32.mrb[0].mxu0
  %v553 = vadd.f32 %v91, %v552
  %v554 = vpop.f32.mrb[0].mxu0
  %555 = vmatprep.mubr.f32.mxu0 0.0
  %556 = vmatmul.mubr.f32.gmra.mrb[0].mxu0 %v218
  %v557 = vpop.f32.mrb[0].mxu0
  %v558 = vadd.f32 %v91, %v557
  %v559 = vpop.f32.mrb[0].mxu0
  %560 = vmatprep.mubr.f32.mxu0 0.0
  %561 = vmatmul.mubr.f32.gmra.mrb[0].mxu0 %v221
  %v562 = vpop.f32.mrb[0].mxu0
  %v563 = vadd.f32 %v91, %v562
  %v564 = vpop.f32.mrb[0].mxu0
  %565 = vmatprep.mubr.f32.mxu0 0.0
  %566 = vmatmul.mubr.f32.gmra.mrb[0].mxu0 %v224
  %v567 = vpop.f32.mrb[0].mxu0
  %v568 = vadd.f32 %v91, %v567
  %v569 = vpop.f32.mrb[0].mxu0
  %570 = vmatprep.mubr.f32.mxu0 0.0
  %571 = vmatmul.mubr.f32.gmra.mrb[0].mxu0 %v227
  %v572 = vpop.f32.mrb[0].mxu0
  %v573 = vadd.f32 %v91, %v572
  %v574 = vpop.f32.mrb[0].mxu0
  %575 = vmatprep.mubr.f32.mxu0 0.0
  %576 = vmatmul.mubr.f32.gmra.mrb[0].mxu0 %v230
  %v577 = vpop.f32.mrb[0].mxu0
  %v578 = vadd.f32 %v91, %v577
  %v579 = vpop.f32.mrb[0].mxu0
  %580 = vmatprep.mubr.f32.mxu0 0.0
  %581 = vmatmul.mubr.f32.gmra.mrb[0].mxu0 %v233
  %v582 = vpop.f32.mrb[0].mxu0
  %v583 = vadd.f32 %v91, %v582
  %v584 = vpop.f32.mrb[0].mxu0
  %585 = vmatprep.mubr.f32.mxu0 0.0
  %586 = vmatmul.mubr.f32.gmra.mrb[0].mxu0 %v236
  %v587 = vpop.f32.mrb[0].mxu0
  %v588 = vadd.f32 %v91, %v587
  %v589 = vpop.f32.mrb[0].mxu0
  %590 = vmatprep.mubr.f32.mxu0 0.0
  %591 = vmatmul.mubr.f32.gmra.mrb[0].mxu0 %v239
  %v592 = vpop.f32.mrb[0].mxu0
  %v593 = vadd.f32 %v91, %v592
  %v594 = vpop.f32.mrb[0].mxu0
  %595 = vmatprep.mubr.f32.mxu0 0.0
  %596 = vmatmul.mubr.f32.gmra.mrb[0].mxu0 %v242
  %v597 = vpop.f32.mrb[0].mxu0
  %v598 = vadd.f32 %v91, %v597
  %v599 = vpop.f32.mrb[0].mxu0
  %600 = vmatprep.mubr.f32.mxu0 0.0
  %601 = vmatmul.mubr.f32.gmra.mrb[0].mxu0 %v245
  %v602 = vpop.f32.mrb[0].mxu0
  %v603 = vadd.f32 %v91, %v602
  %v604 = vpop.f32.mrb[0].mxu0
  %605 = vmatprep.mubr.f32.mxu0 0.0
  %606 = vmatmul.mubr.f32.gmra.mrb[0].mxu0 %v248
  %v607 = vpop.f32.mrb[0].mxu0
  %v608 = vadd.f32 %v91, %v607
  %v609 = vpop.f32.mrb[0].mxu0
  %610 = vmatprep.mubr.f32.mxu0 0.0
  %611 = vmatmul.mubr.f32.gmra.mrb[0].mxu0 %v251
  %v612 = vpop.f32.mrb[0].mxu0
  %v613 = vadd.f32 %v91, %v612
  %v614 = vpop.f32.mrb[0].mxu0
  %615 = vmatprep.mubr.f32.mxu0 0.0
  %616 = vmatmul.mubr.f32.gmra.mrb[0].mxu0 %v254
  %v617 = vpop.f32.mrb[0].mxu0
  %v618 = vadd.f32 %v91, %v617
  %v619 = vpop.f32.mrb[0].mxu0
  %620 = vmatprep.mubr.f32.mxu0 0.0
  %621 = vmatmul.mubr.f32.gmra.mrb[0].mxu0 %v257
  %v622 = vpop.f32.mrb[0].mxu0
  %v623 = vadd.f32 %v91, %v622
  %v624 = vpop.f32.mrb[0].mxu0
  %625 = vmatprep.mubr.f32.mxu0 0.0
  %626 = vmatmul.mubr.f32.gmra.mrb[0].mxu0 %v260
  %v627 = vpop.f32.mrb[0].mxu0
  %v628 = vadd.f32 %v91, %v627
  %v629 = vpop.f32.mrb[0].mxu0
  %630 = vmatprep.mubr.f32.mxu0 0.0
  %631 = vmatmul.mubr.f32.gmra.mrb[0].mxu0 %v263
  %v632 = vpop.f32.mrb[0].mxu0
  %v633 = vadd.f32 %v91, %v632
  %v634 = vpop.f32.mrb[0].mxu0
  %635 = vmatprep.mubr.f32.mxu0 0.0
  %636 = vmatmul.mubr.f32.gmra.mrb[0].mxu0 %v266
  %v637 = vpop.f32.mrb[0].mxu0
  %v638 = vadd.f32 %v91, %v637
  %v639 = vpop.f32.mrb[0].mxu0
  %640 = vmatprep.mubr.f32.mxu0 0.0
  %641 = vmatmul.mubr.f32.gmra.mrb[0].mxu0 %v269
  %v642 = vpop.f32.mrb[0].mxu0
  %v643 = vadd.f32 %v91, %v642
  %v644 = vpop.f32.mrb[0].mxu0
  %645 = vmatprep.mubr.f32.mxu0 0.0
  %646 = vmatmul.mubr.f32.gmra.mrb[0].mxu0 %v272
  %v647 = vpop.f32.mrb[0].mxu0
  %v648 = vadd.f32 %v91, %v647
  %v649 = vpop.f32.mrb[0].mxu0
  %650 = vmatprep.mubr.f32.mxu0 0.0
  %651 = vmatmul.mubr.f32.gmra.mrb[0].mxu0 %v275
  %v652 = vpop.f32.mrb[0].mxu0
  %v653 = vadd.f32 %v91, %v652
  %v654 = vpop.f32.mrb[0].mxu0
  %655 = vmatprep.mubr.f32.mxu0 0.0
  %656 = vmatmul.mubr.f32.gmra.mrb[0].mxu0 %v278
  %v657 = vpop.f32.mrb[0].mxu0
  %v658 = vadd.f32 %v91, %v657
  %v659 = vpop.f32.mrb[0].mxu0
  %660 = vmatprep.mubr.f32.mxu0 0.0
  %661 = vmatmul.mubr.f32.gmra.mrb[0].mxu0 %v281
  %v662 = vpop.f32.mrb[0].mxu0
  %v663 = vadd.f32 %v91, %v662
  %v664 = vpop.f32.mrb[0].mxu0
  %665 = vmatprep.mubr.f32.mxu0 0.0
  %666 = vmatmul.mubr.f32.gmra.mrb[0].mxu0 %v284
  %v667 = vpop.f32.mrb[0].mxu0
  %v668 = vadd.f32 %v91, %v667
  %v669 = vpop.f32.mrb[0].mxu0
  %670 = vdwg.mxu0
  %v671 = vand.u32 2147483647, %v353
  %v672 = vand.u32 2147483647, %v358
  %v673 = vand.u32 2147483647, %v363
  %v674 = vand.u32 2147483647, %v368
  %v675 = vand.u32 2147483647, %v373
  %v676 = vand.u32 2147483647, %v378
  %v677 = vand.u32 2147483647, %v383
  %v678 = vand.u32 2147483647, %v388
  %v679 = vand.u32 2147483647, %v393
  %v680 = vand.u32 2147483647, %v398
  %v681 = vand.u32 2147483647, %v403
  %v682 = vand.u32 2147483647, %v408
  %v683 = vand.u32 2147483647, %v413
  %v684 = vand.u32 2147483647, %v418
  %v685 = vand.u32 2147483647, %v423
  %v686 = vand.u32 2147483647, %v428
  %v687 = vand.u32 2147483647, %v433
  %v688 = vand.u32 2147483647, %v438
  %v689 = vand.u32 2147483647, %v443
  %v690 = vand.u32 2147483647, %v448
  %v691 = vand.u32 2147483647, %v453
  %v692 = vand.u32 2147483647, %v458
  %v693 = vand.u32 2147483647, %v463
  %v694 = vand.u32 2147483647, %v468
  %v695 = vand.u32 2147483647, %v473
  %v696 = vand.u32 2147483647, %v478
  %v697 = vand.u32 2147483647, %v483
  %v698 = vand.u32 2147483647, %v488
  %v699 = vand.u32 2147483647, %v493
  %v700 = vand.u32 2147483647, %v498
  %v701 = vand.u32 2147483647, %v503
  %v702 = vand.u32 2147483647, %v508
  %v703 = vand.u32 2147483647, %v513
  %v704 = vand.u32 2147483647, %v518
  %v705 = vand.u32 2147483647, %v523
  %v706 = vand.u32 2147483647, %v528
  %v707 = vand.u32 2147483647, %v533
  %v708 = vand.u32 2147483647, %v538
  %v709 = vand.u32 2147483647, %v543
  %v710 = vand.u32 2147483647, %v548
  %v711 = vand.u32 2147483647, %v553
  %v712 = vand.u32 2147483647, %v558
  %v713 = vand.u32 2147483647, %v563
  %v714 = vand.u32 2147483647, %v568
  %v715 = vand.u32 2147483647, %v573
  %v716 = vand.u32 2147483647, %v578
  %v717 = vand.u32 2147483647, %v583
  %v718 = vand.u32 2147483647, %v588
  %v719 = vand.u32 2147483647, %v593
  %v720 = vand.u32 2147483647, %v598
  %v721 = vand.u32 2147483647, %v603
  %v722 = vand.u32 2147483647, %v608
  %v723 = vand.u32 2147483647, %v613
  %v724 = vand.u32 2147483647, %v618
  %v725 = vand.u32 2147483647, %v623
  %v726 = vand.u32 2147483647, %v628
  %v727 = vand.u32 2147483647, %v633
  %v728 = vand.u32 2147483647, %v638
  %v729 = vand.u32 2147483647, %v643
  %v730 = vand.u32 2147483647, %v648
  %v731 = vand.u32 2147483647, %v653
  %v732 = vand.u32 2147483647, %v658
  %v733 = vand.u32 2147483647, %v663
  %v734 = vand.u32 2147483647, %v668
  %v735 = vsub.f32 0.0, %v671
  %v736 = vsub.f32 0.0, %v672
  %v737 = vsub.f32 0.0, %v673
  %v738 = vsub.f32 0.0, %v674
  %v739 = vsub.f32 0.0, %v675
  %v740 = vsub.f32 0.0, %v676
  %v741 = vsub.f32 0.0, %v677
  %v742 = vsub.f32 0.0, %v678
  %v743 = vsub.f32 0.0, %v679
  %v744 = vsub.f32 0.0, %v680
  %v745 = vsub.f32 0.0, %v681
  %v746 = vsub.f32 0.0, %v682
  %v747 = vsub.f32 0.0, %v683
  %v748 = vsub.f32 0.0, %v684
  %v749 = vsub.f32 0.0, %v685
  %v750 = vsub.f32 0.0, %v686
  %v751 = vsub.f32 0.0, %v687
  %v752 = vsub.f32 0.0, %v688
  %v753 = vsub.f32 0.0, %v689
  %v754 = vsub.f32 0.0, %v690
  %v755 = vsub.f32 0.0, %v691
  %v756 = vsub.f32 0.0, %v692
  %v757 = vsub.f32 0.0, %v693
  %v758 = vsub.f32 0.0, %v694
  %v759 = vsub.f32 0.0, %v695
  %v760 = vsub.f32 0.0, %v696
  %v761 = vsub.f32 0.0, %v697
  %v762 = vsub.f32 0.0, %v698
  %v763 = vsub.f32 0.0, %v699
  %v764 = vsub.f32 0.0, %v700
  %v765 = vsub.f32 0.0, %v701
  %v766 = vsub.f32 0.0, %v702
  %v767 = vsub.f32 0.0, %v703
  %v768 = vsub.f32 0.0, %v704
  %v769 = vsub.f32 0.0, %v705
  %v770 = vsub.f32 0.0, %v706
  %v771 = vsub.f32 0.0, %v707
  %v772 = vsub.f32 0.0, %v708
  %v773 = vsub.f32 0.0, %v709
  %v774 = vsub.f32 0.0, %v710
  %v775 = vsub.f32 0.0, %v711
  %v776 = vsub.f32 0.0, %v712
  %v777 = vsub.f32 0.0, %v713
  %v778 = vsub.f32 0.0, %v714
  %v779 = vsub.f32 0.0, %v715
  %v780 = vsub.f32 0.0, %v716
  %v781 = vsub.f32 0.0, %v717
  %v782 = vsub.f32 0.0, %v718
  %v783 = vsub.f32 0.0, %v719
  %v784 = vsub.f32 0.0, %v720
  %v785 = vsub.f32 0.0, %v721
  %v786 = vsub.f32 0.0, %v722
  %v787 = vsub.f32 0.0, %v723
  %v788 = vsub.f32 0.0, %v724
  %v789 = vsub.f32 0.0, %v725
  %v790 = vsub.f32 0.0, %v726
  %v791 = vsub.f32 0.0, %v727
  %v792 = vsub.f32 0.0, %v728
  %v793 = vsub.f32 0.0, %v729
  %v794 = vsub.f32 0.0, %v730
  %v795 = vsub.f32 0.0, %v731
  %v796 = vsub.f32 0.0, %v732
  %v797 = vsub.f32 0.0, %v733
  %v798 = vsub.f32 0.0, %v734
  %v799 = vmul.f32 %v735, 1.442695
  %v800 = vpow.pop %v799
  %v801 = vmul.f32 %v736, 1.442695
  %v802 = vpow.pop %v801
  %v803 = vmul.f32 %v737, 1.442695
  %v804 = vpow.pop %v803
  %v805 = vmul.f32 %v738, 1.442695
  %v806 = vpow.pop %v805
  %v807 = vmul.f32 %v739, 1.442695
  %v808 = vpow.pop %v807
  %v809 = vmul.f32 %v740, 1.442695
  %v810 = vpow.pop %v809
  %v811 = vmul.f32 %v741, 1.442695
  %v812 = vpow.pop %v811
  %v813 = vmul.f32 %v742, 1.442695
  %v814 = vpow.pop %v813
  %v815 = vmul.f32 %v743, 1.442695
  %v816 = vpow.pop %v815
  %v817 = vmul.f32 %v744, 1.442695
  %v818 = vpow.pop %v817
  %v819 = vmul.f32 %v745, 1.442695
  %v820 = vpow.pop %v819
  %v821 = vmul.f32 %v746, 1.442695
  %v822 = vpow.pop %v821
  %v823 = vmul.f32 %v747, 1.442695
  %v824 = vpow.pop %v823
  %v825 = vmul.f32 %v748, 1.442695
  %v826 = vpow.pop %v825
  %v827 = vmul.f32 %v749, 1.442695
  %v828 = vpow.pop %v827
  %v829 = vmul.f32 %v750, 1.442695
  %v830 = vpow.pop %v829
  %v831 = vmul.f32 %v751, 1.442695
  %v832 = vpow.pop %v831
  %v833 = vmul.f32 %v752, 1.442695
  %v834 = vpow.pop %v833
  %v835 = vmul.f32 %v753, 1.442695
  %v836 = vpow.pop %v835
  %v837 = vmul.f32 %v754, 1.442695
  %v838 = vpow.pop %v837
  %v839 = vmul.f32 %v755, 1.442695
  %v840 = vpow.pop %v839
  %v841 = vmul.f32 %v756, 1.442695
  %v842 = vpow.pop %v841
  %v843 = vmul.f32 %v757, 1.442695
  %v844 = vpow.pop %v843
  %v845 = vmul.f32 %v758, 1.442695
  %v846 = vpow.pop %v845
  %v847 = vmul.f32 %v759, 1.442695
  %v848 = vpow.pop %v847
  %v849 = vmul.f32 %v760, 1.442695
  %v850 = vpow.pop %v849
  %v851 = vmul.f32 %v761, 1.442695
  %v852 = vpow.pop %v851
  %v853 = vmul.f32 %v762, 1.442695
  %v854 = vpow.pop %v853
  %v855 = vmul.f32 %v763, 1.442695
  %v856 = vpow.pop %v855
  %v857 = vmul.f32 %v764, 1.442695
  %v858 = vpow.pop %v857
  %v859 = vmul.f32 %v765, 1.442695
  %v860 = vpow.pop %v859
  %v861 = vmul.f32 %v766, 1.442695
  %v862 = vpow.pop %v861
  %v863 = vmul.f32 %v767, 1.442695
  %v864 = vpow.pop %v863
  %v865 = vmul.f32 %v768, 1.442695
  %v866 = vpow.pop %v865
  %v867 = vmul.f32 %v769, 1.442695
  %v868 = vpow.pop %v867
  %v869 = vmul.f32 %v770, 1.442695
  %v870 = vpow.pop %v869
  %v871 = vmul.f32 %v771, 1.442695
  %v872 = vpow.pop %v871
  %v873 = vmul.f32 %v772, 1.442695
  %v874 = vpow.pop %v873
  %v875 = vmul.f32 %v773, 1.442695
  %v876 = vpow.pop %v875
  %v877 = vmul.f32 %v774, 1.442695
  %v878 = vpow.pop %v877
  %v879 = vmul.f32 %v775, 1.442695
  %v880 = vpow.pop %v879
  %v881 = vmul.f32 %v776, 1.442695
  %v882 = vpow.pop %v881
  %v883 = vmul.f32 %v777, 1.442695
  %v884 = vpow.pop %v883
  %v885 = vmul.f32 %v778, 1.442695
  %v886 = vpow.pop %v885
  %v887 = vmul.f32 %v779, 1.442695
  %v888 = vpow.pop %v887
  %v889 = vmul.f32 %v780, 1.442695
  %v890 = vpow.pop %v889
  %v891 = vmul.f32 %v781, 1.442695
  %v892 = vpow.pop %v891
  %v893 = vmul.f32 %v782, 1.442695
  %v894 = vpow.pop %v893
  %v895 = vmul.f32 %v783, 1.442695
  %v896 = vpow.pop %v895
  %v897 = vmul.f32 %v784, 1.442695
  %v898 = vpow.pop %v897
  %v899 = vmul.f32 %v785, 1.442695
  %v900 = vpow.pop %v899
  %v901 = vmul.f32 %v786, 1.442695
  %v902 = vpow.pop %v901
  %v903 = vmul.f32 %v787, 1.442695
  %v904 = vpow.pop %v903
  %v905 = vmul.f32 %v788, 1.442695
  %v906 = vpow.pop %v905
  %v907 = vmul.f32 %v789, 1.442695
  %v908 = vpow.pop %v907
  %v909 = vmul.f32 %v790, 1.442695
  %v910 = vpow.pop %v909
  %v911 = vmul.f32 %v791, 1.442695
  %v912 = vpow.pop %v911
  %v913 = vmul.f32 %v792, 1.442695
  %v914 = vpow.pop %v913
  %v915 = vmul.f32 %v793, 1.442695
  %v916 = vpow.pop %v915
  %v917 = vmul.f32 %v794, 1.442695
  %v918 = vpow.pop %v917
  %v919 = vmul.f32 %v795, 1.442695
  %v920 = vpow.pop %v919
  %v921 = vmul.f32 %v796, 1.442695
  %v922 = vpow.pop %v921
  %v923 = vmul.f32 %v797, 1.442695
  %v924 = vpow.pop %v923
  %v925 = vmul.f32 %v798, 1.442695
  %v926 = vpow.pop %v925
  %vm927 = vcmp.ge.f32.partialorder %v353, 0.0
  %vm928 = vcmp.ge.f32.partialorder %v358, 0.0
  %vm929 = vcmp.ge.f32.partialorder %v363, 0.0
  %vm930 = vcmp.ge.f32.partialorder %v368, 0.0
  %vm931 = vcmp.ge.f32.partialorder %v373, 0.0
  %vm932 = vcmp.ge.f32.partialorder %v378, 0.0
  %vm933 = vcmp.ge.f32.partialorder %v383, 0.0
  %vm934 = vcmp.ge.f32.partialorder %v388, 0.0
  %vm935 = vcmp.ge.f32.partialorder %v393, 0.0
  %vm936 = vcmp.ge.f32.partialorder %v398, 0.0
  %vm937 = vcmp.ge.f32.partialorder %v403, 0.0
  %vm938 = vcmp.ge.f32.partialorder %v408, 0.0
  %vm939 = vcmp.ge.f32.partialorder %v413, 0.0
  %vm940 = vcmp.ge.f32.partialorder %v418, 0.0
  %vm941 = vcmp.ge.f32.partialorder %v423, 0.0
  %vm942 = vcmp.ge.f32.partialorder %v428, 0.0
  %vm943 = vcmp.ge.f32.partialorder %v433, 0.0
  %vm944 = vcmp.ge.f32.partialorder %v438, 0.0
  %vm945 = vcmp.ge.f32.partialorder %v443, 0.0
  %vm946 = vcmp.ge.f32.partialorder %v448, 0.0
  %vm947 = vcmp.ge.f32.partialorder %v453, 0.0
  %vm948 = vcmp.ge.f32.partialorder %v458, 0.0
  %vm949 = vcmp.ge.f32.partialorder %v463, 0.0
  %vm950 = vcmp.ge.f32.partialorder %v468, 0.0
  %vm951 = vcmp.ge.f32.partialorder %v473, 0.0
  %vm952 = vcmp.ge.f32.partialorder %v478, 0.0
  %vm953 = vcmp.ge.f32.partialorder %v483, 0.0
  %vm954 = vcmp.ge.f32.partialorder %v488, 0.0
  %vm955 = vcmp.ge.f32.partialorder %v493, 0.0
  %vm956 = vcmp.ge.f32.partialorder %v498, 0.0
  %vm957 = vcmp.ge.f32.partialorder %v503, 0.0
  %vm958 = vcmp.ge.f32.partialorder %v508, 0.0
  %vm959 = vcmp.ge.f32.partialorder %v513, 0.0
  %vm960 = vcmp.ge.f32.partialorder %v518, 0.0
  %vm961 = vcmp.ge.f32.partialorder %v523, 0.0
  %vm962 = vcmp.ge.f32.partialorder %v528, 0.0
  %vm963 = vcmp.ge.f32.partialorder %v533, 0.0
  %vm964 = vcmp.ge.f32.partialorder %v538, 0.0
  %vm965 = vcmp.ge.f32.partialorder %v543, 0.0
  %vm966 = vcmp.ge.f32.partialorder %v548, 0.0
  %vm967 = vcmp.ge.f32.partialorder %v553, 0.0
  %vm968 = vcmp.ge.f32.partialorder %v558, 0.0
  %vm969 = vcmp.ge.f32.partialorder %v563, 0.0
  %vm970 = vcmp.ge.f32.partialorder %v568, 0.0
  %vm971 = vcmp.ge.f32.partialorder %v573, 0.0
  %vm972 = vcmp.ge.f32.partialorder %v578, 0.0
  %vm973 = vcmp.ge.f32.partialorder %v583, 0.0
  %vm974 = vcmp.ge.f32.partialorder %v588, 0.0
  %vm975 = vcmp.ge.f32.partialorder %v593, 0.0
  %vm976 = vcmp.ge.f32.partialorder %v598, 0.0
  %vm977 = vcmp.ge.f32.partialorder %v603, 0.0
  %vm978 = vcmp.ge.f32.partialorder %v608, 0.0
  %vm979 = vcmp.ge.f32.partialorder %v613, 0.0
  %vm980 = vcmp.ge.f32.partialorder %v618, 0.0
  %vm981 = vcmp.ge.f32.partialorder %v623, 0.0
  %vm982 = vcmp.ge.f32.partialorder %v628, 0.0
  %vm983 = vcmp.ge.f32.partialorder %v633, 0.0
  %vm984 = vcmp.ge.f32.partialorder %v638, 0.0
  %vm985 = vcmp.ge.f32.partialorder %v643, 0.0
  %vm986 = vcmp.ge.f32.partialorder %v648, 0.0
  %vm987 = vcmp.ge.f32.partialorder %v653, 0.0
  %vm988 = vcmp.ge.f32.partialorder %v658, 0.0
  %vm989 = vcmp.ge.f32.partialorder %v663, 0.0
  %vm990 = vcmp.ge.f32.partialorder %v668, 0.0
  %v991 = vsel %vm927, 1.0, %v800
  %v992 = vsel %vm928, 1.0, %v802
  %v993 = vsel %vm929, 1.0, %v804
  %v994 = vsel %vm930, 1.0, %v806
  %v995 = vsel %vm931, 1.0, %v808
  %v996 = vsel %vm932, 1.0, %v810
  %v997 = vsel %vm933, 1.0, %v812
  %v998 = vsel %vm934, 1.0, %v814
  %v999 = vsel %vm935, 1.0, %v816
  %v1000 = vsel %vm936, 1.0, %v818
  %v1001 = vsel %vm937, 1.0, %v820
  %v1002 = vsel %vm938, 1.0, %v822
  %v1003 = vsel %vm939, 1.0, %v824
  %v1004 = vsel %vm940, 1.0, %v826
  %v1005 = vsel %vm941, 1.0, %v828
  %v1006 = vsel %vm942, 1.0, %v830
  %v1007 = vsel %vm943, 1.0, %v832
  %v1008 = vsel %vm944, 1.0, %v834
  %v1009 = vsel %vm945, 1.0, %v836
  %v1010 = vsel %vm946, 1.0, %v838
  %v1011 = vsel %vm947, 1.0, %v840
  %v1012 = vsel %vm948, 1.0, %v842
  %v1013 = vsel %vm949, 1.0, %v844
  %v1014 = vsel %vm950, 1.0, %v846
  %v1015 = vsel %vm951, 1.0, %v848
  %v1016 = vsel %vm952, 1.0, %v850
  %v1017 = vsel %vm953, 1.0, %v852
  %v1018 = vsel %vm954, 1.0, %v854
  %v1019 = vsel %vm955, 1.0, %v856
  %v1020 = vsel %vm956, 1.0, %v858
  %v1021 = vsel %vm957, 1.0, %v860
  %v1022 = vsel %vm958, 1.0, %v862
  %v1023 = vsel %vm959, 1.0, %v864
  %v1024 = vsel %vm960, 1.0, %v866
  %v1025 = vsel %vm961, 1.0, %v868
  %v1026 = vsel %vm962, 1.0, %v870
  %v1027 = vsel %vm963, 1.0, %v872
  %v1028 = vsel %vm964, 1.0, %v874
  %v1029 = vsel %vm965, 1.0, %v876
  %v1030 = vsel %vm966, 1.0, %v878
  %v1031 = vsel %vm967, 1.0, %v880
  %v1032 = vsel %vm968, 1.0, %v882
  %v1033 = vsel %vm969, 1.0, %v884
  %v1034 = vsel %vm970, 1.0, %v886
  %v1035 = vsel %vm971, 1.0, %v888
  %v1036 = vsel %vm972, 1.0, %v890
  %v1037 = vsel %vm973, 1.0, %v892
  %v1038 = vsel %vm974, 1.0, %v894
  %v1039 = vsel %vm975, 1.0, %v896
  %v1040 = vsel %vm976, 1.0, %v898
  %v1041 = vsel %vm977, 1.0, %v900
  %v1042 = vsel %vm978, 1.0, %v902
  %v1043 = vsel %vm979, 1.0, %v904
  %v1044 = vsel %vm980, 1.0, %v906
  %v1045 = vsel %vm981, 1.0, %v908
  %v1046 = vsel %vm982, 1.0, %v910
  %v1047 = vsel %vm983, 1.0, %v912
  %v1048 = vsel %vm984, 1.0, %v914
  %v1049 = vsel %vm985, 1.0, %v916
  %v1050 = vsel %vm986, 1.0, %v918
  %v1051 = vsel %vm987, 1.0, %v920
  %v1052 = vsel %vm988, 1.0, %v922
  %v1053 = vsel %vm989, 1.0, %v924
  %v1054 = vsel %vm990, 1.0, %v926
  %v1055 = vmul.f32 %v991, 2.0
  %v1056 = vmul.f32 %v992, 2.0
  %v1057 = vmul.f32 %v993, 2.0
  %v1058 = vmul.f32 %v994, 2.0
  %v1059 = vmul.f32 %v995, 2.0
  %v1060 = vmul.f32 %v996, 2.0
  %v1061 = vmul.f32 %v997, 2.0
  %v1062 = vmul.f32 %v998, 2.0
  %v1063 = vmul.f32 %v999, 2.0
  %v1064 = vmul.f32 %v1000, 2.0
  %v1065 = vmul.f32 %v1001, 2.0
  %v1066 = vmul.f32 %v1002, 2.0
  %v1067 = vmul.f32 %v1003, 2.0
  %v1068 = vmul.f32 %v1004, 2.0
  %v1069 = vmul.f32 %v1005, 2.0
  %v1070 = vmul.f32 %v1006, 2.0
  %v1071 = vmul.f32 %v1007, 2.0
  %v1072 = vmul.f32 %v1008, 2.0
  %v1073 = vmul.f32 %v1009, 2.0
  %v1074 = vmul.f32 %v1010, 2.0
  %v1075 = vmul.f32 %v1011, 2.0
  %v1076 = vmul.f32 %v1012, 2.0
  %v1077 = vmul.f32 %v1013, 2.0
  %v1078 = vmul.f32 %v1014, 2.0
  %v1079 = vmul.f32 %v1015, 2.0
  %v1080 = vmul.f32 %v1016, 2.0
  %v1081 = vmul.f32 %v1017, 2.0
  %v1082 = vmul.f32 %v1018, 2.0
  %v1083 = vmul.f32 %v1019, 2.0
  %v1084 = vmul.f32 %v1020, 2.0
  %v1085 = vmul.f32 %v1021, 2.0
  %v1086 = vmul.f32 %v1022, 2.0
  %v1087 = vmul.f32 %v1023, 2.0
  %v1088 = vmul.f32 %v1024, 2.0
  %v1089 = vmul.f32 %v1025, 2.0
  %v1090 = vmul.f32 %v1026, 2.0
  %v1091 = vmul.f32 %v1027, 2.0
  %v1092 = vmul.f32 %v1028, 2.0
  %v1093 = vmul.f32 %v1029, 2.0
  %v1094 = vmul.f32 %v1030, 2.0
  %v1095 = vmul.f32 %v1031, 2.0
  %v1096 = vmul.f32 %v1032, 2.0
  %v1097 = vmul.f32 %v1033, 2.0
  %v1098 = vmul.f32 %v1034, 2.0
  %v1099 = vmul.f32 %v1035, 2.0
  %v1100 = vmul.f32 %v1036, 2.0
  %v1101 = vmul.f32 %v1037, 2.0
  %v1102 = vmul.f32 %v1038, 2.0
  %v1103 = vmul.f32 %v1039, 2.0
  %v1104 = vmul.f32 %v1040, 2.0
  %v1105 = vmul.f32 %v1041, 2.0
  %v1106 = vmul.f32 %v1042, 2.0
  %v1107 = vmul.f32 %v1043, 2.0
  %v1108 = vmul.f32 %v1044, 2.0
  %v1109 = vmul.f32 %v1045, 2.0
  %v1110 = vmul.f32 %v1046, 2.0
  %v1111 = vmul.f32 %v1047, 2.0
  %v1112 = vmul.f32 %v1048, 2.0
  %v1113 = vmul.f32 %v1049, 2.0
  %v1114 = vmul.f32 %v1050, 2.0
  %v1115 = vmul.f32 %v1051, 2.0
  %v1116 = vmul.f32 %v1052, 2.0
  %v1117 = vmul.f32 %v1053, 2.0
  %v1118 = vmul.f32 %v1054, 2.0
  %v1119 = vadd.f32 %v800, 1.0
  %v1120 = vadd.f32 %v802, 1.0
  %v1121 = vadd.f32 %v804, 1.0
  %v1122 = vadd.f32 %v806, 1.0
  %v1123 = vadd.f32 %v808, 1.0
  %v1124 = vadd.f32 %v810, 1.0
  %v1125 = vadd.f32 %v812, 1.0
  %v1126 = vadd.f32 %v814, 1.0
  %v1127 = vadd.f32 %v816, 1.0
  %v1128 = vadd.f32 %v818, 1.0
  %v1129 = vadd.f32 %v820, 1.0
  %v1130 = vadd.f32 %v822, 1.0
  %v1131 = vadd.f32 %v824, 1.0
  %v1132 = vadd.f32 %v826, 1.0
  %v1133 = vadd.f32 %v828, 1.0
  %v1134 = vadd.f32 %v830, 1.0
  %v1135 = vadd.f32 %v832, 1.0
  %v1136 = vadd.f32 %v834, 1.0
  %v1137 = vadd.f32 %v836, 1.0
  %v1138 = vadd.f32 %v838, 1.0
  %v1139 = vadd.f32 %v840, 1.0
  %v1140 = vadd.f32 %v842, 1.0
  %v1141 = vadd.f32 %v844, 1.0
  %v1142 = vadd.f32 %v846, 1.0
  %v1143 = vadd.f32 %v848, 1.0
  %v1144 = vadd.f32 %v850, 1.0
  %v1145 = vadd.f32 %v852, 1.0
  %v1146 = vadd.f32 %v854, 1.0
  %v1147 = vadd.f32 %v856, 1.0
  %v1148 = vadd.f32 %v858, 1.0
  %v1149 = vadd.f32 %v860, 1.0
  %v1150 = vadd.f32 %v862, 1.0
  %v1151 = vadd.f32 %v864, 1.0
  %v1152 = vadd.f32 %v866, 1.0
  %v1153 = vadd.f32 %v868, 1.0
  %v1154 = vadd.f32 %v870, 1.0
  %v1155 = vadd.f32 %v872, 1.0
  %v1156 = vadd.f32 %v874, 1.0
  %v1157 = vadd.f32 %v876, 1.0
  %v1158 = vadd.f32 %v878, 1.0
  %v1159 = vadd.f32 %v880, 1.0
  %v1160 = vadd.f32 %v882, 1.0
  %v1161 = vadd.f32 %v884, 1.0
  %v1162 = vadd.f32 %v886, 1.0
  %v1163 = vadd.f32 %v888, 1.0
  %v1164 = vadd.f32 %v890, 1.0
  %v1165 = vadd.f32 %v892, 1.0
  %v1166 = vadd.f32 %v894, 1.0
  %v1167 = vadd.f32 %v896, 1.0
  %v1168 = vadd.f32 %v898, 1.0
  %v1169 = vadd.f32 %v900, 1.0
  %v1170 = vadd.f32 %v902, 1.0
  %v1171 = vadd.f32 %v904, 1.0
  %v1172 = vadd.f32 %v906, 1.0
  %v1173 = vadd.f32 %v908, 1.0
  %v1174 = vadd.f32 %v910, 1.0
  %v1175 = vadd.f32 %v912, 1.0
  %v1176 = vadd.f32 %v914, 1.0
  %v1177 = vadd.f32 %v916, 1.0
  %v1178 = vadd.f32 %v918, 1.0
  %v1179 = vadd.f32 %v920, 1.0
  %v1180 = vadd.f32 %v922, 1.0
  %v1181 = vadd.f32 %v924, 1.0
  %v1182 = vadd.f32 %v926, 1.0
  %v1183 = vrcp.pop %v1119
  %v1184 = vmul.f32 %v1055, %v1183
  %v1185 = vrcp.pop %v1120
  %v1186 = vmul.f32 %v1056, %v1185
  %v1187 = vrcp.pop %v1121
  %v1188 = vmul.f32 %v1057, %v1187
  %v1189 = vrcp.pop %v1122
  %v1190 = vmul.f32 %v1058, %v1189
  %v1191 = vrcp.pop %v1123
  %v1192 = vmul.f32 %v1059, %v1191
  %v1193 = vrcp.pop %v1124
  %v1194 = vmul.f32 %v1060, %v1193
  %v1195 = vrcp.pop %v1125
  %v1196 = vmul.f32 %v1061, %v1195
  %v1197 = vrcp.pop %v1126
  %v1198 = vmul.f32 %v1062, %v1197
  %v1199 = vrcp.pop %v1127
  %v1200 = vmul.f32 %v1063, %v1199
  %v1201 = vrcp.pop %v1128
  %v1202 = vmul.f32 %v1064, %v1201
  %v1203 = vrcp.pop %v1129
  %v1204 = vmul.f32 %v1065, %v1203
  %v1205 = vrcp.pop %v1130
  %v1206 = vmul.f32 %v1066, %v1205
  %v1207 = vrcp.pop %v1131
  %v1208 = vmul.f32 %v1067, %v1207
  %v1209 = vrcp.pop %v1132
  %v1210 = vmul.f32 %v1068, %v1209
  %v1211 = vrcp.pop %v1133
  %v1212 = vmul.f32 %v1069, %v1211
  %v1213 = vrcp.pop %v1134
  %v1214 = vmul.f32 %v1070, %v1213
  %v1215 = vrcp.pop %v1135
  %v1216 = vmul.f32 %v1071, %v1215
  %v1217 = vrcp.pop %v1136
  %v1218 = vmul.f32 %v1072, %v1217
  %v1219 = vrcp.pop %v1137
  %v1220 = vmul.f32 %v1073, %v1219
  %v1221 = vrcp.pop %v1138
  %v1222 = vmul.f32 %v1074, %v1221
  %v1223 = vrcp.pop %v1139
  %v1224 = vmul.f32 %v1075, %v1223
  %v1225 = vrcp.pop %v1140
  %v1226 = vmul.f32 %v1076, %v1225
  %v1227 = vrcp.pop %v1141
  %v1228 = vmul.f32 %v1077, %v1227
  %v1229 = vrcp.pop %v1142
  %v1230 = vmul.f32 %v1078, %v1229
  %v1231 = vrcp.pop %v1143
  %v1232 = vmul.f32 %v1079, %v1231
  %v1233 = vrcp.pop %v1144
  %v1234 = vmul.f32 %v1080, %v1233
  %v1235 = vrcp.pop %v1145
  %v1236 = vmul.f32 %v1081, %v1235
  %v1237 = vrcp.pop %v1146
  %v1238 = vmul.f32 %v1082, %v1237
  %v1239 = vrcp.pop %v1147
  %v1240 = vmul.f32 %v1083, %v1239
  %v1241 = vrcp.pop %v1148
  %v1242 = vmul.f32 %v1084, %v1241
  %v1243 = vrcp.pop %v1149
  %v1244 = vmul.f32 %v1085, %v1243
  %v1245 = vrcp.pop %v1150
  %v1246 = vmul.f32 %v1086, %v1245
  %v1247 = vrcp.pop %v1151
  %v1248 = vmul.f32 %v1087, %v1247
  %v1249 = vrcp.pop %v1152
  %v1250 = vmul.f32 %v1088, %v1249
  %v1251 = vrcp.pop %v1153
  %v1252 = vmul.f32 %v1089, %v1251
  %v1253 = vrcp.pop %v1154
  %v1254 = vmul.f32 %v1090, %v1253
  %v1255 = vrcp.pop %v1155
  %v1256 = vmul.f32 %v1091, %v1255
  %v1257 = vrcp.pop %v1156
  %v1258 = vmul.f32 %v1092, %v1257
  %v1259 = vrcp.pop %v1157
  %v1260 = vmul.f32 %v1093, %v1259
  %v1261 = vrcp.pop %v1158
  %v1262 = vmul.f32 %v1094, %v1261
  %v1263 = vrcp.pop %v1159
  %v1264 = vmul.f32 %v1095, %v1263
  %v1265 = vrcp.pop %v1160
  %v1266 = vmul.f32 %v1096, %v1265
  %v1267 = vrcp.pop %v1161
  %v1268 = vmul.f32 %v1097, %v1267
  %v1269 = vrcp.pop %v1162
  %v1270 = vmul.f32 %v1098, %v1269
  %v1271 = vrcp.pop %v1163
  %v1272 = vmul.f32 %v1099, %v1271
  %v1273 = vrcp.pop %v1164
  %v1274 = vmul.f32 %v1100, %v1273
  %v1275 = vrcp.pop %v1165
  %v1276 = vmul.f32 %v1101, %v1275
  %v1277 = vrcp.pop %v1166
  %v1278 = vmul.f32 %v1102, %v1277
  %v1279 = vrcp.pop %v1167
  %v1280 = vmul.f32 %v1103, %v1279
  %v1281 = vrcp.pop %v1168
  %v1282 = vmul.f32 %v1104, %v1281
  %v1283 = vrcp.pop %v1169
  %v1284 = vmul.f32 %v1105, %v1283
  %v1285 = vrcp.pop %v1170
  %v1286 = vmul.f32 %v1106, %v1285
  %v1287 = vrcp.pop %v1171
  %v1288 = vmul.f32 %v1107, %v1287
  %v1289 = vrcp.pop %v1172
  %v1290 = vmul.f32 %v1108, %v1289
  %v1291 = vrcp.pop %v1173
  %v1292 = vmul.f32 %v1109, %v1291
  %v1293 = vrcp.pop %v1174
  %v1294 = vmul.f32 %v1110, %v1293
  %v1295 = vrcp.pop %v1175
  %v1296 = vmul.f32 %v1111, %v1295
  %v1297 = vrcp.pop %v1176
  %v1298 = vmul.f32 %v1112, %v1297
  %v1299 = vrcp.pop %v1177
  %v1300 = vmul.f32 %v1113, %v1299
  %v1301 = vrcp.pop %v1178
  %v1302 = vmul.f32 %v1114, %v1301
  %v1303 = vrcp.pop %v1179
  %v1304 = vmul.f32 %v1115, %v1303
  %v1305 = vrcp.pop %v1180
  %v1306 = vmul.f32 %v1116, %v1305
  %v1307 = vrcp.pop %v1181
  %v1308 = vmul.f32 %v1117, %v1307
  %v1309 = vrcp.pop %v1182
  %v1310 = vmul.f32 %v1118, %v1309
  %1311 = vst [vmem:[%s3] sm:$0xff] %v1184
  %1312 = vst [vmem:[%s3 + $0x8] sm:$0xff] %v1186
  %1313 = vst [vmem:[%s3 + $0x10] sm:$0xff] %v1188
  %1314 = vst [vmem:[%s3 + $0x18] sm:$0xff] %v1190
  %1315 = vst [vmem:[%s3 + $0x20] sm:$0xff] %v1192
  %1316 = vst [vmem:[%s3 + $0x28] sm:$0xff] %v1194
  %1317 = vst [vmem:[%s3 + $0x30] sm:$0xff] %v1196
  %1318 = vst [vmem:[%s3 + $0x38] sm:$0xff] %v1198
  %1319 = vst [vmem:[%s3 + $0x40] sm:$0xff] %v1200
  %1320 = vst [vmem:[%s3 + $0x48] sm:$0xff] %v1202
  %1321 = vst [vmem:[%s3 + $0x50] sm:$0xff] %v1204
  %1322 = vst [vmem:[%s3 + $0x58] sm:$0xff] %v1206
  %1323 = vst [vmem:[%s3 + $0x60] sm:$0xff] %v1208
  %1324 = vst [vmem:[%s3 + $0x68] sm:$0xff] %v1210
  %1325 = vst [vmem:[%s3 + $0x70] sm:$0xff] %v1212
  %1326 = vst [vmem:[%s3 + $0x78] sm:$0xff] %v1214
  %1327 = vst [vmem:[%s3 + $0x80] sm:$0xff] %v1216
  %1328 = vst [vmem:[%s3 + $0x88] sm:$0xff] %v1218
  %1329 = vst [vmem:[%s3 + $0x90] sm:$0xff] %v1220
  %1330 = vst [vmem:[%s3 + $0x98] sm:$0xff] %v1222
  %1331 = vst [vmem:[%s3 + $0xa0] sm:$0xff] %v1224
  %1332 = vst [vmem:[%s3 + $0xa8] sm:$0xff] %v1226
  %1333 = vst [vmem:[%s3 + $0xb0] sm:$0xff] %v1228
  %1334 = vst [vmem:[%s3 + $0xb8] sm:$0xff] %v1230
  %1335 = vst [vmem:[%s3 + $0xc0] sm:$0xff] %v1232
  %1336 = vst [vmem:[%s3 + $0xc8] sm:$0xff] %v1234
  %1337 = vst [vmem:[%s3 + $0xd0] sm:$0xff] %v1236
  %1338 = vst [vmem:[%s3 + $0xd8] sm:$0xff] %v1238
  %1339 = vst [vmem:[%s3 + $0xe0] sm:$0xff] %v1240
  %1340 = vst [vmem:[%s3 + $0xe8] sm:$0xff] %v1242
  %1341 = vst [vmem:[%s3 + $0xf0] sm:$0xff] %v1244
  %1342 = vst [vmem:[%s3 + $0xf8] sm:$0xff] %v1246
  %1343 = vst [vmem:[%s3 + $0x100] sm:$0xff] %v1248
  %1344 = vst [vmem:[%s3 + $0x108] sm:$0xff] %v1250
  %1345 = vst [vmem:[%s3 + $0x110] sm:$0xff] %v1252
  %1346 = vst [vmem:[%s3 + $0x118] sm:$0xff] %v1254
  %1347 = vst [vmem:[%s3 + $0x120] sm:$0xff] %v1256
  %1348 = vst [vmem:[%s3 + $0x128] sm:$0xff] %v1258
  %1349 = vst [vmem:[%s3 + $0x130] sm:$0xff] %v1260
  %1350 = vst [vmem:[%s3 + $0x138] sm:$0xff] %v1262
  %1351 = vst [vmem:[%s3 + $0x140] sm:$0xff] %v1264
  %1352 = vst [vmem:[%s3 + $0x148] sm:$0xff] %v1266
  %1353 = vst [vmem:[%s3 + $0x150] sm:$0xff] %v1268
  %1354 = vst [vmem:[%s3 + $0x158] sm:$0xff] %v1270
  %1355 = vst [vmem:[%s3 + $0x160] sm:$0xff] %v1272
  %1356 = vst [vmem:[%s3 + $0x168] sm:$0xff] %v1274
  %1357 = vst [vmem:[%s3 + $0x170] sm:$0xff] %v1276
  %1358 = vst [vmem:[%s3 + $0x178] sm:$0xff] %v1278
  %1359 = vst [vmem:[%s3 + $0x180] sm:$0xff] %v1280
  %1360 = vst [vmem:[%s3 + $0x188] sm:$0xff] %v1282
  %1361 = vst [vmem:[%s3 + $0x190] sm:$0xff] %v1284
  %1362 = vst [vmem:[%s3 + $0x198] sm:$0xff] %v1286
  %1363 = vst [vmem:[%s3 + $0x1a0] sm:$0xff] %v1288
  %1364 = vst [vmem:[%s3 + $0x1a8] sm:$0xff] %v1290
  %1365 = vst [vmem:[%s3 + $0x1b0] sm:$0xff] %v1292
  %1366 = vst [vmem:[%s3 + $0x1b8] sm:$0xff] %v1294
  %1367 = vst [vmem:[%s3 + $0x1c0] sm:$0xff] %v1296
  %1368 = vst [vmem:[%s3 + $0x1c8] sm:$0xff] %v1298
  %1369 = vst [vmem:[%s3 + $0x1d0] sm:$0xff] %v1300
  %1370 = vst [vmem:[%s3 + $0x1d8] sm:$0xff] %v1302
  %1371 = vst [vmem:[%s3 + $0x1e0] sm:$0xff] %v1304
  %1372 = vst [vmem:[%s3 + $0x1e8] sm:$0xff] %v1306
  %1373 = vst [vmem:[%s3 + $0x1f0] sm:$0xff] %v1308
  %1374 = vst [vmem:[%s3 + $0x1f8] sm:$0xff] %v1310
  // Predicated region
  $region14: #{_lambda_.9} parent=0 // pred_check
    _
  $region15: #{_lambda_.9} parent=0 // pred_check_branch
    %1376 = sbr.rel (0) target = $region17
  $region16: #{_lambda_.9} parent=0 // pred_region
    _
  $region17: #{_lambda_.9} parent=0 // pred_fallthru
    _
  // Predicated region
  $region18: #{_lambda_.9} parent=0 // pred_check
    _
  $region19: #{_lambda_.9} parent=0 // pred_check_branch
    %1378 = sbr.rel (0) target = $region21
  $region20: #{_lambda_.9} parent=0 // pred_region
    _
  $region21: #{_lambda_.9} parent=0 // pred_fallthru
    _

</llo_original>
